<compile_context>
chip_gen: v7x
topology: tpu7x:2x2x1
jax: 0.10.0
libtpu: 0.0.40
codegen_flags: <defaults>
</compile_context>

<pallas_src>
import functools

import jax
import jax.numpy as jnp
from jax.experimental import pallas as pl
from jax.experimental.pallas import tpu as pltpu

# Conservative pipeline VMEM budget that fits all generations
# (v5e/v6e: 128 MiB physical, v7x: 64 MiB per TC).
_VMEM_BUDGET = 48 * 1024 * 1024


def _round_up(x, m):
    return (x + m - 1) // m * m


def _pad_to(a, axis, size):
    if a.shape[axis] == size:
        return a
    pads = [(0, 0)] * a.ndim
    pads[axis] = (0, size - a.shape[axis])
    return jnp.pad(a, pads)


# ----------------------------------------------------------------------------
# Pallas kernel: interleaved fwd+bwd LSTM recurrence over one time block.
# grid = (T_p // Tt,), sequential ("arbitrary"); h/c carried in VMEM scratch.
# ----------------------------------------------------------------------------
def _bilstm_recurrence_kernel(gxf_ref, gxb_ref, lens_ref, whh_hbm_ref,
                              of_ref, ob_ref,
                              whh_scr, hf_scr, cf_scr, hb_scr, cb_scr, dma_sem,
                              *, hidden_p, time_block):
    tb = pl.program_id(0)
    n_tb = pl.num_programs(0)
    H = hidden_p

    @pl.when(tb == 0)
    def _():
        # Stage W_hh (both directions) into VMEM once; overlap with state init.
        cp = pltpu.make_async_copy(whh_hbm_ref, whh_scr, dma_sem)
        cp.start()
        hf_scr[...] = jnp.zeros_like(hf_scr)
        cf_scr[...] = jnp.zeros_like(cf_scr)
        hb_scr[...] = jnp.zeros_like(hb_scr)
        cb_scr[...] = jnp.zeros_like(cb_scr)
        cp.wait()

    lens = lens_ref[...]                         # (B_p, 1) int32
    bp = lens.shape[0]

    # Global start time of this block: fwd walks blocks ascending, bwd walks
    # blocks descending (matches the reversed index_maps of gxb / ob).
    tf_base = tb * time_block
    tb_base = (n_tb - 1 - tb) * time_block

    # Hoisted per-block validity masks (off the per-step serial chain).
    t_idx = jax.lax.broadcasted_iota(jnp.int32, (bp, time_block), 1)
    valid_f = (tf_base + t_idx) < lens           # (B_p, time_block) bool
    valid_b = (tb_base + t_idx) < lens

    whh_f = whh_scr[0]                           # (H_p, 4H_p) compute dtype
    whh_b = whh_scr[1]
    cdt = whh_f.dtype

    h_f = hf_scr[...]; c_f = cf_scr[...]
    h_b = hb_scr[...]; c_b = cb_scr[...]

    for s in range(time_block):                  # statically unrolled
        jf = s                                   # fwd: ascending within block
        jb = time_block - 1 - s                  # bwd: descending within block

        # gates = (x @ W_ih^T + b) [precomputed, streamed] + h @ W_hh^T.
        # fwd / bwd are independent -> LLO scheduler overlaps them.
        gates_f = gxf_ref[jf].astype(jnp.float32) + jnp.dot(
            h_f.astype(cdt), whh_f, preferred_element_type=jnp.float32)
        gates_b = gxb_ref[jb].astype(jnp.float32) + jnp.dot(
            h_b.astype(cdt), whh_b, preferred_element_type=jnp.float32)

        i_f = jax.nn.sigmoid(gates_f[:, 0 * H:1 * H])
        f_f = jax.nn.sigmoid(gates_f[:, 1 * H:2 * H])
        g_f = jnp.tanh(gates_f[:, 2 * H:3 * H])
        o_f = jax.nn.sigmoid(gates_f[:, 3 * H:4 * H])
        i_b = jax.nn.sigmoid(gates_b[:, 0 * H:1 * H])
        f_b = jax.nn.sigmoid(gates_b[:, 1 * H:2 * H])
        g_b = jnp.tanh(gates_b[:, 2 * H:3 * H])
        o_b = jax.nn.sigmoid(gates_b[:, 3 * H:4 * H])

        c_nf = f_f * c_f + i_f * g_f
        h_nf = o_f * jnp.tanh(c_nf)
        c_nb = f_b * c_b + i_b * g_b
        h_nb = o_b * jnp.tanh(c_nb)

        vf = valid_f[:, jf:jf + 1]               # (B_p, 1) bool
        vb = valid_b[:, jb:jb + 1]
        h_f = jnp.where(vf, h_nf, h_f)           # hold state on padding
        c_f = jnp.where(vf, c_nf, c_f)
        h_b = jnp.where(vb, h_nb, h_b)
        c_b = jnp.where(vb, c_nb, c_b)
        of_ref[jf] = jnp.where(vf, h_f, 0.0)     # NaN-safe zero on padding
        ob_ref[jb] = jnp.where(vb, h_b, 0.0)

    hf_scr[...] = h_f; cf_scr[...] = c_f
    hb_scr[...] = h_b; cb_scr[...] = c_b


def _bilstm_layer(gates_x, whh_all, lens_p, *, hidden_p, time_block,
                  vmem_limit):
    """gates_x: (T_p, B_p, 8*H_p) [fwd gates | bwd gates] in gates dtype;
    whh_all: (2, H_p, 4H_p) compute dtype; lens_p: (B_p, 1) int32.
    Returns (out_fwd, out_bwd), each (T_p, B_p, H_p) f32, time-major."""
    T_p, B_p, G2 = gates_x.shape
    H_p = hidden_p
    G = G2 // 2                                  # 4 * H_p
    n_tb = T_p // time_block

    kernel = functools.partial(_bilstm_recurrence_kernel,
                               hidden_p=H_p, time_block=time_block)
    return pl.pallas_call(
        kernel,
        out_shape=(jax.ShapeDtypeStruct((T_p, B_p, H_p), jnp.float32),
                   jax.ShapeDtypeStruct((T_p, B_p, H_p), jnp.float32)),
        grid_spec=pltpu.PrefetchScalarGridSpec(
            num_scalar_prefetch=0,
            grid=(n_tb,),
            in_specs=[
                # fwd gates: ascending time blocks, lane-block 0
                pl.BlockSpec((time_block, B_p, G), lambda tb: (tb, 0, 0)),
                # bwd gates: descending time blocks, lane-block 1
                pl.BlockSpec((time_block, B_p, G),
                             lambda tb: (n_tb - 1 - tb, 0, 1)),
                pl.BlockSpec((B_p, 1), lambda tb: (0, 0)),      # lengths
                pl.BlockSpec(memory_space=pl.ANY),              # W_hh (HBM)
            ],
            out_specs=[
                pl.BlockSpec((time_block, B_p, H_p), lambda tb: (tb, 0, 0)),
                pl.BlockSpec((time_block, B_p, H_p),
                             lambda tb: (n_tb - 1 - tb, 0, 0)),
            ],
            scratch_shapes=[
                pltpu.VMEM(whh_all.shape, whh_all.dtype),  # W_hh (staged once)
                pltpu.VMEM((B_p, H_p), jnp.float32),       # h fwd
                pltpu.VMEM((B_p, H_p), jnp.float32),       # c fwd
                pltpu.VMEM((B_p, H_p), jnp.float32),       # h bwd
                pltpu.VMEM((B_p, H_p), jnp.float32),       # c bwd
                pltpu.SemaphoreType.DMA(()),
            ]),
        compiler_params=pltpu.CompilerParams(
            dimension_semantics=("arbitrary",),
            vmem_limit_bytes=vmem_limit),
    )(gates_x, gates_x, lens_p, whh_all)


# ----------------------------------------------------------------------------
# JAX glue: weight prep, VMEM-budgeted tiling, layer loop
# ----------------------------------------------------------------------------
def _prep_layer(layer_p, H, H_p, compute_dtype, n_parts):
    """Pad gate blocks H->H_p (zero padding is mathematically inert), fuse the
    two directions' input projections into one GEMM per input part, and
    transpose weights for in-kernel / hoisted GEMMs."""
    wih_parts = [[] for _ in range(n_parts)]
    whh_list, bias_list = [], []
    for (w_ih, w_hh, b_ih, b_hh) in layer_p:
        d_in = w_ih.shape[1]
        wih = _pad_to(w_ih.reshape(4, H, d_in), 1, H_p).reshape(4 * H_p, d_in)
        wih_t = jnp.transpose(wih)                         # (d_in, 4H_p)
        if n_parts == 1:
            wih_parts[0].append(wih_t)
        else:
            # layer > 0: input features are [fwd(0:H) | bwd(H:2H)];
            # split & pad each part to H_p so padded activations feed directly.
            for p in range(n_parts):
                part = wih_t[p * H:(p + 1) * H]            # (H, 4H_p)
                wih_parts[p].append(_pad_to(part, 0, H_p)) # (H_p, 4H_p)
        whh = _pad_to(_pad_to(w_hh.reshape(4, H, H), 1, H_p), 2, H_p)
        whh_list.append(jnp.transpose(whh.reshape(4 * H_p, H_p)))  # (H_p, 4H_p)
        bias_list.append(
            _pad_to((b_ih + b_hh).reshape(4, H), 1, H_p).reshape(4 * H_p))
    w_parts = [jnp.concatenate(ps, axis=1).astype(compute_dtype)
               for ps in wih_parts]                        # each (K, 8H_p)
    whh_all = jnp.stack(whh_list).astype(compute_dtype)    # (2, H_p, 4H_p)
    bias_fused = jnp.concatenate(bias_list).astype(jnp.float32)  # (8H_p,)
    return w_parts, whh_all, bias_fused


def _auto_time_block(T, B_p, H_p, gx_bytes, cdt_bytes, requested):
    if requested is not None:
        tb = int(requested)
    else:
        fixed = (2 * H_p * 4 * H_p * cdt_bytes       # W_hh scratch (single)
                 + 4 * B_p * H_p * 4                 # h/c scratch
                 + (1 << 20))                        # slop
        per_t = (2 * 2 * B_p * 4 * H_p * gx_bytes    # gxf+gxb, double-buffered
                 + 2 * 2 * B_p * H_p * 4)            # two outputs, dbl-buffered
        tb = max(1, (_VMEM_BUDGET - fixed) // per_t)
        tb = min(tb, max(4, 256 // B_p))             # bound unroll/vreg pressure
        tb = min(tb, 32)                             # bound unrolled code size
    return int(max(1, min(tb, T)))


def _vmem_limit_bytes(tb, B_p, H_p, gx_bytes, cdt_bytes):
    need = (2 * 2 * tb * B_p * 4 * H_p * gx_bytes
            + 2 * 2 * tb * B_p * H_p * 4
            + 2 * H_p * 4 * H_p * cdt_bytes
            + 4 * B_p * H_p * 4)
    return int(min(max(need + (8 << 20), 32 << 20), 100 << 20))


def init_lstm_params(key, word_embedding_dimension, hidden_dim,
                     num_layers=1, bidirectional=True):
    """Deterministic init mirroring nn.LSTM shapes (U(-k, k), k=1/sqrt(H))."""
    k = 1.0 / jnp.sqrt(hidden_dim)
    dirs = 2 if bidirectional else 1
    params = []
    for layer in range(num_layers):
        d_in = word_embedding_dimension if layer == 0 else hidden_dim * dirs
        layer_p = []
        for _ in range(dirs):
            key, k1, k2, k3, k4 = jax.random.split(key, 5)
            w_ih = jax.random.uniform(k1, (4 * hidden_dim, d_in), jnp.float32, -k, k)
            w_hh = jax.random.uniform(k2, (4 * hidden_dim, hidden_dim), jnp.float32, -k, k)
            b_ih = jax.random.uniform(k3, (4 * hidden_dim,), jnp.float32, -k, k)
            b_hh = jax.random.uniform(k4, (4 * hidden_dim,), jnp.float32, -k, k)
            layer_p.append((w_ih, w_hh, b_ih, b_hh))
        params.append(layer_p)
    return params


@functools.partial(jax.jit, static_argnames=("hidden_dim", "time_block",
                                              "compute_dtype", "gates_dtype"))
def lstm_forward(token_embeddings, sentence_lengths, params, hidden_dim,
                 time_block=None, compute_dtype=jnp.bfloat16,
                 gates_dtype=jnp.bfloat16):
    """Bidirectional multi-layer LSTM over padded word embeddings.

    token_embeddings: (B, T, D) float32 (batch-first, like the torch module)
    sentence_lengths: (B,) int32
    Returns (B, T, 2 * hidden_dim); positions >= length are zero.
    (pad_packed_sequence length truncation is done by the caller.)

    Note: the recurrent matmul has M = round_up(B, 8); throughput scales almost
    linearly with batch until the VPU/EUP saturates — fold independent
    sequences into B where possible.
    """
    B, T, _ = token_embeddings.shape
    H = hidden_dim
    H_p = _round_up(H, 128)               # lane-aligned hidden dim
    B_p = _round_up(B, 8)                 # sublane-aligned batch

    gx_bytes = jnp.dtype(gates_dtype).itemsize
    cdt_bytes = jnp.dtype(compute_dtype).itemsize
    tb = _auto_time_block(T, B_p, H_p, gx_bytes, cdt_bytes, time_block)
    T_p = _round_up(T, tb)
    vmem_limit = _vmem_limit_bytes(tb, B_p, H_p, gx_bytes, cdt_bytes)

    lens = jnp.maximum(sentence_lengths.astype(jnp.int32), 1)   # clamp(min=1)
    lens_p = _pad_to(lens, 0, B_p)[:, None]                     # pad rows -> 0

    # time-major, padded input: (T_p, B_p, D)
    x_tm = _pad_to(_pad_to(jnp.transpose(
        token_embeddings.astype(jnp.float32), (1, 0, 2)), 0, T_p), 1, B_p)
    acts = [x_tm]              # activation parts, time-major & padded

    for layer_p in params:
        assert len(layer_p) == 2, "Pallas path implements the bidirectional LSTM"
        w_parts, whh_all, bias_fused = _prep_layer(
            layer_p, H, H_p, compute_dtype, n_parts=len(acts))

        # Hoisted input projection for BOTH directions: fused MXU GEMM(s),
        # f32 accumulation, stored as the (bf16 by default) gates stream.
        gates = bias_fused[None, None, :]
        for a, w in zip(acts, w_parts):
            gates = gates + jnp.einsum(
                "tbk,kg->tbg", a.astype(compute_dtype), w,
                preferred_element_type=jnp.float32)
        gates_x = gates.astype(gates_dtype)         # (T_p, B_p, 8H_p)

        out_f, out_b = _bilstm_layer(gates_x, whh_all, lens_p,
                                     hidden_p=H_p, time_block=tb,
                                     vmem_limit=vmem_limit)
        acts = [out_f, out_b]    # stay time-major & padded between layers

    # single layout fix-up at the module boundary: (B, T, 2H)
    out = jnp.concatenate([a[:T, :B, :H] for a in acts], axis=-1)
    return jnp.transpose(out, (1, 0, 2))


# ----------------------------------------------------------------------------
# Pure-JAX reference (independent formulation) for verification
# ----------------------------------------------------------------------------
def _ref_cell(x_t, h, c, w_ih, w_hh, b):
    gates = x_t @ w_ih.T + h @ w_hh.T + b
    i, f, g, o = jnp.split(gates, 4, axis=-1)
    c = jax.nn.sigmoid(f) * c + jax.nn.sigmoid(i) * jnp.tanh(g)
    h = jax.nn.sigmoid(o) * jnp.tanh(c)
    return h, c


def _ref_bilstm_layer(x, lens, layer_p, H):
    B, T, _ = x.shape
    (wif, whf, bif, bhf), (wib, whb, bib, bhb) = layer_p

    def fstep(carry, t):
        h, c = carry
        hn, cn = _ref_cell(x[:, t], h, c, wif, whf, bif + bhf)
        out = jnp.where((t < lens)[:, None], hn, 0.0)
        return (hn, cn), out

    _, fwd = jax.lax.scan(fstep, (jnp.zeros((B, H)), jnp.zeros((B, H))),
                          jnp.arange(T))
    fwd = jnp.transpose(fwd, (1, 0, 2))

    def bstep(carry, t):
        h, c = carry
        hn, cn = _ref_cell(x[:, t], h, c, wib, whb, bib + bhb)
        valid = (t < lens)[:, None]
        h = jnp.where(valid, hn, h)
        c = jnp.where(valid, cn, c)
        out = jnp.where(valid, h, 0.0)
        return (h, c), out

    _, bwd = jax.lax.scan(bstep, (jnp.zeros((B, H)), jnp.zeros((B, H))),
                          jnp.arange(T)[::-1])
    bwd = jnp.transpose(bwd, (1, 0, 2))[:, ::-1]
    return jnp.concatenate([fwd, bwd], axis=-1)


def lstm_forward_ref(token_embeddings, sentence_lengths, params, hidden_dim):
    lens = jnp.maximum(sentence_lengths.astype(jnp.int32), 1)
    x = token_embeddings.astype(jnp.float32)
    for layer_p in params:
        x = _ref_bilstm_layer(x, lens, layer_p, hidden_dim)
    return x


# ----------------------------------------------------------------------------
if __name__ == "__main__":
    B, T, D, H = 2, 8, 16, 32
    num_layers = 2          # exercises the inter-layer (split-weight) path
    key = jax.random.PRNGKey(0)
    k_x, k_p = jax.random.split(key)

    token_embeddings = jax.random.normal(k_x, (B, T, D), jnp.float32)
    sentence_lengths = jnp.array([8, 5], jnp.int32)

    params = init_lstm_params(k_p, D, H, num_layers=num_layers,
                              bidirectional=True)

    # ---- f32 everywhere: tight check against the pure-JAX reference.
    # time_block=4 (< T) exercises cross-block state carry and the reversed
    # backward-direction index_map / output map.
    out = lstm_forward(token_embeddings, sentence_lengths, params, H,
                       time_block=4, compute_dtype=jnp.float32,
                       gates_dtype=jnp.float32)
    out = jax.block_until_ready(out)

    # pad_packed_sequence(batch_first=True): truncate to max(sentence_lengths)
    max_len = int(jax.device_get(jnp.max(jnp.maximum(sentence_lengths, 1))))
    out = out[:, :max_len]                                  # (B, max_len, 2H)

    ref = lstm_forward_ref(token_embeddings, sentence_lengths, params, H)
    ref = ref[:, :max_len]
    assert out.shape == (B, max_len, 2 * H), out.shape
    err = float(jnp.max(jnp.abs(out - ref)))
    assert err < 1e-4, err

    # ---- default fast path: bf16 matmul operands + bf16 gates_x stream,
    # f32 accumulation/state, auto time_block + explicit vmem_limit_bytes.
    out_fast = lstm_forward(token_embeddings, sentence_lengths, params, H)
    out_fast = jax.block_until_ready(out_fast)[:, :max_len]
    err_fast = float(jnp.max(jnp.abs(out_fast - ref)))
    assert err_fast < 1.5e-1, err_fast

    print("KERNEL_OK")
</pallas_src>

<mosaic_0001>
module attributes {stable_mosaic.version = 11 : i64} {
  func.func @_bilstm_recurrence_kernel(%arg0: i32, %arg1: memref<4x8x512xf32, #tpu.memory_space<vmem>>, %arg2: memref<4x8x512xf32, #tpu.memory_space<vmem>>, %arg3: memref<8x1xi32, #tpu.memory_space<vmem>>, %arg4: memref<2x128x512xf32, #tpu.memory_space<any>>, %arg5: memref<4x8x128xf32, #tpu.memory_space<vmem>>, %arg6: memref<4x8x128xf32, #tpu.memory_space<vmem>>, %arg7: memref<2x128x512xf32, #tpu.memory_space<vmem>>, %arg8: memref<8x128xf32, #tpu.memory_space<vmem>>, %arg9: memref<8x128xf32, #tpu.memory_space<vmem>>, %arg10: memref<8x128xf32, #tpu.memory_space<vmem>>, %arg11: memref<8x128xf32, #tpu.memory_space<vmem>>, %arg12: memref<!tpu.dma_semaphore, #tpu.memory_space<semaphore_mem>>) attributes {dimension_semantics = [#tpu.dimension_semantics<arbitrary>], iteration_bounds = array<i64: 2>, scalar_prefetch = 0 : i64, scratch_operands = 6 : i64, tpu.core_type = #tpu.core_type<tc>, window_params = [{transform_indices = @transform_0, window_bounds = array<i64: 4, 8, 512>}, {transform_indices = @transform_1, window_bounds = array<i64: 4, 8, 512>}, {pipeline_mode = #tpu.pipeline_mode<synchronous>, transform_indices = @transform_2, window_bounds = array<i64: 8, 1>}, {}, {transform_indices = @transform_4, window_bounds = array<i64: 4, 8, 128>}, {transform_indices = @transform_5, window_bounds = array<i64: 4, 8, 128>}]} {
    %c0_i32 = arith.constant 0 : i32
    %0 = arith.cmpi eq, %arg0, %c0_i32 : i32
    %1 = arith.extui %0 : i1 to i32
    %c0_i32_0 = arith.constant 0 : i32
    %2 = arith.cmpi ne, %1, %c0_i32_0 : i32
    scf.if %2 {
      tpu.enqueue_dma source(%arg4 : memref<2x128x512xf32, #tpu.memory_space<any>>) target(%arg7 : memref<2x128x512xf32, #tpu.memory_space<vmem>>) target_semaphore(%arg12 : memref<!tpu.dma_semaphore, #tpu.memory_space<semaphore_mem>>)
      %cst_109 = arith.constant 0.000000e+00 : f32
      %372 = vector.broadcast %cst_109 : f32 to vector<8x128xf32>
      %c0_110 = arith.constant 0 : index
      %c0_111 = arith.constant 0 : index
      %373 = vector.load %arg8[%c0_110, %c0_111] : memref<8x128xf32, #tpu.memory_space<vmem>>, vector<8x128xf32>
      tpu.vector_store %arg8[%c0_110, %c0_111], %372 {strides = array<i32>} : memref<8x128xf32, #tpu.memory_space<vmem>>, vector<8x128xf32>,
      %cst_112 = arith.constant 0.000000e+00 : f32
      %374 = vector.broadcast %cst_112 : f32 to vector<8x128xf32>
      %c0_113 = arith.constant 0 : index
      %c0_114 = arith.constant 0 : index
      %375 = vector.load %arg9[%c0_113, %c0_114] : memref<8x128xf32, #tpu.memory_space<vmem>>, vector<8x128xf32>
      tpu.vector_store %arg9[%c0_113, %c0_114], %374 {strides = array<i32>} : memref<8x128xf32, #tpu.memory_space<vmem>>, vector<8x128xf32>,
      %cst_115 = arith.constant 0.000000e+00 : f32
      %376 = vector.broadcast %cst_115 : f32 to vector<8x128xf32>
      %c0_116 = arith.constant 0 : index
      %c0_117 = arith.constant 0 : index
      %377 = vector.load %arg10[%c0_116, %c0_117] : memref<8x128xf32, #tpu.memory_space<vmem>>, vector<8x128xf32>
      tpu.vector_store %arg10[%c0_116, %c0_117], %376 {strides = array<i32>} : memref<8x128xf32, #tpu.memory_space<vmem>>, vector<8x128xf32>,
      %cst_118 = arith.constant 0.000000e+00 : f32
      %378 = vector.broadcast %cst_118 : f32 to vector<8x128xf32>
      %c0_119 = arith.constant 0 : index
      %c0_120 = arith.constant 0 : index
      %379 = vector.load %arg11[%c0_119, %c0_120] : memref<8x128xf32, #tpu.memory_space<vmem>>, vector<8x128xf32>
      tpu.vector_store %arg11[%c0_119, %c0_120], %378 {strides = array<i32>} : memref<8x128xf32, #tpu.memory_space<vmem>>, vector<8x128xf32>,
      tpu.wait_dma2 semaphore(%arg12 : memref<!tpu.dma_semaphore, #tpu.memory_space<semaphore_mem>>) src(%arg4 : memref<2x128x512xf32, #tpu.memory_space<any>>) dst(%arg7 : memref<2x128x512xf32, #tpu.memory_space<vmem>>)
    } else {
    }
    %c0 = arith.constant 0 : index
    %c0_1 = arith.constant 0 : index
    %3 = vector.load %arg3[%c0, %c0_1] : memref<8x1xi32, #tpu.memory_space<vmem>>, vector<8x1xi32>
    %c4_i32 = arith.constant 4 : i32
    %4 = arith.muli %arg0, %c4_i32 : i32
    %c1_i32 = arith.constant 1 : i32
    %5 = arith.subi %c1_i32, %arg0 : i32
    %c4_i32_2 = arith.constant 4 : i32
    %6 = arith.muli %5, %c4_i32_2 : i32
    %7 = tpu.iota {dimensions = array<i32: 1>} : vector<8x4xi32>
    %8 = vector.broadcast %4 : i32 to vector<8x4xi32>
    %9 = arith.addi %8, %7 : vector<8x4xi32>
    %10 = vector.broadcast %3 : vector<8x1xi32> to vector<8x4xi32>
    %11 = arith.cmpi slt, %9, %10 : vector<8x4xi32>
    %12 = vector.broadcast %6 : i32 to vector<8x4xi32>
    %13 = arith.addi %12, %7 : vector<8x4xi32>
    %14 = vector.broadcast %3 : vector<8x1xi32> to vector<8x4xi32>
    %15 = arith.cmpi slt, %13, %14 : vector<8x4xi32>
    %c0_3 = arith.constant 0 : index
    %c0_4 = arith.constant 0 : index
    %c0_5 = arith.constant 0 : index
    %16 = vector.load %arg7[%c0_3, %c0_4, %c0_5] : memref<2x128x512xf32, #tpu.memory_space<vmem>>, vector<1x128x512xf32>
    %17 = vector.shape_cast %16 : vector<1x128x512xf32> to vector<128x512xf32>
    %c1 = arith.constant 1 : index
    %c0_6 = arith.constant 0 : index
    %c0_7 = arith.constant 0 : index
    %18 = vector.load %arg7[%c1, %c0_6, %c0_7] : memref<2x128x512xf32, #tpu.memory_space<vmem>>, vector<1x128x512xf32>
    %19 = vector.shape_cast %18 : vector<1x128x512xf32> to vector<128x512xf32>
    %c0_8 = arith.constant 0 : index
    %c0_9 = arith.constant 0 : index
    %20 = vector.load %arg8[%c0_8, %c0_9] : memref<8x128xf32, #tpu.memory_space<vmem>>, vector<8x128xf32>
    %c0_10 = arith.constant 0 : index
    %c0_11 = arith.constant 0 : index
    %21 = vector.load %arg9[%c0_10, %c0_11] : memref<8x128xf32, #tpu.memory_space<vmem>>, vector<8x128xf32>
    %c0_12 = arith.constant 0 : index
    %c0_13 = arith.constant 0 : index
    %22 = vector.load %arg10[%c0_12, %c0_13] : memref<8x128xf32, #tpu.memory_space<vmem>>, vector<8x128xf32>
    %c0_14 = arith.constant 0 : index
    %c0_15 = arith.constant 0 : index
    %23 = vector.load %arg11[%c0_14, %c0_15] : memref<8x128xf32, #tpu.memory_space<vmem>>, vector<8x128xf32>
    %c0_16 = arith.constant 0 : index
    %c0_17 = arith.constant 0 : index
    %c0_18 = arith.constant 0 : index
    %24 = vector.load %arg1[%c0_16, %c0_17, %c0_18] : memref<4x8x512xf32, #tpu.memory_space<vmem>>, vector<1x8x512xf32>
    %25 = vector.shape_cast %24 : vector<1x8x512xf32> to vector<8x512xf32>
    %cst = arith.constant dense<0.000000e+00> : vector<8x512xf32>
    %26 = tpu.matmul %20, %17, %cst {dimension_numbers = #tpu.dot_dimension_numbers<[1], [0], [0], [1], [0, 0, 1, 1], [], []>} : vector<8x128xf32>, vector<128x512xf32>, vector<8x512xf32> -> vector<8x512xf32>
    %27 = arith.addf %25, %26 : vector<8x512xf32>
    %c3 = arith.constant 3 : index
    %c0_19 = arith.constant 0 : index
    %c0_20 = arith.constant 0 : index
    %28 = vector.load %arg2[%c3, %c0_19, %c0_20] : memref<4x8x512xf32, #tpu.memory_space<vmem>>, vector<1x8x512xf32>
    %29 = vector.shape_cast %28 : vector<1x8x512xf32> to vector<8x512xf32>
    %cst_21 = arith.constant dense<0.000000e+00> : vector<8x512xf32>
    %30 = tpu.matmul %22, %19, %cst_21 {dimension_numbers = #tpu.dot_dimension_numbers<[1], [0], [0], [1], [0, 0, 1, 1], [], []>} : vector<8x128xf32>, vector<128x512xf32>, vector<8x512xf32> -> vector<8x512xf32>
    %31 = arith.addf %29, %30 : vector<8x512xf32>
    %32 = vector.extract_strided_slice %27 {offsets = [0, 0], sizes = [8, 128], strides = [1, 1]} : vector<8x512xf32> to vector<8x128xf32>
    %33 = arith.negf %32 : vector<8x128xf32>
    %34 = math.exp %33 : vector<8x128xf32>
    %cst_22 = arith.constant 1.000000e+00 : f32
    %35 = vector.broadcast %cst_22 : f32 to vector<8x128xf32>
    %36 = arith.addf %35, %34 : vector<8x128xf32>
    %37 = arith.divf %35, %36 : vector<8x128xf32>
    %38 = vector.extract_strided_slice %27 {offsets = [0, 128], sizes = [8, 128], strides = [1, 1]} : vector<8x512xf32> to vector<8x128xf32>
    %39 = arith.negf %38 : vector<8x128xf32>
    %40 = math.exp %39 : vector<8x128xf32>
    %cst_23 = arith.constant 1.000000e+00 : f32
    %41 = vector.broadcast %cst_23 : f32 to vector<8x128xf32>
    %42 = arith.addf %41, %40 : vector<8x128xf32>
    %43 = arith.divf %41, %42 : vector<8x128xf32>
    %44 = vector.extract_strided_slice %27 {offsets = [0, 256], sizes = [8, 128], strides = [1, 1]} : vector<8x512xf32> to vector<8x128xf32>
    %45 = math.tanh %44 : vector<8x128xf32>
    %46 = vector.extract_strided_slice %27 {offsets = [0, 384], sizes = [8, 128], strides = [1, 1]} : vector<8x512xf32> to vector<8x128xf32>
    %47 = arith.negf %46 : vector<8x128xf32>
    %48 = math.exp %47 : vector<8x128xf32>
    %cst_24 = arith.constant 1.000000e+00 : f32
    %49 = vector.broadcast %cst_24 : f32 to vector<8x128xf32>
    %50 = arith.addf %49, %48 : vector<8x128xf32>
    %51 = arith.divf %49, %50 : vector<8x128xf32>
    %52 = vector.extract_strided_slice %31 {offsets = [0, 0], sizes = [8, 128], strides = [1, 1]} : vector<8x512xf32> to vector<8x128xf32>
    %53 = arith.negf %52 : vector<8x128xf32>
    %54 = math.exp %53 : vector<8x128xf32>
    %cst_25 = arith.constant 1.000000e+00 : f32
    %55 = vector.broadcast %cst_25 : f32 to vector<8x128xf32>
    %56 = arith.addf %55, %54 : vector<8x128xf32>
    %57 = arith.divf %55, %56 : vector<8x128xf32>
    %58 = vector.extract_strided_slice %31 {offsets = [0, 128], sizes = [8, 128], strides = [1, 1]} : vector<8x512xf32> to vector<8x128xf32>
    %59 = arith.negf %58 : vector<8x128xf32>
    %60 = math.exp %59 : vector<8x128xf32>
    %cst_26 = arith.constant 1.000000e+00 : f32
    %61 = vector.broadcast %cst_26 : f32 to vector<8x128xf32>
    %62 = arith.addf %61, %60 : vector<8x128xf32>
    %63 = arith.divf %61, %62 : vector<8x128xf32>
    %64 = vector.extract_strided_slice %31 {offsets = [0, 256], sizes = [8, 128], strides = [1, 1]} : vector<8x512xf32> to vector<8x128xf32>
    %65 = math.tanh %64 : vector<8x128xf32>
    %66 = vector.extract_strided_slice %31 {offsets = [0, 384], sizes = [8, 128], strides = [1, 1]} : vector<8x512xf32> to vector<8x128xf32>
    %67 = arith.negf %66 : vector<8x128xf32>
    %68 = math.exp %67 : vector<8x128xf32>
    %cst_27 = arith.constant 1.000000e+00 : f32
    %69 = vector.broadcast %cst_27 : f32 to vector<8x128xf32>
    %70 = arith.addf %69, %68 : vector<8x128xf32>
    %71 = arith.divf %69, %70 : vector<8x128xf32>
    %72 = arith.mulf %43, %21 : vector<8x128xf32>
    %73 = arith.mulf %37, %45 : vector<8x128xf32>
    %74 = arith.addf %72, %73 : vector<8x128xf32>
    %75 = math.tanh %74 : vector<8x128xf32>
    %76 = arith.mulf %51, %75 : vector<8x128xf32>
    %77 = arith.mulf %63, %23 : vector<8x128xf32>
    %78 = arith.mulf %57, %65 : vector<8x128xf32>
    %79 = arith.addf %77, %78 : vector<8x128xf32>
    %80 = math.tanh %79 : vector<8x128xf32>
    %81 = arith.mulf %71, %80 : vector<8x128xf32>
    %82 = vector.extract_strided_slice %11 {offsets = [0, 0], sizes = [8, 1], strides = [1, 1]} : vector<8x4xi1> to vector<8x1xi1>
    %83 = vector.extract_strided_slice %15 {offsets = [0, 3], sizes = [8, 1], strides = [1, 1]} : vector<8x4xi1> to vector<8x1xi1>
    %84 = vector.shape_cast %82 : vector<8x1xi1> to vector<8x1xi1>
    %85 = vector.broadcast %84 : vector<8x1xi1> to vector<8x128xi1>
    %86 = arith.select %85, %76, %20 : vector<8x128xi1>, vector<8x128xf32>
    %87 = vector.shape_cast %82 : vector<8x1xi1> to vector<8x1xi1>
    %88 = vector.broadcast %87 : vector<8x1xi1> to vector<8x128xi1>
    %89 = arith.select %88, %74, %21 : vector<8x128xi1>, vector<8x128xf32>
    %90 = vector.shape_cast %83 : vector<8x1xi1> to vector<8x1xi1>
    %91 = vector.broadcast %90 : vector<8x1xi1> to vector<8x128xi1>
    %92 = arith.select %91, %81, %22 : vector<8x128xi1>, vector<8x128xf32>
    %93 = vector.shape_cast %83 : vector<8x1xi1> to vector<8x1xi1>
    %94 = vector.broadcast %93 : vector<8x1xi1> to vector<8x128xi1>
    %95 = arith.select %94, %79, %23 : vector<8x128xi1>, vector<8x128xf32>
    %cst_28 = arith.constant 0.000000e+00 : f32
    %96 = vector.shape_cast %82 : vector<8x1xi1> to vector<8x1xi1>
    %97 = vector.broadcast %96 : vector<8x1xi1> to vector<8x128xi1>
    %98 = vector.broadcast %cst_28 : f32 to vector<8x128xf32>
    %99 = arith.select %97, %86, %98 : vector<8x128xi1>, vector<8x128xf32>
    %c0_29 = arith.constant 0 : index
    %c0_30 = arith.constant 0 : index
    %c0_31 = arith.constant 0 : index
    %100 = vector.load %arg5[%c0_29, %c0_30, %c0_31] : memref<4x8x128xf32, #tpu.memory_space<vmem>>, vector<1x8x128xf32>
    %101 = vector.shape_cast %100 : vector<1x8x128xf32> to vector<8x128xf32>
    %102 = vector.shape_cast %99 : vector<8x128xf32> to vector<1x8x128xf32>
    tpu.vector_store %arg5[%c0_29, %c0_30, %c0_31], %102 {strides = array<i32>} : memref<4x8x128xf32, #tpu.memory_space<vmem>>, vector<1x8x128xf32>,
    %cst_32 = arith.constant 0.000000e+00 : f32
    %103 = vector.shape_cast %83 : vector<8x1xi1> to vector<8x1xi1>
    %104 = vector.broadcast %103 : vector<8x1xi1> to vector<8x128xi1>
    %105 = vector.broadcast %cst_32 : f32 to vector<8x128xf32>
    %106 = arith.select %104, %92, %105 : vector<8x128xi1>, vector<8x128xf32>
    %c3_33 = arith.constant 3 : index
    %c0_34 = arith.constant 0 : index
    %c0_35 = arith.constant 0 : index
    %107 = vector.load %arg6[%c3_33, %c0_34, %c0_35] : memref<4x8x128xf32, #tpu.memory_space<vmem>>, vector<1x8x128xf32>
    %108 = vector.shape_cast %107 : vector<1x8x128xf32> to vector<8x128xf32>
    %109 = vector.shape_cast %106 : vector<8x128xf32> to vector<1x8x128xf32>
    tpu.vector_store %arg6[%c3_33, %c0_34, %c0_35], %109 {strides = array<i32>} : memref<4x8x128xf32, #tpu.memory_space<vmem>>, vector<1x8x128xf32>,
    %c1_36 = arith.constant 1 : index
    %c0_37 = arith.constant 0 : index
    %c0_38 = arith.constant 0 : index
    %110 = vector.load %arg1[%c1_36, %c0_37, %c0_38] : memref<4x8x512xf32, #tpu.memory_space<vmem>>, vector<1x8x512xf32>
    %111 = vector.shape_cast %110 : vector<1x8x512xf32> to vector<8x512xf32>
    %cst_39 = arith.constant dense<0.000000e+00> : vector<8x512xf32>
    %112 = tpu.matmul %86, %17, %cst_39 {dimension_numbers = #tpu.dot_dimension_numbers<[1], [0], [0], [1], [0, 0, 1, 1], [], []>} : vector<8x128xf32>, vector<128x512xf32>, vector<8x512xf32> -> vector<8x512xf32>
    %113 = arith.addf %111, %112 : vector<8x512xf32>
    %c2 = arith.constant 2 : index
    %c0_40 = arith.constant 0 : index
    %c0_41 = arith.constant 0 : index
    %114 = vector.load %arg2[%c2, %c0_40, %c0_41] : memref<4x8x512xf32, #tpu.memory_space<vmem>>, vector<1x8x512xf32>
    %115 = vector.shape_cast %114 : vector<1x8x512xf32> to vector<8x512xf32>
    %cst_42 = arith.constant dense<0.000000e+00> : vector<8x512xf32>
    %116 = tpu.matmul %92, %19, %cst_42 {dimension_numbers = #tpu.dot_dimension_numbers<[1], [0], [0], [1], [0, 0, 1, 1], [], []>} : vector<8x128xf32>, vector<128x512xf32>, vector<8x512xf32> -> vector<8x512xf32>
    %117 = arith.addf %115, %116 : vector<8x512xf32>
    %118 = vector.extract_strided_slice %113 {offsets = [0, 0], sizes = [8, 128], strides = [1, 1]} : vector<8x512xf32> to vector<8x128xf32>
    %119 = arith.negf %118 : vector<8x128xf32>
    %120 = math.exp %119 : vector<8x128xf32>
    %cst_43 = arith.constant 1.000000e+00 : f32
    %121 = vector.broadcast %cst_43 : f32 to vector<8x128xf32>
    %122 = arith.addf %121, %120 : vector<8x128xf32>
    %123 = arith.divf %121, %122 : vector<8x128xf32>
    %124 = vector.extract_strided_slice %113 {offsets = [0, 128], sizes = [8, 128], strides = [1, 1]} : vector<8x512xf32> to vector<8x128xf32>
    %125 = arith.negf %124 : vector<8x128xf32>
    %126 = math.exp %125 : vector<8x128xf32>
    %cst_44 = arith.constant 1.000000e+00 : f32
    %127 = vector.broadcast %cst_44 : f32 to vector<8x128xf32>
    %128 = arith.addf %127, %126 : vector<8x128xf32>
    %129 = arith.divf %127, %128 : vector<8x128xf32>
    %130 = vector.extract_strided_slice %113 {offsets = [0, 256], sizes = [8, 128], strides = [1, 1]} : vector<8x512xf32> to vector<8x128xf32>
    %131 = math.tanh %130 : vector<8x128xf32>
    %132 = vector.extract_strided_slice %113 {offsets = [0, 384], sizes = [8, 128], strides = [1, 1]} : vector<8x512xf32> to vector<8x128xf32>
    %133 = arith.negf %132 : vector<8x128xf32>
    %134 = math.exp %133 : vector<8x128xf32>
    %cst_45 = arith.constant 1.000000e+00 : f32
    %135 = vector.broadcast %cst_45 : f32 to vector<8x128xf32>
    %136 = arith.addf %135, %134 : vector<8x128xf32>
    %137 = arith.divf %135, %136 : vector<8x128xf32>
    %138 = vector.extract_strided_slice %117 {offsets = [0, 0], sizes = [8, 128], strides = [1, 1]} : vector<8x512xf32> to vector<8x128xf32>
    %139 = arith.negf %138 : vector<8x128xf32>
    %140 = math.exp %139 : vector<8x128xf32>
    %cst_46 = arith.constant 1.000000e+00 : f32
    %141 = vector.broadcast %cst_46 : f32 to vector<8x128xf32>
    %142 = arith.addf %141, %140 : vector<8x128xf32>
    %143 = arith.divf %141, %142 : vector<8x128xf32>
    %144 = vector.extract_strided_slice %117 {offsets = [0, 128], sizes = [8, 128], strides = [1, 1]} : vector<8x512xf32> to vector<8x128xf32>
    %145 = arith.negf %144 : vector<8x128xf32>
    %146 = math.exp %145 : vector<8x128xf32>
    %cst_47 = arith.constant 1.000000e+00 : f32
    %147 = vector.broadcast %cst_47 : f32 to vector<8x128xf32>
    %148 = arith.addf %147, %146 : vector<8x128xf32>
    %149 = arith.divf %147, %148 : vector<8x128xf32>
    %150 = vector.extract_strided_slice %117 {offsets = [0, 256], sizes = [8, 128], strides = [1, 1]} : vector<8x512xf32> to vector<8x128xf32>
    %151 = math.tanh %150 : vector<8x128xf32>
    %152 = vector.extract_strided_slice %117 {offsets = [0, 384], sizes = [8, 128], strides = [1, 1]} : vector<8x512xf32> to vector<8x128xf32>
    %153 = arith.negf %152 : vector<8x128xf32>
    %154 = math.exp %153 : vector<8x128xf32>
    %cst_48 = arith.constant 1.000000e+00 : f32
    %155 = vector.broadcast %cst_48 : f32 to vector<8x128xf32>
    %156 = arith.addf %155, %154 : vector<8x128xf32>
    %157 = arith.divf %155, %156 : vector<8x128xf32>
    %158 = arith.mulf %129, %89 : vector<8x128xf32>
    %159 = arith.mulf %123, %131 : vector<8x128xf32>
    %160 = arith.addf %158, %159 : vector<8x128xf32>
    %161 = math.tanh %160 : vector<8x128xf32>
    %162 = arith.mulf %137, %161 : vector<8x128xf32>
    %163 = arith.mulf %149, %95 : vector<8x128xf32>
    %164 = arith.mulf %143, %151 : vector<8x128xf32>
    %165 = arith.addf %163, %164 : vector<8x128xf32>
    %166 = math.tanh %165 : vector<8x128xf32>
    %167 = arith.mulf %157, %166 : vector<8x128xf32>
    %168 = vector.extract_strided_slice %11 {offsets = [0, 1], sizes = [8, 1], strides = [1, 1]} : vector<8x4xi1> to vector<8x1xi1>
    %169 = vector.extract_strided_slice %15 {offsets = [0, 2], sizes = [8, 1], strides = [1, 1]} : vector<8x4xi1> to vector<8x1xi1>
    %170 = vector.shape_cast %168 : vector<8x1xi1> to vector<8x1xi1>
    %171 = vector.broadcast %170 : vector<8x1xi1> to vector<8x128xi1>
    %172 = arith.select %171, %162, %86 : vector<8x128xi1>, vector<8x128xf32>
    %173 = vector.shape_cast %168 : vector<8x1xi1> to vector<8x1xi1>
    %174 = vector.broadcast %173 : vector<8x1xi1> to vector<8x128xi1>
    %175 = arith.select %174, %160, %89 : vector<8x128xi1>, vector<8x128xf32>
    %176 = vector.shape_cast %169 : vector<8x1xi1> to vector<8x1xi1>
    %177 = vector.broadcast %176 : vector<8x1xi1> to vector<8x128xi1>
    %178 = arith.select %177, %167, %92 : vector<8x128xi1>, vector<8x128xf32>
    %179 = vector.shape_cast %169 : vector<8x1xi1> to vector<8x1xi1>
    %180 = vector.broadcast %179 : vector<8x1xi1> to vector<8x128xi1>
    %181 = arith.select %180, %165, %95 : vector<8x128xi1>, vector<8x128xf32>
    %cst_49 = arith.constant 0.000000e+00 : f32
    %182 = vector.shape_cast %168 : vector<8x1xi1> to vector<8x1xi1>
    %183 = vector.broadcast %182 : vector<8x1xi1> to vector<8x128xi1>
    %184 = vector.broadcast %cst_49 : f32 to vector<8x128xf32>
    %185 = arith.select %183, %172, %184 : vector<8x128xi1>, vector<8x128xf32>
    %c1_50 = arith.constant 1 : index
    %c0_51 = arith.constant 0 : index
    %c0_52 = arith.constant 0 : index
    %186 = vector.load %arg5[%c1_50, %c0_51, %c0_52] : memref<4x8x128xf32, #tpu.memory_space<vmem>>, vector<1x8x128xf32>
    %187 = vector.shape_cast %186 : vector<1x8x128xf32> to vector<8x128xf32>
    %188 = vector.shape_cast %185 : vector<8x128xf32> to vector<1x8x128xf32>
    tpu.vector_store %arg5[%c1_50, %c0_51, %c0_52], %188 {strides = array<i32>} : memref<4x8x128xf32, #tpu.memory_space<vmem>>, vector<1x8x128xf32>,
    %cst_53 = arith.constant 0.000000e+00 : f32
    %189 = vector.shape_cast %169 : vector<8x1xi1> to vector<8x1xi1>
    %190 = vector.broadcast %189 : vector<8x1xi1> to vector<8x128xi1>
    %191 = vector.broadcast %cst_53 : f32 to vector<8x128xf32>
    %192 = arith.select %190, %178, %191 : vector<8x128xi1>, vector<8x128xf32>
    %c2_54 = arith.constant 2 : index
    %c0_55 = arith.constant 0 : index
    %c0_56 = arith.constant 0 : index
    %193 = vector.load %arg6[%c2_54, %c0_55, %c0_56] : memref<4x8x128xf32, #tpu.memory_space<vmem>>, vector<1x8x128xf32>
    %194 = vector.shape_cast %193 : vector<1x8x128xf32> to vector<8x128xf32>
    %195 = vector.shape_cast %192 : vector<8x128xf32> to vector<1x8x128xf32>
    tpu.vector_store %arg6[%c2_54, %c0_55, %c0_56], %195 {strides = array<i32>} : memref<4x8x128xf32, #tpu.memory_space<vmem>>, vector<1x8x128xf32>,
    %c2_57 = arith.constant 2 : index
    %c0_58 = arith.constant 0 : index
    %c0_59 = arith.constant 0 : index
    %196 = vector.load %arg1[%c2_57, %c0_58, %c0_59] : memref<4x8x512xf32, #tpu.memory_space<vmem>>, vector<1x8x512xf32>
    %197 = vector.shape_cast %196 : vector<1x8x512xf32> to vector<8x512xf32>
    %cst_60 = arith.constant dense<0.000000e+00> : vector<8x512xf32>
    %198 = tpu.matmul %172, %17, %cst_60 {dimension_numbers = #tpu.dot_dimension_numbers<[1], [0], [0], [1], [0, 0, 1, 1], [], []>} : vector<8x128xf32>, vector<128x512xf32>, vector<8x512xf32> -> vector<8x512xf32>
    %199 = arith.addf %197, %198 : vector<8x512xf32>
    %c1_61 = arith.constant 1 : index
    %c0_62 = arith.constant 0 : index
    %c0_63 = arith.constant 0 : index
    %200 = vector.load %arg2[%c1_61, %c0_62, %c0_63] : memref<4x8x512xf32, #tpu.memory_space<vmem>>, vector<1x8x512xf32>
    %201 = vector.shape_cast %200 : vector<1x8x512xf32> to vector<8x512xf32>
    %cst_64 = arith.constant dense<0.000000e+00> : vector<8x512xf32>
    %202 = tpu.matmul %178, %19, %cst_64 {dimension_numbers = #tpu.dot_dimension_numbers<[1], [0], [0], [1], [0, 0, 1, 1], [], []>} : vector<8x128xf32>, vector<128x512xf32>, vector<8x512xf32> -> vector<8x512xf32>
    %203 = arith.addf %201, %202 : vector<8x512xf32>
    %204 = vector.extract_strided_slice %199 {offsets = [0, 0], sizes = [8, 128], strides = [1, 1]} : vector<8x512xf32> to vector<8x128xf32>
    %205 = arith.negf %204 : vector<8x128xf32>
    %206 = math.exp %205 : vector<8x128xf32>
    %cst_65 = arith.constant 1.000000e+00 : f32
    %207 = vector.broadcast %cst_65 : f32 to vector<8x128xf32>
    %208 = arith.addf %207, %206 : vector<8x128xf32>
    %209 = arith.divf %207, %208 : vector<8x128xf32>
    %210 = vector.extract_strided_slice %199 {offsets = [0, 128], sizes = [8, 128], strides = [1, 1]} : vector<8x512xf32> to vector<8x128xf32>
    %211 = arith.negf %210 : vector<8x128xf32>
    %212 = math.exp %211 : vector<8x128xf32>
    %cst_66 = arith.constant 1.000000e+00 : f32
    %213 = vector.broadcast %cst_66 : f32 to vector<8x128xf32>
    %214 = arith.addf %213, %212 : vector<8x128xf32>
    %215 = arith.divf %213, %214 : vector<8x128xf32>
    %216 = vector.extract_strided_slice %199 {offsets = [0, 256], sizes = [8, 128], strides = [1, 1]} : vector<8x512xf32> to vector<8x128xf32>
    %217 = math.tanh %216 : vector<8x128xf32>
    %218 = vector.extract_strided_slice %199 {offsets = [0, 384], sizes = [8, 128], strides = [1, 1]} : vector<8x512xf32> to vector<8x128xf32>
    %219 = arith.negf %218 : vector<8x128xf32>
    %220 = math.exp %219 : vector<8x128xf32>
    %cst_67 = arith.constant 1.000000e+00 : f32
    %221 = vector.broadcast %cst_67 : f32 to vector<8x128xf32>
    %222 = arith.addf %221, %220 : vector<8x128xf32>
    %223 = arith.divf %221, %222 : vector<8x128xf32>
    %224 = vector.extract_strided_slice %203 {offsets = [0, 0], sizes = [8, 128], strides = [1, 1]} : vector<8x512xf32> to vector<8x128xf32>
    %225 = arith.negf %224 : vector<8x128xf32>
    %226 = math.exp %225 : vector<8x128xf32>
    %cst_68 = arith.constant 1.000000e+00 : f32
    %227 = vector.broadcast %cst_68 : f32 to vector<8x128xf32>
    %228 = arith.addf %227, %226 : vector<8x128xf32>
    %229 = arith.divf %227, %228 : vector<8x128xf32>
    %230 = vector.extract_strided_slice %203 {offsets = [0, 128], sizes = [8, 128], strides = [1, 1]} : vector<8x512xf32> to vector<8x128xf32>
    %231 = arith.negf %230 : vector<8x128xf32>
    %232 = math.exp %231 : vector<8x128xf32>
    %cst_69 = arith.constant 1.000000e+00 : f32
    %233 = vector.broadcast %cst_69 : f32 to vector<8x128xf32>
    %234 = arith.addf %233, %232 : vector<8x128xf32>
    %235 = arith.divf %233, %234 : vector<8x128xf32>
    %236 = vector.extract_strided_slice %203 {offsets = [0, 256], sizes = [8, 128], strides = [1, 1]} : vector<8x512xf32> to vector<8x128xf32>
    %237 = math.tanh %236 : vector<8x128xf32>
    %238 = vector.extract_strided_slice %203 {offsets = [0, 384], sizes = [8, 128], strides = [1, 1]} : vector<8x512xf32> to vector<8x128xf32>
    %239 = arith.negf %238 : vector<8x128xf32>
    %240 = math.exp %239 : vector<8x128xf32>
    %cst_70 = arith.constant 1.000000e+00 : f32
    %241 = vector.broadcast %cst_70 : f32 to vector<8x128xf32>
    %242 = arith.addf %241, %240 : vector<8x128xf32>
    %243 = arith.divf %241, %242 : vector<8x128xf32>
    %244 = arith.mulf %215, %175 : vector<8x128xf32>
    %245 = arith.mulf %209, %217 : vector<8x128xf32>
    %246 = arith.addf %244, %245 : vector<8x128xf32>
    %247 = math.tanh %246 : vector<8x128xf32>
    %248 = arith.mulf %223, %247 : vector<8x128xf32>
    %249 = arith.mulf %235, %181 : vector<8x128xf32>
    %250 = arith.mulf %229, %237 : vector<8x128xf32>
    %251 = arith.addf %249, %250 : vector<8x128xf32>
    %252 = math.tanh %251 : vector<8x128xf32>
    %253 = arith.mulf %243, %252 : vector<8x128xf32>
    %254 = vector.extract_strided_slice %11 {offsets = [0, 2], sizes = [8, 1], strides = [1, 1]} : vector<8x4xi1> to vector<8x1xi1>
    %255 = vector.extract_strided_slice %15 {offsets = [0, 1], sizes = [8, 1], strides = [1, 1]} : vector<8x4xi1> to vector<8x1xi1>
    %256 = vector.shape_cast %254 : vector<8x1xi1> to vector<8x1xi1>
    %257 = vector.broadcast %256 : vector<8x1xi1> to vector<8x128xi1>
    %258 = arith.select %257, %248, %172 : vector<8x128xi1>, vector<8x128xf32>
    %259 = vector.shape_cast %254 : vector<8x1xi1> to vector<8x1xi1>
    %260 = vector.broadcast %259 : vector<8x1xi1> to vector<8x128xi1>
    %261 = arith.select %260, %246, %175 : vector<8x128xi1>, vector<8x128xf32>
    %262 = vector.shape_cast %255 : vector<8x1xi1> to vector<8x1xi1>
    %263 = vector.broadcast %262 : vector<8x1xi1> to vector<8x128xi1>
    %264 = arith.select %263, %253, %178 : vector<8x128xi1>, vector<8x128xf32>
    %265 = vector.shape_cast %255 : vector<8x1xi1> to vector<8x1xi1>
    %266 = vector.broadcast %265 : vector<8x1xi1> to vector<8x128xi1>
    %267 = arith.select %266, %251, %181 : vector<8x128xi1>, vector<8x128xf32>
    %cst_71 = arith.constant 0.000000e+00 : f32
    %268 = vector.shape_cast %254 : vector<8x1xi1> to vector<8x1xi1>
    %269 = vector.broadcast %268 : vector<8x1xi1> to vector<8x128xi1>
    %270 = vector.broadcast %cst_71 : f32 to vector<8x128xf32>
    %271 = arith.select %269, %258, %270 : vector<8x128xi1>, vector<8x128xf32>
    %c2_72 = arith.constant 2 : index
    %c0_73 = arith.constant 0 : index
    %c0_74 = arith.constant 0 : index
    %272 = vector.load %arg5[%c2_72, %c0_73, %c0_74] : memref<4x8x128xf32, #tpu.memory_space<vmem>>, vector<1x8x128xf32>
    %273 = vector.shape_cast %272 : vector<1x8x128xf32> to vector<8x128xf32>
    %274 = vector.shape_cast %271 : vector<8x128xf32> to vector<1x8x128xf32>
    tpu.vector_store %arg5[%c2_72, %c0_73, %c0_74], %274 {strides = array<i32>} : memref<4x8x128xf32, #tpu.memory_space<vmem>>, vector<1x8x128xf32>,
    %cst_75 = arith.constant 0.000000e+00 : f32
    %275 = vector.shape_cast %255 : vector<8x1xi1> to vector<8x1xi1>
    %276 = vector.broadcast %275 : vector<8x1xi1> to vector<8x128xi1>
    %277 = vector.broadcast %cst_75 : f32 to vector<8x128xf32>
    %278 = arith.select %276, %264, %277 : vector<8x128xi1>, vector<8x128xf32>
    %c1_76 = arith.constant 1 : index
    %c0_77 = arith.constant 0 : index
    %c0_78 = arith.constant 0 : index
    %279 = vector.load %arg6[%c1_76, %c0_77, %c0_78] : memref<4x8x128xf32, #tpu.memory_space<vmem>>, vector<1x8x128xf32>
    %280 = vector.shape_cast %279 : vector<1x8x128xf32> to vector<8x128xf32>
    %281 = vector.shape_cast %278 : vector<8x128xf32> to vector<1x8x128xf32>
    tpu.vector_store %arg6[%c1_76, %c0_77, %c0_78], %281 {strides = array<i32>} : memref<4x8x128xf32, #tpu.memory_space<vmem>>, vector<1x8x128xf32>,
    %c3_79 = arith.constant 3 : index
    %c0_80 = arith.constant 0 : index
    %c0_81 = arith.constant 0 : index
    %282 = vector.load %arg1[%c3_79, %c0_80, %c0_81] : memref<4x8x512xf32, #tpu.memory_space<vmem>>, vector<1x8x512xf32>
    %283 = vector.shape_cast %282 : vector<1x8x512xf32> to vector<8x512xf32>
    %cst_82 = arith.constant dense<0.000000e+00> : vector<8x512xf32>
    %284 = tpu.matmul %258, %17, %cst_82 {dimension_numbers = #tpu.dot_dimension_numbers<[1], [0], [0], [1], [0, 0, 1, 1], [], []>} : vector<8x128xf32>, vector<128x512xf32>, vector<8x512xf32> -> vector<8x512xf32>
    %285 = arith.addf %283, %284 : vector<8x512xf32>
    %c0_83 = arith.constant 0 : index
    %c0_84 = arith.constant 0 : index
    %c0_85 = arith.constant 0 : index
    %286 = vector.load %arg2[%c0_83, %c0_84, %c0_85] : memref<4x8x512xf32, #tpu.memory_space<vmem>>, vector<1x8x512xf32>
    %287 = vector.shape_cast %286 : vector<1x8x512xf32> to vector<8x512xf32>
    %cst_86 = arith.constant dense<0.000000e+00> : vector<8x512xf32>
    %288 = tpu.matmul %264, %19, %cst_86 {dimension_numbers = #tpu.dot_dimension_numbers<[1], [0], [0], [1], [0, 0, 1, 1], [], []>} : vector<8x128xf32>, vector<128x512xf32>, vector<8x512xf32> -> vector<8x512xf32>
    %289 = arith.addf %287, %288 : vector<8x512xf32>
    %290 = vector.extract_strided_slice %285 {offsets = [0, 0], sizes = [8, 128], strides = [1, 1]} : vector<8x512xf32> to vector<8x128xf32>
    %291 = arith.negf %290 : vector<8x128xf32>
    %292 = math.exp %291 : vector<8x128xf32>
    %cst_87 = arith.constant 1.000000e+00 : f32
    %293 = vector.broadcast %cst_87 : f32 to vector<8x128xf32>
    %294 = arith.addf %293, %292 : vector<8x128xf32>
    %295 = arith.divf %293, %294 : vector<8x128xf32>
    %296 = vector.extract_strided_slice %285 {offsets = [0, 128], sizes = [8, 128], strides = [1, 1]} : vector<8x512xf32> to vector<8x128xf32>
    %297 = arith.negf %296 : vector<8x128xf32>
    %298 = math.exp %297 : vector<8x128xf32>
    %cst_88 = arith.constant 1.000000e+00 : f32
    %299 = vector.broadcast %cst_88 : f32 to vector<8x128xf32>
    %300 = arith.addf %299, %298 : vector<8x128xf32>
    %301 = arith.divf %299, %300 : vector<8x128xf32>
    %302 = vector.extract_strided_slice %285 {offsets = [0, 256], sizes = [8, 128], strides = [1, 1]} : vector<8x512xf32> to vector<8x128xf32>
    %303 = math.tanh %302 : vector<8x128xf32>
    %304 = vector.extract_strided_slice %285 {offsets = [0, 384], sizes = [8, 128], strides = [1, 1]} : vector<8x512xf32> to vector<8x128xf32>
    %305 = arith.negf %304 : vector<8x128xf32>
    %306 = math.exp %305 : vector<8x128xf32>
    %cst_89 = arith.constant 1.000000e+00 : f32
    %307 = vector.broadcast %cst_89 : f32 to vector<8x128xf32>
    %308 = arith.addf %307, %306 : vector<8x128xf32>
    %309 = arith.divf %307, %308 : vector<8x128xf32>
    %310 = vector.extract_strided_slice %289 {offsets = [0, 0], sizes = [8, 128], strides = [1, 1]} : vector<8x512xf32> to vector<8x128xf32>
    %311 = arith.negf %310 : vector<8x128xf32>
    %312 = math.exp %311 : vector<8x128xf32>
    %cst_90 = arith.constant 1.000000e+00 : f32
    %313 = vector.broadcast %cst_90 : f32 to vector<8x128xf32>
    %314 = arith.addf %313, %312 : vector<8x128xf32>
    %315 = arith.divf %313, %314 : vector<8x128xf32>
    %316 = vector.extract_strided_slice %289 {offsets = [0, 128], sizes = [8, 128], strides = [1, 1]} : vector<8x512xf32> to vector<8x128xf32>
    %317 = arith.negf %316 : vector<8x128xf32>
    %318 = math.exp %317 : vector<8x128xf32>
    %cst_91 = arith.constant 1.000000e+00 : f32
    %319 = vector.broadcast %cst_91 : f32 to vector<8x128xf32>
    %320 = arith.addf %319, %318 : vector<8x128xf32>
    %321 = arith.divf %319, %320 : vector<8x128xf32>
    %322 = vector.extract_strided_slice %289 {offsets = [0, 256], sizes = [8, 128], strides = [1, 1]} : vector<8x512xf32> to vector<8x128xf32>
    %323 = math.tanh %322 : vector<8x128xf32>
    %324 = vector.extract_strided_slice %289 {offsets = [0, 384], sizes = [8, 128], strides = [1, 1]} : vector<8x512xf32> to vector<8x128xf32>
    %325 = arith.negf %324 : vector<8x128xf32>
    %326 = math.exp %325 : vector<8x128xf32>
    %cst_92 = arith.constant 1.000000e+00 : f32
    %327 = vector.broadcast %cst_92 : f32 to vector<8x128xf32>
    %328 = arith.addf %327, %326 : vector<8x128xf32>
    %329 = arith.divf %327, %328 : vector<8x128xf32>
    %330 = arith.mulf %301, %261 : vector<8x128xf32>
    %331 = arith.mulf %295, %303 : vector<8x128xf32>
    %332 = arith.addf %330, %331 : vector<8x128xf32>
    %333 = math.tanh %332 : vector<8x128xf32>
    %334 = arith.mulf %309, %333 : vector<8x128xf32>
    %335 = arith.mulf %321, %267 : vector<8x128xf32>
    %336 = arith.mulf %315, %323 : vector<8x128xf32>
    %337 = arith.addf %335, %336 : vector<8x128xf32>
    %338 = math.tanh %337 : vector<8x128xf32>
    %339 = arith.mulf %329, %338 : vector<8x128xf32>
    %340 = vector.extract_strided_slice %11 {offsets = [0, 3], sizes = [8, 1], strides = [1, 1]} : vector<8x4xi1> to vector<8x1xi1>
    %341 = vector.extract_strided_slice %15 {offsets = [0, 0], sizes = [8, 1], strides = [1, 1]} : vector<8x4xi1> to vector<8x1xi1>
    %342 = vector.shape_cast %340 : vector<8x1xi1> to vector<8x1xi1>
    %343 = vector.broadcast %342 : vector<8x1xi1> to vector<8x128xi1>
    %344 = arith.select %343, %334, %258 : vector<8x128xi1>, vector<8x128xf32>
    %345 = vector.shape_cast %340 : vector<8x1xi1> to vector<8x1xi1>
    %346 = vector.broadcast %345 : vector<8x1xi1> to vector<8x128xi1>
    %347 = arith.select %346, %332, %261 : vector<8x128xi1>, vector<8x128xf32>
    %348 = vector.shape_cast %341 : vector<8x1xi1> to vector<8x1xi1>
    %349 = vector.broadcast %348 : vector<8x1xi1> to vector<8x128xi1>
    %350 = arith.select %349, %339, %264 : vector<8x128xi1>, vector<8x128xf32>
    %351 = vector.shape_cast %341 : vector<8x1xi1> to vector<8x1xi1>
    %352 = vector.broadcast %351 : vector<8x1xi1> to vector<8x128xi1>
    %353 = arith.select %352, %337, %267 : vector<8x128xi1>, vector<8x128xf32>
    %cst_93 = arith.constant 0.000000e+00 : f32
    %354 = vector.shape_cast %340 : vector<8x1xi1> to vector<8x1xi1>
    %355 = vector.broadcast %354 : vector<8x1xi1> to vector<8x128xi1>
    %356 = vector.broadcast %cst_93 : f32 to vector<8x128xf32>
    %357 = arith.select %355, %344, %356 : vector<8x128xi1>, vector<8x128xf32>
    %c3_94 = arith.constant 3 : index
    %c0_95 = arith.constant 0 : index
    %c0_96 = arith.constant 0 : index
    %358 = vector.load %arg5[%c3_94, %c0_95, %c0_96] : memref<4x8x128xf32, #tpu.memory_space<vmem>>, vector<1x8x128xf32>
    %359 = vector.shape_cast %358 : vector<1x8x128xf32> to vector<8x128xf32>
    %360 = vector.shape_cast %357 : vector<8x128xf32> to vector<1x8x128xf32>
    tpu.vector_store %arg5[%c3_94, %c0_95, %c0_96], %360 {strides = array<i32>} : memref<4x8x128xf32, #tpu.memory_space<vmem>>, vector<1x8x128xf32>,
    %cst_97 = arith.constant 0.000000e+00 : f32
    %361 = vector.shape_cast %341 : vector<8x1xi1> to vector<8x1xi1>
    %362 = vector.broadcast %361 : vector<8x1xi1> to vector<8x128xi1>
    %363 = vector.broadcast %cst_97 : f32 to vector<8x128xf32>
    %364 = arith.select %362, %350, %363 : vector<8x128xi1>, vector<8x128xf32>
    %c0_98 = arith.constant 0 : index
    %c0_99 = arith.constant 0 : index
    %c0_100 = arith.constant 0 : index
    %365 = vector.load %arg6[%c0_98, %c0_99, %c0_100] : memref<4x8x128xf32, #tpu.memory_space<vmem>>, vector<1x8x128xf32>
    %366 = vector.shape_cast %365 : vector<1x8x128xf32> to vector<8x128xf32>
    %367 = vector.shape_cast %364 : vector<8x128xf32> to vector<1x8x128xf32>
    tpu.vector_store %arg6[%c0_98, %c0_99, %c0_100], %367 {strides = array<i32>} : memref<4x8x128xf32, #tpu.memory_space<vmem>>, vector<1x8x128xf32>,
    %c0_101 = arith.constant 0 : index
    %c0_102 = arith.constant 0 : index
    %368 = vector.load %arg8[%c0_101, %c0_102] : memref<8x128xf32, #tpu.memory_space<vmem>>, vector<8x128xf32>
    tpu.vector_store %arg8[%c0_101, %c0_102], %344 {strides = array<i32>} : memref<8x128xf32, #tpu.memory_space<vmem>>, vector<8x128xf32>,
    %c0_103 = arith.constant 0 : index
    %c0_104 = arith.constant 0 : index
    %369 = vector.load %arg9[%c0_103, %c0_104] : memref<8x128xf32, #tpu.memory_space<vmem>>, vector<8x128xf32>
    tpu.vector_store %arg9[%c0_103, %c0_104], %347 {strides = array<i32>} : memref<8x128xf32, #tpu.memory_space<vmem>>, vector<8x128xf32>,
    %c0_105 = arith.constant 0 : index
    %c0_106 = arith.constant 0 : index
    %370 = vector.load %arg10[%c0_105, %c0_106] : memref<8x128xf32, #tpu.memory_space<vmem>>, vector<8x128xf32>
    tpu.vector_store %arg10[%c0_105, %c0_106], %350 {strides = array<i32>} : memref<8x128xf32, #tpu.memory_space<vmem>>, vector<8x128xf32>,
    %c0_107 = arith.constant 0 : index
    %c0_108 = arith.constant 0 : index
    %371 = vector.load %arg11[%c0_107, %c0_108] : memref<8x128xf32, #tpu.memory_space<vmem>>, vector<8x128xf32>
    tpu.vector_store %arg11[%c0_107, %c0_108], %353 {strides = array<i32>} : memref<8x128xf32, #tpu.memory_space<vmem>>, vector<8x128xf32>,
    return
  }
  func.func @transform_0(%arg0: i32) -> (i32, i32, i32) {
    %c0_i32 = arith.constant 0 : i32
    %c0_i32_0 = arith.constant 0 : i32
    %c0_i32_1 = arith.constant 0 : i32
    return %arg0, %c0_i32, %c0_i32_0 : i32, i32, i32
  }
  func.func @transform_1(%arg0: i32) -> (i32, i32, i32) {
    %c1_i32 = arith.constant 1 : i32
    %0 = arith.subi %c1_i32, %arg0 : i32
    %c0_i32 = arith.constant 0 : i32
    %c1_i32_0 = arith.constant 1 : i32
    %c0_i32_1 = arith.constant 0 : i32
    return %0, %c0_i32, %c1_i32_0 : i32, i32, i32
  }
  func.func @transform_2(%arg0: i32) -> (i32, i32) {
    %c0_i32 = arith.constant 0 : i32
    %c0_i32_0 = arith.constant 0 : i32
    %c0_i32_1 = arith.constant 0 : i32
    return %c0_i32, %c0_i32_0 : i32, i32
  }
  func.func @transform_4(%arg0: i32) -> (i32, i32, i32) {
    %c0_i32 = arith.constant 0 : i32
    %c0_i32_0 = arith.constant 0 : i32
    %c0_i32_1 = arith.constant 0 : i32
    return %arg0, %c0_i32, %c0_i32_0 : i32, i32, i32
  }
  func.func @transform_5(%arg0: i32) -> (i32, i32, i32) {
    %c1_i32 = arith.constant 1 : i32
    %0 = arith.subi %c1_i32, %arg0 : i32
    %c0_i32 = arith.constant 0 : i32
    %c0_i32_0 = arith.constant 0 : i32
    %c0_i32_1 = arith.constant 0 : i32
    return %0, %c0_i32, %c0_i32_0 : i32, i32, i32
  }
}

</mosaic_0001>

<llo_original>
// kernel: lstm_forward.2
$region0: #{lstm_forward.2}
  #allocation0 [shape = 'u32[]', space=smem, size = 0x4, offset = 0x4, fixed_abs, tag = 'smem constant byte address 0x4 - core index']
  #allocation1 [shape = 'u32[144,128]{1,0:T(1,128)}', space=vmem, size = 0x12000, scoped, tag = 'internal scratch']
  #allocation2 [shape = 'f32[2,128,512]{2,1,0:T(8,128)}', space=vmem, size = 0x80000, scoped, tag = 'scratch operand']
  #allocation3 [shape = 'f32[8,128]{1,0:T(8,128)}', space=vmem, size = 0x1000, scoped, tag = 'scratch operand']
  #allocation4 [shape = 'f32[8,128]{1,0:T(8,128)}', space=vmem, size = 0x1000, scoped, tag = 'scratch operand']
  #allocation5 [shape = 'f32[8,128]{1,0:T(8,128)}', space=vmem, size = 0x1000, scoped, tag = 'scratch operand']
  #allocation6 [shape = 'f32[8,128]{1,0:T(8,128)}', space=vmem, size = 0x1000, scoped, tag = 'scratch operand']
  #allocation7 [shape = 's32[1]{0}', space=sflag, size = 0x4, scoped, tag = 'scratch operand']
  #allocation10 [shape = 's32[]', space=sflag, size = 0x4, offset = 0, fixed_abs, tag = 'sflag constant byte address 0x0 - dummy sync flag']
  %s0 = inlined_call_operand.vmem [shape: f32[8,8,1024], index: 0, kind: input, shape index: {}, may-alias: {0,1}]
  %s1 = inlined_call_operand.vmem [shape: f32[8,8,1024], index: 1, kind: input, shape index: {}, may-alias: {0,1}]
  %s2 = inlined_call_operand.vmem [shape: s32[8,1], index: 2, kind: input, shape index: {}]
  %s3 = inlined_call_operand.vmem [shape: f32[2,128,512], index: 3, kind: input, shape index: {}]
  %s4 = inlined_call_operand.vmem [shape: f32[8,8,128], index: 4, kind: output, shape index: {0}]
  %s5 = inlined_call_operand.vmem [shape: f32[8,8,128], index: 5, kind: output, shape index: {1}]
  %6 = xla_tuple %s4, %s5
  %s7 = sld [smem:[#allocation0]]
  $region137: #{lstm_forward.2} parent=0
    _
  %s9 = ssub.s32 1, %s7
  %s10 = scalar_select 0, %s9, %s7
  $region1: #{lstm_forward.2} parent=0
    #allocation8 [shape = 'u8[131072]{0}', space=vmem, size = 0x20000, scoped, tag = 'input window, operand 0']
    #allocation9 [shape = 'u8[131072]{0}', space=vmem, size = 0x20000, scoped, tag = 'input window, operand 1']
    loop: start=0, step=1, limit=4
    $region2: #{lstm_forward.2} parent=1 // loop_pre_header
      _
    $region3: #{lstm_forward.2} parent=1 // loop_header
      %s12 = sphi 0, %s16
      %p13 = scmp.ge.s32.totalorder %s12, 4
      %s22 = sphi 0, %s24
      %s25 = sphi 0, %s22
      %s26 = sphi 0, %s25
      %s42 = sphi 0, %s26
      %s50 = sphi 0, %s52
      %s53 = sphi 0, %s50
      %s54 = sphi 0, %s53
      %s70 = sphi 0, %s54
      %s74 = sphi 0, %s74
      %s76 = sphi 0, %s74
      %s77 = sphi 0, %s76
      %s91 = sphi 0, %s77
      %s97 = sphi 0, %s99
      %s100 = sphi 0, %s97
      %s101 = sphi 0, %s100
      %s117 = sphi 0, %s101
      %s125 = sphi 0, %s127
      %s128 = sphi 0, %s125
      %s129 = sphi 0, %s128
      %s145 = sphi 0, %s129
    $region4: #{lstm_forward.2} parent=1 // loop_header_branch
      %15 = sbr.rel (%p13) target = $region8
    $region5: #{lstm_forward.2} parent=1 // loop_body
      %s17 = ssub.s32 %s12, 1
      %s18 = ssub.s32 %s12, 2
      %s19 = sadd.s32 %s12, 1
      %s20 = ssub.s32 %s12, %s19
      %p21 = scmp.eq.s32.totalorder %s20, 0
      %s23 = sadd.s32 %s22, 1
      %s24 = scalar_select %p21, %s22, %s23
      %p27 = pneg %p21
      %p28 = scmp.eq.s32.totalorder %s12, 1
      %p29 = por %p27, %p28
      %p30 = scmp.ne.s32.totalorder %s22, %s25
      %p31 = scmp.eq.s32.totalorder %s12, 0
      %p32 = por %p30, %p31
      %p33 = scmp.ne.s32.totalorder %s22, %s25
      %p34 = scmp.eq.s32.totalorder %s17, 1
      %p35 = por %p33, %p34
      %p36 = scmp.ne.s32.totalorder %s25, %s26
      %p37 = scmp.eq.s32.totalorder %s17, 0
      %p38 = por %p36, %p37
      %p39 = scmp.ne.s32.totalorder %s25, %s26
      %p40 = scmp.eq.s32.totalorder %s18, 1
      %p41 = por %p39, %p40
      %p43 = scmp.ne.s32.totalorder %s26, %s42
      %p44 = scmp.eq.s32.totalorder %s18, 0
      %p45 = por %p43, %p44
      %s46 = ssub.s32 1, %s12
      %s47 = ssub.s32 1, %s19
      %s48 = ssub.s32 %s46, %s47
      %p49 = scmp.eq.s32.totalorder %s48, 0
      %s51 = sadd.s32 %s50, 1
      %s52 = scalar_select %p49, %s50, %s51
      %p55 = pneg %p49
      %p56 = scmp.eq.s32.totalorder %s12, 1
      %p57 = por %p55, %p56
      %p58 = scmp.ne.s32.totalorder %s50, %s53
      %p59 = scmp.eq.s32.totalorder %s12, 0
      %p60 = por %p58, %p59
      %p61 = scmp.ne.s32.totalorder %s50, %s53
      %p62 = scmp.eq.s32.totalorder %s17, 1
      %p63 = por %p61, %p62
      %p64 = scmp.ne.s32.totalorder %s53, %s54
      %p65 = scmp.eq.s32.totalorder %s17, 0
      %p66 = por %p64, %p65
      %p67 = scmp.ne.s32.totalorder %s53, %s54
      %p68 = scmp.eq.s32.totalorder %s18, 1
      %p69 = por %p67, %p68
      %p71 = scmp.ne.s32.totalorder %s54, %s70
      %p72 = scmp.eq.s32.totalorder %s18, 0
      %p73 = por %p71, %p72
      %s75 = sadd.s32 %s74, 1
      %p78 = scmp.eq.s32.totalorder %s12, 1
      %p79 = scmp.ne.s32.totalorder %s74, %s76
      %p80 = scmp.eq.s32.totalorder %s12, 0
      %p81 = por %p79, %p80
      %p82 = scmp.ne.s32.totalorder %s74, %s76
      %p83 = scmp.eq.s32.totalorder %s17, 1
      %p84 = por %p82, %p83
      %p85 = scmp.ne.s32.totalorder %s76, %s77
      %p86 = scmp.eq.s32.totalorder %s17, 0
      %p87 = por %p85, %p86
      %p88 = scmp.ne.s32.totalorder %s76, %s77
      %p89 = scmp.eq.s32.totalorder %s18, 1
      %p90 = por %p88, %p89
      %p92 = scmp.ne.s32.totalorder %s77, %s91
      %p93 = scmp.eq.s32.totalorder %s18, 0
      %p94 = por %p92, %p93
      %s95 = ssub.s32 %s12, %s19
      %p96 = scmp.eq.s32.totalorder %s95, 0
      %s98 = sadd.s32 %s97, 1
      %s99 = scalar_select %p96, %s97, %s98
      %p102 = pneg %p96
      %p103 = scmp.eq.s32.totalorder %s12, 1
      %p104 = por %p102, %p103
      %p105 = scmp.ne.s32.totalorder %s97, %s100
      %p106 = scmp.eq.s32.totalorder %s12, 0
      %p107 = por %p105, %p106
      %p108 = scmp.ne.s32.totalorder %s97, %s100
      %p109 = scmp.eq.s32.totalorder %s17, 1
      %p110 = por %p108, %p109
      %p111 = scmp.ne.s32.totalorder %s100, %s101
      %p112 = scmp.eq.s32.totalorder %s17, 0
      %p113 = por %p111, %p112
      %p114 = scmp.ne.s32.totalorder %s100, %s101
      %p115 = scmp.eq.s32.totalorder %s18, 1
      %p116 = por %p114, %p115
      %p118 = scmp.ne.s32.totalorder %s101, %s117
      %p119 = scmp.eq.s32.totalorder %s18, 0
      %p120 = por %p118, %p119
      %s121 = ssub.s32 1, %s12
      %s122 = ssub.s32 1, %s19
      %s123 = ssub.s32 %s121, %s122
      %p124 = scmp.eq.s32.totalorder %s123, 0
      %s126 = sadd.s32 %s125, 1
      %s127 = scalar_select %p124, %s125, %s126
      %p130 = pneg %p124
      %p131 = scmp.eq.s32.totalorder %s12, 1
      %p132 = por %p130, %p131
      %p133 = scmp.ne.s32.totalorder %s125, %s128
      %p134 = scmp.eq.s32.totalorder %s12, 0
      %p135 = por %p133, %p134
      %p136 = scmp.ne.s32.totalorder %s125, %s128
      %p137 = scmp.eq.s32.totalorder %s17, 1
      %p138 = por %p136, %p137
      %p139 = scmp.ne.s32.totalorder %s128, %s129
      %p140 = scmp.eq.s32.totalorder %s17, 0
      %p141 = por %p139, %p140
      %p142 = scmp.ne.s32.totalorder %s128, %s129
      %p143 = scmp.eq.s32.totalorder %s18, 1
      %p144 = por %p142, %p143
      %p146 = scmp.ne.s32.totalorder %s129, %s145
      %p147 = scmp.eq.s32.totalorder %s18, 0
      %p148 = por %p146, %p147
      %p149 = scmp.le.s32.totalorder 1, %s12
      %p150 = scmp.lt.s32.totalorder %s12, 3
      %p151 = pnand %p149, %p150
      %p152 = pneg %p151
      // Predicated region
      $region9: #{lstm_forward.2} parent=5 // pred_check
        _
      $region10: #{lstm_forward.2} parent=5 // pred_check_branch
        %154 = sbr.rel (%p151) target = $region12
      $region11: #{lstm_forward.2} parent=5 // pred_region
        %s155 = ssub.s32 %s12, 1
        // Predicated region
        $region13: #{lstm_forward.2} parent=11 // pred_check
          %p156 = pneg %p87
        $region14: #{lstm_forward.2} parent=11 // pred_check_branch
          %158 = sbr.rel (%p156) target = $region16
        $region15: #{lstm_forward.2} parent=11 // pred_region
          _
        $region16: #{lstm_forward.2} parent=11 // pred_fallthru
          _
      $region12: #{lstm_forward.2} parent=5 // pred_fallthru
        _
      %p159 = scmp.lt.s32.totalorder %s12, 2
      // Predicated region
      $region17: #{lstm_forward.2} parent=5 // pred_check
        %p160 = pneg %p159
      $region18: #{lstm_forward.2} parent=5 // pred_check_branch
        %162 = sbr.rel (%p160) target = $region20
      $region19: #{lstm_forward.2} parent=5 // pred_region
        // Predicated region
        $region21: #{lstm_forward.2} parent=19 // pred_check
          %p163 = pneg %p32
        $region22: #{lstm_forward.2} parent=19 // pred_check_branch
          %165 = sbr.rel (%p163) target = $region24
        $region23: #{lstm_forward.2} parent=19 // pred_region
          %s166 = sand.u32 %s22, 1
          %s167 = sand.u32 %s22, 1
          %s168 = smul.addr %s167, 128
          %s169 = scalar_lea.vmem [#allocation8], %s168
          %s170 = smul.u32 4, %s12
          %s171 = smul.addr %s170, 8
          %s172 = smul.addr %s171, 8
          %s173 = scalar_lea.vmem %s0, %s172
          // Predicated region
          $region25: #{lstm_forward.2} parent=23 // pred_check
            _
          $region26: #{lstm_forward.2} parent=23 // pred_check_branch
            %175 = sbr.rel (0) target = $region28
          $region27: #{lstm_forward.2} parent=23 // pred_region
            // Predicated region
            $region29: #{lstm_forward.2} parent=27 // pred_check
              _
            $region30: #{lstm_forward.2} parent=27 // pred_check_branch
              %177 = sbr.rel (0) target = $region32
            $region31: #{lstm_forward.2} parent=27 // pred_region
              loop: start=0, step=1, limit=1
              $region33: #{lstm_forward.2} parent=31 // loop_pre_header
                _
              $region34: #{lstm_forward.2} parent=31 // loop_header
                %s179 = sphi 0, %s183
                %p180 = scmp.ge.s32.totalorder %s179, 1
                %s184 = sphi %s173, %s173
                %s185 = sphi %s169, %s169
              $region35: #{lstm_forward.2} parent=31 // loop_header_branch
                %182 = sbr.rel (%p180) target = $region39
              $region36: #{lstm_forward.2} parent=31 // loop_body
                %v186 = vld [vmem:[%s184] sm:$0xff]
                %187 = vst [vmem:[%s185] sm:$0xff] %v186
                %v188 = vld [vmem:[%s184 + $0x8] sm:$0xff]
                %189 = vst [vmem:[%s185 + $0x8] sm:$0xff] %v188
                %v190 = vld [vmem:[%s184 + $0x10] sm:$0xff]
                %191 = vst [vmem:[%s185 + $0x10] sm:$0xff] %v190
                %v192 = vld [vmem:[%s184 + $0x18] sm:$0xff]
                %193 = vst [vmem:[%s185 + $0x18] sm:$0xff] %v192
                %v194 = vld [vmem:[%s184 + $0x40] sm:$0xff]
                %195 = vst [vmem:[%s185 + $0x20] sm:$0xff] %v194
                %v196 = vld [vmem:[%s184 + $0x48] sm:$0xff]
                %197 = vst [vmem:[%s185 + $0x28] sm:$0xff] %v196
                %v198 = vld [vmem:[%s184 + $0x50] sm:$0xff]
                %199 = vst [vmem:[%s185 + $0x30] sm:$0xff] %v198
                %v200 = vld [vmem:[%s184 + $0x58] sm:$0xff]
                %201 = vst [vmem:[%s185 + $0x38] sm:$0xff] %v200
                %v202 = vld [vmem:[%s184 + $0x80] sm:$0xff]
                %203 = vst [vmem:[%s185 + $0x40] sm:$0xff] %v202
                %v204 = vld [vmem:[%s184 + $0x88] sm:$0xff]
                %205 = vst [vmem:[%s185 + $0x48] sm:$0xff] %v204
                %v206 = vld [vmem:[%s184 + $0x90] sm:$0xff]
                %207 = vst [vmem:[%s185 + $0x50] sm:$0xff] %v206
                %v208 = vld [vmem:[%s184 + $0x98] sm:$0xff]
                %209 = vst [vmem:[%s185 + $0x58] sm:$0xff] %v208
                %v210 = vld [vmem:[%s184 + $0xc0] sm:$0xff]
                %211 = vst [vmem:[%s185 + $0x60] sm:$0xff] %v210
                %v212 = vld [vmem:[%s184 + $0xc8] sm:$0xff]
                %213 = vst [vmem:[%s185 + $0x68] sm:$0xff] %v212
                %v214 = vld [vmem:[%s184 + $0xd0] sm:$0xff]
                %215 = vst [vmem:[%s185 + $0x70] sm:$0xff] %v214
                %v216 = vld [vmem:[%s184 + $0xd8] sm:$0xff]
                %217 = vst [vmem:[%s185 + $0x78] sm:$0xff] %v216
              $region37: #{lstm_forward.2} parent=31 // loop_footer
                %s183 = sadd.s32 1, %s179
              $region38: #{lstm_forward.2} parent=31 // loop_footer_branch
                %178 = sbr.rel target = $region34
              $region39: #{lstm_forward.2} parent=31 // loop_exit
                _
            $region32: #{lstm_forward.2} parent=27 // pred_fallthru
              _
            // Predicated region
            $region40: #{lstm_forward.2} parent=27 // pred_check
              _
            $region41: #{lstm_forward.2} parent=27 // pred_check_branch
              %219 = sbr.rel target = $region43
            $region42: #{lstm_forward.2} parent=27 // pred_region
              _
            $region43: #{lstm_forward.2} parent=27 // pred_fallthru
              _
          $region28: #{lstm_forward.2} parent=23 // pred_fallthru
            _
          %220 = vnop
        $region24: #{lstm_forward.2} parent=19 // pred_fallthru
          _
        // Predicated region
        $region44: #{lstm_forward.2} parent=19 // pred_check
          %p221 = pneg %p60
        $region45: #{lstm_forward.2} parent=19 // pred_check_branch
          %223 = sbr.rel (%p221) target = $region47
        $region46: #{lstm_forward.2} parent=19 // pred_region
          %s224 = sand.u32 %s50, 1
          %s225 = sand.u32 %s50, 1
          %s226 = smul.addr %s225, 128
          %s227 = scalar_lea.vmem [#allocation9], %s226
          %s228 = ssub.s32 1, %s12
          %s229 = smul.u32 4, %s228
          %s230 = smul.addr %s229, 8
          %s231 = sadd.s32 4, %s230
          %s232 = smul.addr %s231, 8
          %s233 = scalar_lea.vmem %s1, %s232
          // Predicated region
          $region48: #{lstm_forward.2} parent=46 // pred_check
            _
          $region49: #{lstm_forward.2} parent=46 // pred_check_branch
            %235 = sbr.rel (0) target = $region51
          $region50: #{lstm_forward.2} parent=46 // pred_region
            // Predicated region
            $region52: #{lstm_forward.2} parent=50 // pred_check
              _
            $region53: #{lstm_forward.2} parent=50 // pred_check_branch
              %237 = sbr.rel (0) target = $region55
            $region54: #{lstm_forward.2} parent=50 // pred_region
              loop: start=0, step=1, limit=1
              $region56: #{lstm_forward.2} parent=54 // loop_pre_header
                _
              $region57: #{lstm_forward.2} parent=54 // loop_header
                %s239 = sphi 0, %s243
                %p240 = scmp.ge.s32.totalorder %s239, 1
                %s244 = sphi %s233, %s233
                %s245 = sphi %s227, %s227
              $region58: #{lstm_forward.2} parent=54 // loop_header_branch
                %242 = sbr.rel (%p240) target = $region62
              $region59: #{lstm_forward.2} parent=54 // loop_body
                %v246 = vld [vmem:[%s244] sm:$0xff]
                %247 = vst [vmem:[%s245] sm:$0xff] %v246
                %v248 = vld [vmem:[%s244 + $0x8] sm:$0xff]
                %249 = vst [vmem:[%s245 + $0x8] sm:$0xff] %v248
                %v250 = vld [vmem:[%s244 + $0x10] sm:$0xff]
                %251 = vst [vmem:[%s245 + $0x10] sm:$0xff] %v250
                %v252 = vld [vmem:[%s244 + $0x18] sm:$0xff]
                %253 = vst [vmem:[%s245 + $0x18] sm:$0xff] %v252
                %v254 = vld [vmem:[%s244 + $0x40] sm:$0xff]
                %255 = vst [vmem:[%s245 + $0x20] sm:$0xff] %v254
                %v256 = vld [vmem:[%s244 + $0x48] sm:$0xff]
                %257 = vst [vmem:[%s245 + $0x28] sm:$0xff] %v256
                %v258 = vld [vmem:[%s244 + $0x50] sm:$0xff]
                %259 = vst [vmem:[%s245 + $0x30] sm:$0xff] %v258
                %v260 = vld [vmem:[%s244 + $0x58] sm:$0xff]
                %261 = vst [vmem:[%s245 + $0x38] sm:$0xff] %v260
                %v262 = vld [vmem:[%s244 + $0x80] sm:$0xff]
                %263 = vst [vmem:[%s245 + $0x40] sm:$0xff] %v262
                %v264 = vld [vmem:[%s244 + $0x88] sm:$0xff]
                %265 = vst [vmem:[%s245 + $0x48] sm:$0xff] %v264
                %v266 = vld [vmem:[%s244 + $0x90] sm:$0xff]
                %267 = vst [vmem:[%s245 + $0x50] sm:$0xff] %v266
                %v268 = vld [vmem:[%s244 + $0x98] sm:$0xff]
                %269 = vst [vmem:[%s245 + $0x58] sm:$0xff] %v268
                %v270 = vld [vmem:[%s244 + $0xc0] sm:$0xff]
                %271 = vst [vmem:[%s245 + $0x60] sm:$0xff] %v270
                %v272 = vld [vmem:[%s244 + $0xc8] sm:$0xff]
                %273 = vst [vmem:[%s245 + $0x68] sm:$0xff] %v272
                %v274 = vld [vmem:[%s244 + $0xd0] sm:$0xff]
                %275 = vst [vmem:[%s245 + $0x70] sm:$0xff] %v274
                %v276 = vld [vmem:[%s244 + $0xd8] sm:$0xff]
                %277 = vst [vmem:[%s245 + $0x78] sm:$0xff] %v276
              $region60: #{lstm_forward.2} parent=54 // loop_footer
                %s243 = sadd.s32 1, %s239
              $region61: #{lstm_forward.2} parent=54 // loop_footer_branch
                %238 = sbr.rel target = $region57
              $region62: #{lstm_forward.2} parent=54 // loop_exit
                _
            $region55: #{lstm_forward.2} parent=50 // pred_fallthru
              _
            // Predicated region
            $region63: #{lstm_forward.2} parent=50 // pred_check
              _
            $region64: #{lstm_forward.2} parent=50 // pred_check_branch
              %279 = sbr.rel target = $region66
            $region65: #{lstm_forward.2} parent=50 // pred_region
              _
            $region66: #{lstm_forward.2} parent=50 // pred_fallthru
              _
          $region51: #{lstm_forward.2} parent=46 // pred_fallthru
            _
          %280 = vnop
        $region47: #{lstm_forward.2} parent=19 // pred_fallthru
          _
      $region20: #{lstm_forward.2} parent=5 // pred_fallthru
        _
      %p281 = scmp.le.s32.totalorder 1, %s12
      %p282 = scmp.lt.s32.totalorder %s12, 3
      %p283 = pnand %p281, %p282
      %p284 = pneg %p283
      // Predicated region
      $region67: #{lstm_forward.2} parent=5 // pred_check
        _
      $region68: #{lstm_forward.2} parent=5 // pred_check_branch
        %286 = sbr.rel (%p283) target = $region70
      $region69: #{lstm_forward.2} parent=5 // pred_region
        %s287 = ssub.s32 %s12, 1
        %s288 = sand.u32 %s25, 1
        %s289 = sand.u32 %s25, 1
        %s290 = smul.addr %s289, 128
        %s291 = scalar_lea.vmem [#allocation8], %s290
        // Predicated region
        $region71: #{lstm_forward.2} parent=69 // pred_check
          %p292 = pneg %p38
        $region72: #{lstm_forward.2} parent=69 // pred_check_branch
          %294 = sbr.rel (%p292) target = $region74
        $region73: #{lstm_forward.2} parent=69 // pred_region
          _
        $region74: #{lstm_forward.2} parent=69 // pred_fallthru
          _
        %s295 = sand.u32 %s53, 1
        %s296 = sand.u32 %s53, 1
        %s297 = smul.addr %s296, 128
        %s298 = scalar_lea.vmem [#allocation9], %s297
        // Predicated region
        $region75: #{lstm_forward.2} parent=69 // pred_check
          %p299 = pneg %p66
        $region76: #{lstm_forward.2} parent=69 // pred_check_branch
          %301 = sbr.rel (%p299) target = $region78
        $region77: #{lstm_forward.2} parent=69 // pred_region
          _
        $region78: #{lstm_forward.2} parent=69 // pred_fallthru
          _
        %s302 = sand.u32 %s25, 1
        %s303 = sand.u32 %s25, 1
        %s304 = smul.addr %s303, 128
        %s305 = scalar_lea.vmem [#allocation8], %s304
        %p306 = pneg %p38
        %p307 = pneg %p35
        %s308 = sand.u32 %s53, 1
        %s309 = sand.u32 %s53, 1
        %s310 = smul.addr %s309, 128
        %s311 = scalar_lea.vmem [#allocation9], %s310
        %p312 = pneg %p66
        %p313 = pneg %p63
        %p314 = pneg %p87
        %p315 = pneg %p84
        %p316 = pneg %p113
        %p317 = pneg %p110
        %s318 = smul.u32 4, %s17
        %p319 = scmp.lt.s32.totalorder %s318, 7
        %s320 = scalar_select %p319, %s318, 7
        %s321 = smul.addr %s320, 8
        %s322 = scalar_lea.vmem %s4, %s321
        %p323 = pneg %p141
        %p324 = pneg %p138
        %s325 = ssub.s32 1, %s17
        %s326 = smul.u32 4, %s325
        %p327 = scmp.lt.s32.totalorder %s326, 7
        %s328 = scalar_select %p327, %s326, 7
        %s329 = smul.addr %s328, 8
        %s330 = scalar_lea.vmem %s5, %s329
        %s331 = smul.u32 4, %s17
        %s332 = ssub.s32 1, %s17
        %s333 = smul.u32 4, %s332
        %s334 = smul.u32 4, %s17
        %p335 = scmp.lt.s32.totalorder %s334, 7
        %s336 = scalar_select %p335, %s334, 7
        %s337 = smul.addr %s336, 8
        %s338 = scalar_lea.vmem %s4, %s337
        %s339 = smul.u32 4, %s17
        %s340 = ssub.s32 1, %s17
        %s341 = smul.u32 4, %s340
        %p342 = scmp.lt.s32.totalorder %s341, 7
        %s343 = scalar_select %p342, %s341, 7
        %s344 = smul.addr %s343, 8
        %s345 = scalar_lea.vmem %s5, %s344
        %s346 = ssub.s32 1, %s17
        %s347 = smul.u32 4, %s346
        %p348 = scmp.eq.s32.totalorder %s17, 0
        // Predicated region
        $region79: #{lstm_forward.2} parent=69 // pred_check
          %p349 = pneg %p348
        $region80: #{lstm_forward.2} parent=69 // pred_check_branch
          %351 = sbr.rel (%p349) target = $region82
        $region81: #{lstm_forward.2} parent=69 // pred_region
          %p353 = scmp.lt.u32.totalorder 1024, 8
          %p354 = pneg %p353
          // Predicated region
          $region83: #{lstm_forward.2} parent=81 // pred_check
            _
          $region84: #{lstm_forward.2} parent=81 // pred_check_branch
            %356 = sbr.rel (%p353) target = $region86
          $region85: #{lstm_forward.2} parent=81 // pred_region
            %s371 = sand.u32 1024, 7
            %p372 = scmp.eq.s32.totalorder %s371, 0
            // Predicated region
            $region98: #{lstm_forward.2} parent=85 // pred_check
              %p373 = pneg %p372
            $region99: #{lstm_forward.2} parent=85 // pred_check_branch
              %375 = sbr.rel (%p373) target = $region101
            $region100: #{lstm_forward.2} parent=85 // pred_region
              loop: start=0, step=1, limit=1
              $region102: #{lstm_forward.2} parent=100 // loop_pre_header
                _
              $region103: #{lstm_forward.2} parent=100 // loop_header
                %s377 = sphi 0, %s381
                %p378 = scmp.ge.s32.totalorder %s377, 1
                %s382 = sphi %s3, %s3
                %s383 = sphi [#allocation2], [#allocation2]
              $region104: #{lstm_forward.2} parent=100 // loop_header_branch
                %380 = sbr.rel (%p378) target = $region108
              $region105: #{lstm_forward.2} parent=100 // loop_body
                %v384 = vld [vmem:[%s382] sm:$0xff]
                %385 = vst [vmem:[%s383] sm:$0xff] %v384
                %v386 = vld [vmem:[%s382 + $0x8] sm:$0xff]
                %387 = vst [vmem:[%s383 + $0x8] sm:$0xff] %v386
                %v388 = vld [vmem:[%s382 + $0x10] sm:$0xff]
                %389 = vst [vmem:[%s383 + $0x10] sm:$0xff] %v388
                %v390 = vld [vmem:[%s382 + $0x18] sm:$0xff]
                %391 = vst [vmem:[%s383 + $0x18] sm:$0xff] %v390
                %v392 = vld [vmem:[%s382 + $0x20] sm:$0xff]
                %393 = vst [vmem:[%s383 + $0x20] sm:$0xff] %v392
                %v394 = vld [vmem:[%s382 + $0x28] sm:$0xff]
                %395 = vst [vmem:[%s383 + $0x28] sm:$0xff] %v394
                %v396 = vld [vmem:[%s382 + $0x30] sm:$0xff]
                %397 = vst [vmem:[%s383 + $0x30] sm:$0xff] %v396
                %v398 = vld [vmem:[%s382 + $0x38] sm:$0xff]
                %399 = vst [vmem:[%s383 + $0x38] sm:$0xff] %v398
                %v400 = vld [vmem:[%s382 + $0x40] sm:$0xff]
                %401 = vst [vmem:[%s383 + $0x40] sm:$0xff] %v400
                %v402 = vld [vmem:[%s382 + $0x48] sm:$0xff]
                %403 = vst [vmem:[%s383 + $0x48] sm:$0xff] %v402
                %v404 = vld [vmem:[%s382 + $0x50] sm:$0xff]
                %405 = vst [vmem:[%s383 + $0x50] sm:$0xff] %v404
                %v406 = vld [vmem:[%s382 + $0x58] sm:$0xff]
                %407 = vst [vmem:[%s383 + $0x58] sm:$0xff] %v406
                %v408 = vld [vmem:[%s382 + $0x60] sm:$0xff]
                %409 = vst [vmem:[%s383 + $0x60] sm:$0xff] %v408
                %v410 = vld [vmem:[%s382 + $0x68] sm:$0xff]
                %411 = vst [vmem:[%s383 + $0x68] sm:$0xff] %v410
                %v412 = vld [vmem:[%s382 + $0x70] sm:$0xff]
                %413 = vst [vmem:[%s383 + $0x70] sm:$0xff] %v412
                %v414 = vld [vmem:[%s382 + $0x78] sm:$0xff]
                %415 = vst [vmem:[%s383 + $0x78] sm:$0xff] %v414
                %v416 = vld [vmem:[%s382 + $0x80] sm:$0xff]
                %417 = vst [vmem:[%s383 + $0x80] sm:$0xff] %v416
                %v418 = vld [vmem:[%s382 + $0x88] sm:$0xff]
                %419 = vst [vmem:[%s383 + $0x88] sm:$0xff] %v418
                %v420 = vld [vmem:[%s382 + $0x90] sm:$0xff]
                %421 = vst [vmem:[%s383 + $0x90] sm:$0xff] %v420
                %v422 = vld [vmem:[%s382 + $0x98] sm:$0xff]
                %423 = vst [vmem:[%s383 + $0x98] sm:$0xff] %v422
                %v424 = vld [vmem:[%s382 + $0xa0] sm:$0xff]
                %425 = vst [vmem:[%s383 + $0xa0] sm:$0xff] %v424
                %v426 = vld [vmem:[%s382 + $0xa8] sm:$0xff]
                %427 = vst [vmem:[%s383 + $0xa8] sm:$0xff] %v426
                %v428 = vld [vmem:[%s382 + $0xb0] sm:$0xff]
                %429 = vst [vmem:[%s383 + $0xb0] sm:$0xff] %v428
                %v430 = vld [vmem:[%s382 + $0xb8] sm:$0xff]
                %431 = vst [vmem:[%s383 + $0xb8] sm:$0xff] %v430
                %v432 = vld [vmem:[%s382 + $0xc0] sm:$0xff]
                %433 = vst [vmem:[%s383 + $0xc0] sm:$0xff] %v432
                %v434 = vld [vmem:[%s382 + $0xc8] sm:$0xff]
                %435 = vst [vmem:[%s383 + $0xc8] sm:$0xff] %v434
                %v436 = vld [vmem:[%s382 + $0xd0] sm:$0xff]
                %437 = vst [vmem:[%s383 + $0xd0] sm:$0xff] %v436
                %v438 = vld [vmem:[%s382 + $0xd8] sm:$0xff]
                %439 = vst [vmem:[%s383 + $0xd8] sm:$0xff] %v438
                %v440 = vld [vmem:[%s382 + $0xe0] sm:$0xff]
                %441 = vst [vmem:[%s383 + $0xe0] sm:$0xff] %v440
                %v442 = vld [vmem:[%s382 + $0xe8] sm:$0xff]
                %443 = vst [vmem:[%s383 + $0xe8] sm:$0xff] %v442
                %v444 = vld [vmem:[%s382 + $0xf0] sm:$0xff]
                %445 = vst [vmem:[%s383 + $0xf0] sm:$0xff] %v444
                %v446 = vld [vmem:[%s382 + $0xf8] sm:$0xff]
                %447 = vst [vmem:[%s383 + $0xf8] sm:$0xff] %v446
                %v448 = vld [vmem:[%s382 + $0x100] sm:$0xff]
                %449 = vst [vmem:[%s383 + $0x100] sm:$0xff] %v448
                %v450 = vld [vmem:[%s382 + $0x108] sm:$0xff]
                %451 = vst [vmem:[%s383 + $0x108] sm:$0xff] %v450
                %v452 = vld [vmem:[%s382 + $0x110] sm:$0xff]
                %453 = vst [vmem:[%s383 + $0x110] sm:$0xff] %v452
                %v454 = vld [vmem:[%s382 + $0x118] sm:$0xff]
                %455 = vst [vmem:[%s383 + $0x118] sm:$0xff] %v454
                %v456 = vld [vmem:[%s382 + $0x120] sm:$0xff]
                %457 = vst [vmem:[%s383 + $0x120] sm:$0xff] %v456
                %v458 = vld [vmem:[%s382 + $0x128] sm:$0xff]
                %459 = vst [vmem:[%s383 + $0x128] sm:$0xff] %v458
                %v460 = vld [vmem:[%s382 + $0x130] sm:$0xff]
                %461 = vst [vmem:[%s383 + $0x130] sm:$0xff] %v460
                %v462 = vld [vmem:[%s382 + $0x138] sm:$0xff]
                %463 = vst [vmem:[%s383 + $0x138] sm:$0xff] %v462
                %v464 = vld [vmem:[%s382 + $0x140] sm:$0xff]
                %465 = vst [vmem:[%s383 + $0x140] sm:$0xff] %v464
                %v466 = vld [vmem:[%s382 + $0x148] sm:$0xff]
                %467 = vst [vmem:[%s383 + $0x148] sm:$0xff] %v466
                %v468 = vld [vmem:[%s382 + $0x150] sm:$0xff]
                %469 = vst [vmem:[%s383 + $0x150] sm:$0xff] %v468
                %v470 = vld [vmem:[%s382 + $0x158] sm:$0xff]
                %471 = vst [vmem:[%s383 + $0x158] sm:$0xff] %v470
                %v472 = vld [vmem:[%s382 + $0x160] sm:$0xff]
                %473 = vst [vmem:[%s383 + $0x160] sm:$0xff] %v472
                %v474 = vld [vmem:[%s382 + $0x168] sm:$0xff]
                %475 = vst [vmem:[%s383 + $0x168] sm:$0xff] %v474
                %v476 = vld [vmem:[%s382 + $0x170] sm:$0xff]
                %477 = vst [vmem:[%s383 + $0x170] sm:$0xff] %v476
                %v478 = vld [vmem:[%s382 + $0x178] sm:$0xff]
                %479 = vst [vmem:[%s383 + $0x178] sm:$0xff] %v478
                %v480 = vld [vmem:[%s382 + $0x180] sm:$0xff]
                %481 = vst [vmem:[%s383 + $0x180] sm:$0xff] %v480
                %v482 = vld [vmem:[%s382 + $0x188] sm:$0xff]
                %483 = vst [vmem:[%s383 + $0x188] sm:$0xff] %v482
                %v484 = vld [vmem:[%s382 + $0x190] sm:$0xff]
                %485 = vst [vmem:[%s383 + $0x190] sm:$0xff] %v484
                %v486 = vld [vmem:[%s382 + $0x198] sm:$0xff]
                %487 = vst [vmem:[%s383 + $0x198] sm:$0xff] %v486
                %v488 = vld [vmem:[%s382 + $0x1a0] sm:$0xff]
                %489 = vst [vmem:[%s383 + $0x1a0] sm:$0xff] %v488
                %v490 = vld [vmem:[%s382 + $0x1a8] sm:$0xff]
                %491 = vst [vmem:[%s383 + $0x1a8] sm:$0xff] %v490
                %v492 = vld [vmem:[%s382 + $0x1b0] sm:$0xff]
                %493 = vst [vmem:[%s383 + $0x1b0] sm:$0xff] %v492
                %v494 = vld [vmem:[%s382 + $0x1b8] sm:$0xff]
                %495 = vst [vmem:[%s383 + $0x1b8] sm:$0xff] %v494
                %v496 = vld [vmem:[%s382 + $0x1c0] sm:$0xff]
                %497 = vst [vmem:[%s383 + $0x1c0] sm:$0xff] %v496
                %v498 = vld [vmem:[%s382 + $0x1c8] sm:$0xff]
                %499 = vst [vmem:[%s383 + $0x1c8] sm:$0xff] %v498
                %v500 = vld [vmem:[%s382 + $0x1d0] sm:$0xff]
                %501 = vst [vmem:[%s383 + $0x1d0] sm:$0xff] %v500
                %v502 = vld [vmem:[%s382 + $0x1d8] sm:$0xff]
                %503 = vst [vmem:[%s383 + $0x1d8] sm:$0xff] %v502
                %v504 = vld [vmem:[%s382 + $0x1e0] sm:$0xff]
                %505 = vst [vmem:[%s383 + $0x1e0] sm:$0xff] %v504
                %v506 = vld [vmem:[%s382 + $0x1e8] sm:$0xff]
                %507 = vst [vmem:[%s383 + $0x1e8] sm:$0xff] %v506
                %v508 = vld [vmem:[%s382 + $0x1f0] sm:$0xff]
                %509 = vst [vmem:[%s383 + $0x1f0] sm:$0xff] %v508
                %v510 = vld [vmem:[%s382 + $0x1f8] sm:$0xff]
                %511 = vst [vmem:[%s383 + $0x1f8] sm:$0xff] %v510
                %v512 = vld [vmem:[%s382 + $0x200] sm:$0xff]
                %513 = vst [vmem:[%s383 + $0x200] sm:$0xff] %v512
                %v514 = vld [vmem:[%s382 + $0x208] sm:$0xff]
                %515 = vst [vmem:[%s383 + $0x208] sm:$0xff] %v514
                %v516 = vld [vmem:[%s382 + $0x210] sm:$0xff]
                %517 = vst [vmem:[%s383 + $0x210] sm:$0xff] %v516
                %v518 = vld [vmem:[%s382 + $0x218] sm:$0xff]
                %519 = vst [vmem:[%s383 + $0x218] sm:$0xff] %v518
                %v520 = vld [vmem:[%s382 + $0x220] sm:$0xff]
                %521 = vst [vmem:[%s383 + $0x220] sm:$0xff] %v520
                %v522 = vld [vmem:[%s382 + $0x228] sm:$0xff]
                %523 = vst [vmem:[%s383 + $0x228] sm:$0xff] %v522
                %v524 = vld [vmem:[%s382 + $0x230] sm:$0xff]
                %525 = vst [vmem:[%s383 + $0x230] sm:$0xff] %v524
                %v526 = vld [vmem:[%s382 + $0x238] sm:$0xff]
                %527 = vst [vmem:[%s383 + $0x238] sm:$0xff] %v526
                %v528 = vld [vmem:[%s382 + $0x240] sm:$0xff]
                %529 = vst [vmem:[%s383 + $0x240] sm:$0xff] %v528
                %v530 = vld [vmem:[%s382 + $0x248] sm:$0xff]
                %531 = vst [vmem:[%s383 + $0x248] sm:$0xff] %v530
                %v532 = vld [vmem:[%s382 + $0x250] sm:$0xff]
                %533 = vst [vmem:[%s383 + $0x250] sm:$0xff] %v532
                %v534 = vld [vmem:[%s382 + $0x258] sm:$0xff]
                %535 = vst [vmem:[%s383 + $0x258] sm:$0xff] %v534
                %v536 = vld [vmem:[%s382 + $0x260] sm:$0xff]
                %537 = vst [vmem:[%s383 + $0x260] sm:$0xff] %v536
                %v538 = vld [vmem:[%s382 + $0x268] sm:$0xff]
                %539 = vst [vmem:[%s383 + $0x268] sm:$0xff] %v538
                %v540 = vld [vmem:[%s382 + $0x270] sm:$0xff]
                %541 = vst [vmem:[%s383 + $0x270] sm:$0xff] %v540
                %v542 = vld [vmem:[%s382 + $0x278] sm:$0xff]
                %543 = vst [vmem:[%s383 + $0x278] sm:$0xff] %v542
                %v544 = vld [vmem:[%s382 + $0x280] sm:$0xff]
                %545 = vst [vmem:[%s383 + $0x280] sm:$0xff] %v544
                %v546 = vld [vmem:[%s382 + $0x288] sm:$0xff]
                %547 = vst [vmem:[%s383 + $0x288] sm:$0xff] %v546
                %v548 = vld [vmem:[%s382 + $0x290] sm:$0xff]
                %549 = vst [vmem:[%s383 + $0x290] sm:$0xff] %v548
                %v550 = vld [vmem:[%s382 + $0x298] sm:$0xff]
                %551 = vst [vmem:[%s383 + $0x298] sm:$0xff] %v550
                %v552 = vld [vmem:[%s382 + $0x2a0] sm:$0xff]
                %553 = vst [vmem:[%s383 + $0x2a0] sm:$0xff] %v552
                %v554 = vld [vmem:[%s382 + $0x2a8] sm:$0xff]
                %555 = vst [vmem:[%s383 + $0x2a8] sm:$0xff] %v554
                %v556 = vld [vmem:[%s382 + $0x2b0] sm:$0xff]
                %557 = vst [vmem:[%s383 + $0x2b0] sm:$0xff] %v556
                %v558 = vld [vmem:[%s382 + $0x2b8] sm:$0xff]
                %559 = vst [vmem:[%s383 + $0x2b8] sm:$0xff] %v558
                %v560 = vld [vmem:[%s382 + $0x2c0] sm:$0xff]
                %561 = vst [vmem:[%s383 + $0x2c0] sm:$0xff] %v560
                %v562 = vld [vmem:[%s382 + $0x2c8] sm:$0xff]
                %563 = vst [vmem:[%s383 + $0x2c8] sm:$0xff] %v562
                %v564 = vld [vmem:[%s382 + $0x2d0] sm:$0xff]
                %565 = vst [vmem:[%s383 + $0x2d0] sm:$0xff] %v564
                %v566 = vld [vmem:[%s382 + $0x2d8] sm:$0xff]
                %567 = vst [vmem:[%s383 + $0x2d8] sm:$0xff] %v566
                %v568 = vld [vmem:[%s382 + $0x2e0] sm:$0xff]
                %569 = vst [vmem:[%s383 + $0x2e0] sm:$0xff] %v568
                %v570 = vld [vmem:[%s382 + $0x2e8] sm:$0xff]
                %571 = vst [vmem:[%s383 + $0x2e8] sm:$0xff] %v570
                %v572 = vld [vmem:[%s382 + $0x2f0] sm:$0xff]
                %573 = vst [vmem:[%s383 + $0x2f0] sm:$0xff] %v572
                %v574 = vld [vmem:[%s382 + $0x2f8] sm:$0xff]
                %575 = vst [vmem:[%s383 + $0x2f8] sm:$0xff] %v574
                %v576 = vld [vmem:[%s382 + $0x300] sm:$0xff]
                %577 = vst [vmem:[%s383 + $0x300] sm:$0xff] %v576
                %v578 = vld [vmem:[%s382 + $0x308] sm:$0xff]
                %579 = vst [vmem:[%s383 + $0x308] sm:$0xff] %v578
                %v580 = vld [vmem:[%s382 + $0x310] sm:$0xff]
                %581 = vst [vmem:[%s383 + $0x310] sm:$0xff] %v580
                %v582 = vld [vmem:[%s382 + $0x318] sm:$0xff]
                %583 = vst [vmem:[%s383 + $0x318] sm:$0xff] %v582
                %v584 = vld [vmem:[%s382 + $0x320] sm:$0xff]
                %585 = vst [vmem:[%s383 + $0x320] sm:$0xff] %v584
                %v586 = vld [vmem:[%s382 + $0x328] sm:$0xff]
                %587 = vst [vmem:[%s383 + $0x328] sm:$0xff] %v586
                %v588 = vld [vmem:[%s382 + $0x330] sm:$0xff]
                %589 = vst [vmem:[%s383 + $0x330] sm:$0xff] %v588
                %v590 = vld [vmem:[%s382 + $0x338] sm:$0xff]
                %591 = vst [vmem:[%s383 + $0x338] sm:$0xff] %v590
                %v592 = vld [vmem:[%s382 + $0x340] sm:$0xff]
                %593 = vst [vmem:[%s383 + $0x340] sm:$0xff] %v592
                %v594 = vld [vmem:[%s382 + $0x348] sm:$0xff]
                %595 = vst [vmem:[%s383 + $0x348] sm:$0xff] %v594
                %v596 = vld [vmem:[%s382 + $0x350] sm:$0xff]
                %597 = vst [vmem:[%s383 + $0x350] sm:$0xff] %v596
                %v598 = vld [vmem:[%s382 + $0x358] sm:$0xff]
                %599 = vst [vmem:[%s383 + $0x358] sm:$0xff] %v598
                %v600 = vld [vmem:[%s382 + $0x360] sm:$0xff]
                %601 = vst [vmem:[%s383 + $0x360] sm:$0xff] %v600
                %v602 = vld [vmem:[%s382 + $0x368] sm:$0xff]
                %603 = vst [vmem:[%s383 + $0x368] sm:$0xff] %v602
                %v604 = vld [vmem:[%s382 + $0x370] sm:$0xff]
                %605 = vst [vmem:[%s383 + $0x370] sm:$0xff] %v604
                %v606 = vld [vmem:[%s382 + $0x378] sm:$0xff]
                %607 = vst [vmem:[%s383 + $0x378] sm:$0xff] %v606
                %v608 = vld [vmem:[%s382 + $0x380] sm:$0xff]
                %609 = vst [vmem:[%s383 + $0x380] sm:$0xff] %v608
                %v610 = vld [vmem:[%s382 + $0x388] sm:$0xff]
                %611 = vst [vmem:[%s383 + $0x388] sm:$0xff] %v610
                %v612 = vld [vmem:[%s382 + $0x390] sm:$0xff]
                %613 = vst [vmem:[%s383 + $0x390] sm:$0xff] %v612
                %v614 = vld [vmem:[%s382 + $0x398] sm:$0xff]
                %615 = vst [vmem:[%s383 + $0x398] sm:$0xff] %v614
                %v616 = vld [vmem:[%s382 + $0x3a0] sm:$0xff]
                %617 = vst [vmem:[%s383 + $0x3a0] sm:$0xff] %v616
                %v618 = vld [vmem:[%s382 + $0x3a8] sm:$0xff]
                %619 = vst [vmem:[%s383 + $0x3a8] sm:$0xff] %v618
                %v620 = vld [vmem:[%s382 + $0x3b0] sm:$0xff]
                %621 = vst [vmem:[%s383 + $0x3b0] sm:$0xff] %v620
                %v622 = vld [vmem:[%s382 + $0x3b8] sm:$0xff]
                %623 = vst [vmem:[%s383 + $0x3b8] sm:$0xff] %v622
                %v624 = vld [vmem:[%s382 + $0x3c0] sm:$0xff]
                %625 = vst [vmem:[%s383 + $0x3c0] sm:$0xff] %v624
                %v626 = vld [vmem:[%s382 + $0x3c8] sm:$0xff]
                %627 = vst [vmem:[%s383 + $0x3c8] sm:$0xff] %v626
                %v628 = vld [vmem:[%s382 + $0x3d0] sm:$0xff]
                %629 = vst [vmem:[%s383 + $0x3d0] sm:$0xff] %v628
                %v630 = vld [vmem:[%s382 + $0x3d8] sm:$0xff]
                %631 = vst [vmem:[%s383 + $0x3d8] sm:$0xff] %v630
                %v632 = vld [vmem:[%s382 + $0x3e0] sm:$0xff]
                %633 = vst [vmem:[%s383 + $0x3e0] sm:$0xff] %v632
                %v634 = vld [vmem:[%s382 + $0x3e8] sm:$0xff]
                %635 = vst [vmem:[%s383 + $0x3e8] sm:$0xff] %v634
                %v636 = vld [vmem:[%s382 + $0x3f0] sm:$0xff]
                %637 = vst [vmem:[%s383 + $0x3f0] sm:$0xff] %v636
                %v638 = vld [vmem:[%s382 + $0x3f8] sm:$0xff]
                %639 = vst [vmem:[%s383 + $0x3f8] sm:$0xff] %v638
              $region106: #{lstm_forward.2} parent=100 // loop_footer
                %s381 = sadd.s32 1, %s377
              $region107: #{lstm_forward.2} parent=100 // loop_footer_branch
                %376 = sbr.rel target = $region103
              $region108: #{lstm_forward.2} parent=100 // loop_exit
                _
            $region101: #{lstm_forward.2} parent=85 // pred_fallthru
              _
            %p640 = pneg %p372
            // Predicated region
            $region109: #{lstm_forward.2} parent=85 // pred_check
              _
            $region110: #{lstm_forward.2} parent=85 // pred_check_branch
              %642 = sbr.rel (%p372) target = $region112
            $region111: #{lstm_forward.2} parent=85 // pred_region
              %s643 = sand.u32 1024, 7
            $region112: #{lstm_forward.2} parent=85 // pred_fallthru
              _
          $region86: #{lstm_forward.2} parent=81 // pred_fallthru
            _
          // Predicated region
          $region87: #{lstm_forward.2} parent=81 // pred_check
            %p357 = pneg %p353
          $region88: #{lstm_forward.2} parent=81 // pred_check_branch
            %359 = sbr.rel (%p357) target = $region90
          $region89: #{lstm_forward.2} parent=81 // pred_region
            %s360 = sshllo.u32 0, 1024
            loop: start=0, step=1, limit=1
            $region91: #{lstm_forward.2} parent=89 // loop_pre_header
              _
            $region92: #{lstm_forward.2} parent=89 // loop_header
              %s362 = sphi 0, %s366
              %p363 = scmp.ge.s32.totalorder %s362, 1
              %s367 = sphi %s3, %s3
              %s368 = sphi [#allocation2], [#allocation2]
            $region93: #{lstm_forward.2} parent=89 // loop_header_branch
              %365 = sbr.rel (%p363) target = $region97
            $region94: #{lstm_forward.2} parent=89 // loop_body
              %v369 = vld [vmem:[%s367] sm:%s360]
              %370 = vst [vmem:[%s368] sm:%s360] %v369
            $region95: #{lstm_forward.2} parent=89 // loop_footer
              %s366 = sadd.s32 1, %s362
            $region96: #{lstm_forward.2} parent=89 // loop_footer_branch
              %361 = sbr.rel target = $region92
            $region97: #{lstm_forward.2} parent=89 // loop_exit
              _
          $region90: #{lstm_forward.2} parent=81 // pred_fallthru
            _
          // Predicated region
          $region113: #{lstm_forward.2} parent=81 // pred_check
            _
          $region114: #{lstm_forward.2} parent=81 // pred_check_branch
            %646 = sbr.rel (0) target = $region116
          $region115: #{lstm_forward.2} parent=81 // pred_region
            %647 = vsyncadd [#allocation7], 16384
          $region116: #{lstm_forward.2} parent=81 // pred_fallthru
            _
          %648 = vst [vmem:[#allocation3] sm:$0xff] 0.0
          %649 = vst [vmem:[#allocation4] sm:$0xff] 0.0
          %650 = vst [vmem:[#allocation5] sm:$0xff] 0.0
          %651 = vst [vmem:[#allocation6] sm:$0xff] 0.0
          %s652 = smul.u32 8, 2
          %s653 = smul.u32 %s652, 16
          %s654 = smul.u32 %s653, 4
          %s655 = sshll.u32 %s654, 4
          %656 = dma.done [#allocation7], %s655
        $region82: #{lstm_forward.2} parent=69 // pred_fallthru
          _
        %v657 = vld [vmem:[%s2] sm:$0xff]
        %s658 = smul.u32 %s17, 4
        %s659 = ssub.s32 1, %s17
        %s660 = smul.u32 %s659, 4
        %v661 = vlaneseq
        %v662 = vand.u32 %v661, 127
        %v663 = vstv %s658
        %v664 = vadd.s32 %v663, %v662
        %665 = vset.pattern.permute.xlu0 0
        %666 = vperm.xlu0 %665, %v657
        %v667 = vpop.permute.xlu0 %666
        %vm668 = vcmp.lt.s32.totalorder %v664, %v667
        %v669 = vstv %s660
        %v670 = vadd.s32 %v669, %v662
        %vm671 = vcmp.lt.s32.totalorder %v670, %v667
        %v672 = vld [vmem:[#allocation2] sm:$0xff]
        %v673 = vld [vmem:[#allocation2 + $0x8] sm:$0xff]
        %v674 = vld [vmem:[#allocation2 + $0x10] sm:$0xff]
        %v675 = vld [vmem:[#allocation2 + $0x18] sm:$0xff]
        %v676 = vld [vmem:[#allocation2 + $0x20] sm:$0xff]
        %v677 = vld [vmem:[#allocation2 + $0x28] sm:$0xff]
        %v678 = vld [vmem:[#allocation2 + $0x30] sm:$0xff]
        %v679 = vld [vmem:[#allocation2 + $0x38] sm:$0xff]
        %v680 = vld [vmem:[#allocation2 + $0x40] sm:$0xff]
        %v681 = vld [vmem:[#allocation2 + $0x48] sm:$0xff]
        %v682 = vld [vmem:[#allocation2 + $0x50] sm:$0xff]
        %v683 = vld [vmem:[#allocation2 + $0x58] sm:$0xff]
        %v684 = vld [vmem:[#allocation2 + $0x60] sm:$0xff]
        %v685 = vld [vmem:[#allocation2 + $0x68] sm:$0xff]
        %v686 = vld [vmem:[#allocation2 + $0x70] sm:$0xff]
        %v687 = vld [vmem:[#allocation2 + $0x78] sm:$0xff]
        %v688 = vld [vmem:[#allocation2 + $0x80] sm:$0xff]
        %v689 = vld [vmem:[#allocation2 + $0x88] sm:$0xff]
        %v690 = vld [vmem:[#allocation2 + $0x90] sm:$0xff]
        %v691 = vld [vmem:[#allocation2 + $0x98] sm:$0xff]
        %v692 = vld [vmem:[#allocation2 + $0xa0] sm:$0xff]
        %v693 = vld [vmem:[#allocation2 + $0xa8] sm:$0xff]
        %v694 = vld [vmem:[#allocation2 + $0xb0] sm:$0xff]
        %v695 = vld [vmem:[#allocation2 + $0xb8] sm:$0xff]
        %v696 = vld [vmem:[#allocation2 + $0xc0] sm:$0xff]
        %v697 = vld [vmem:[#allocation2 + $0xc8] sm:$0xff]
        %v698 = vld [vmem:[#allocation2 + $0xd0] sm:$0xff]
        %v699 = vld [vmem:[#allocation2 + $0xd8] sm:$0xff]
        %v700 = vld [vmem:[#allocation2 + $0xe0] sm:$0xff]
        %v701 = vld [vmem:[#allocation2 + $0xe8] sm:$0xff]
        %v702 = vld [vmem:[#allocation2 + $0xf0] sm:$0xff]
        %v703 = vld [vmem:[#allocation2 + $0xf8] sm:$0xff]
        %v704 = vld [vmem:[#allocation2 + $0x100] sm:$0xff]
        %v705 = vld [vmem:[#allocation2 + $0x108] sm:$0xff]
        %v706 = vld [vmem:[#allocation2 + $0x110] sm:$0xff]
        %v707 = vld [vmem:[#allocation2 + $0x118] sm:$0xff]
        %v708 = vld [vmem:[#allocation2 + $0x120] sm:$0xff]
        %v709 = vld [vmem:[#allocation2 + $0x128] sm:$0xff]
        %v710 = vld [vmem:[#allocation2 + $0x130] sm:$0xff]
        %v711 = vld [vmem:[#allocation2 + $0x138] sm:$0xff]
        %v712 = vld [vmem:[#allocation2 + $0x140] sm:$0xff]
        %v713 = vld [vmem:[#allocation2 + $0x148] sm:$0xff]
        %v714 = vld [vmem:[#allocation2 + $0x150] sm:$0xff]
        %v715 = vld [vmem:[#allocation2 + $0x158] sm:$0xff]
        %v716 = vld [vmem:[#allocation2 + $0x160] sm:$0xff]
        %v717 = vld [vmem:[#allocation2 + $0x168] sm:$0xff]
        %v718 = vld [vmem:[#allocation2 + $0x170] sm:$0xff]
        %v719 = vld [vmem:[#allocation2 + $0x178] sm:$0xff]
        %v720 = vld [vmem:[#allocation2 + $0x180] sm:$0xff]
        %v721 = vld [vmem:[#allocation2 + $0x188] sm:$0xff]
        %v722 = vld [vmem:[#allocation2 + $0x190] sm:$0xff]
        %v723 = vld [vmem:[#allocation2 + $0x198] sm:$0xff]
        %v724 = vld [vmem:[#allocation2 + $0x1a0] sm:$0xff]
        %v725 = vld [vmem:[#allocation2 + $0x1a8] sm:$0xff]
        %v726 = vld [vmem:[#allocation2 + $0x1b0] sm:$0xff]
        %v727 = vld [vmem:[#allocation2 + $0x1b8] sm:$0xff]
        %v728 = vld [vmem:[#allocation2 + $0x1c0] sm:$0xff]
        %v729 = vld [vmem:[#allocation2 + $0x1c8] sm:$0xff]
        %v730 = vld [vmem:[#allocation2 + $0x1d0] sm:$0xff]
        %v731 = vld [vmem:[#allocation2 + $0x1d8] sm:$0xff]
        %v732 = vld [vmem:[#allocation2 + $0x1e0] sm:$0xff]
        %v733 = vld [vmem:[#allocation2 + $0x1e8] sm:$0xff]
        %v734 = vld [vmem:[#allocation2 + $0x1f0] sm:$0xff]
        %v735 = vld [vmem:[#allocation2 + $0x1f8] sm:$0xff]
        %s736 = scalar_lea.vmem [#allocation2], 512
        %v737 = vld [vmem:[%s736] sm:$0xff]
        %v738 = vld [vmem:[%s736 + $0x8] sm:$0xff]
        %v739 = vld [vmem:[%s736 + $0x10] sm:$0xff]
        %v740 = vld [vmem:[%s736 + $0x18] sm:$0xff]
        %v741 = vld [vmem:[%s736 + $0x20] sm:$0xff]
        %v742 = vld [vmem:[%s736 + $0x28] sm:$0xff]
        %v743 = vld [vmem:[%s736 + $0x30] sm:$0xff]
        %v744 = vld [vmem:[%s736 + $0x38] sm:$0xff]
        %v745 = vld [vmem:[%s736 + $0x40] sm:$0xff]
        %v746 = vld [vmem:[%s736 + $0x48] sm:$0xff]
        %v747 = vld [vmem:[%s736 + $0x50] sm:$0xff]
        %v748 = vld [vmem:[%s736 + $0x58] sm:$0xff]
        %v749 = vld [vmem:[%s736 + $0x60] sm:$0xff]
        %v750 = vld [vmem:[%s736 + $0x68] sm:$0xff]
        %v751 = vld [vmem:[%s736 + $0x70] sm:$0xff]
        %v752 = vld [vmem:[%s736 + $0x78] sm:$0xff]
        %v753 = vld [vmem:[%s736 + $0x80] sm:$0xff]
        %v754 = vld [vmem:[%s736 + $0x88] sm:$0xff]
        %v755 = vld [vmem:[%s736 + $0x90] sm:$0xff]
        %v756 = vld [vmem:[%s736 + $0x98] sm:$0xff]
        %v757 = vld [vmem:[%s736 + $0xa0] sm:$0xff]
        %v758 = vld [vmem:[%s736 + $0xa8] sm:$0xff]
        %v759 = vld [vmem:[%s736 + $0xb0] sm:$0xff]
        %v760 = vld [vmem:[%s736 + $0xb8] sm:$0xff]
        %v761 = vld [vmem:[%s736 + $0xc0] sm:$0xff]
        %v762 = vld [vmem:[%s736 + $0xc8] sm:$0xff]
        %v763 = vld [vmem:[%s736 + $0xd0] sm:$0xff]
        %v764 = vld [vmem:[%s736 + $0xd8] sm:$0xff]
        %v765 = vld [vmem:[%s736 + $0xe0] sm:$0xff]
        %v766 = vld [vmem:[%s736 + $0xe8] sm:$0xff]
        %v767 = vld [vmem:[%s736 + $0xf0] sm:$0xff]
        %v768 = vld [vmem:[%s736 + $0xf8] sm:$0xff]
        %v769 = vld [vmem:[%s736 + $0x100] sm:$0xff]
        %v770 = vld [vmem:[%s736 + $0x108] sm:$0xff]
        %v771 = vld [vmem:[%s736 + $0x110] sm:$0xff]
        %v772 = vld [vmem:[%s736 + $0x118] sm:$0xff]
        %v773 = vld [vmem:[%s736 + $0x120] sm:$0xff]
        %v774 = vld [vmem:[%s736 + $0x128] sm:$0xff]
        %v775 = vld [vmem:[%s736 + $0x130] sm:$0xff]
        %v776 = vld [vmem:[%s736 + $0x138] sm:$0xff]
        %v777 = vld [vmem:[%s736 + $0x140] sm:$0xff]
        %v778 = vld [vmem:[%s736 + $0x148] sm:$0xff]
        %v779 = vld [vmem:[%s736 + $0x150] sm:$0xff]
        %v780 = vld [vmem:[%s736 + $0x158] sm:$0xff]
        %v781 = vld [vmem:[%s736 + $0x160] sm:$0xff]
        %v782 = vld [vmem:[%s736 + $0x168] sm:$0xff]
        %v783 = vld [vmem:[%s736 + $0x170] sm:$0xff]
        %v784 = vld [vmem:[%s736 + $0x178] sm:$0xff]
        %v785 = vld [vmem:[%s736 + $0x180] sm:$0xff]
        %v786 = vld [vmem:[%s736 + $0x188] sm:$0xff]
        %v787 = vld [vmem:[%s736 + $0x190] sm:$0xff]
        %v788 = vld [vmem:[%s736 + $0x198] sm:$0xff]
        %v789 = vld [vmem:[%s736 + $0x1a0] sm:$0xff]
        %v790 = vld [vmem:[%s736 + $0x1a8] sm:$0xff]
        %v791 = vld [vmem:[%s736 + $0x1b0] sm:$0xff]
        %v792 = vld [vmem:[%s736 + $0x1b8] sm:$0xff]
        %v793 = vld [vmem:[%s736 + $0x1c0] sm:$0xff]
        %v794 = vld [vmem:[%s736 + $0x1c8] sm:$0xff]
        %v795 = vld [vmem:[%s736 + $0x1d0] sm:$0xff]
        %v796 = vld [vmem:[%s736 + $0x1d8] sm:$0xff]
        %v797 = vld [vmem:[%s736 + $0x1e0] sm:$0xff]
        %v798 = vld [vmem:[%s736 + $0x1e8] sm:$0xff]
        %v799 = vld [vmem:[%s736 + $0x1f0] sm:$0xff]
        %v800 = vld [vmem:[%s736 + $0x1f8] sm:$0xff]
        %v801 = vld [vmem:[#allocation3] sm:$0xff]
        %v802 = vld [vmem:[#allocation4] sm:$0xff]
        %v803 = vld [vmem:[#allocation5] sm:$0xff]
        %v804 = vld [vmem:[#allocation6] sm:$0xff]
        %v805 = vld [vmem:[%s291] sm:$0xff]
        %v806 = vld [vmem:[%s291 + $0x8] sm:$0xff]
        %v807 = vld [vmem:[%s291 + $0x10] sm:$0xff]
        %v808 = vld [vmem:[%s291 + $0x18] sm:$0xff]
        %809 = vmatprep.subr.mxu0 %v673
        %810 = vmatpush1.msra.mxu0 %v672
        %811 = vmatprep.subr.mxu0 %v677
        %812 = vmatpush1.msra.mxu0 %v676
        %813 = vmatprep.subr.mxu0 %v681
        %814 = vmatpush1.msra.mxu0 %v680
        %815 = vmatprep.subr.mxu0 %v685
        %816 = vmatpush1.msra.mxu0 %v684
        %817 = vmatprep.subr.mxu0 %v689
        %818 = vmatpush1.msra.mxu0 %v688
        %819 = vmatprep.subr.mxu0 %v693
        %820 = vmatpush1.msra.mxu0 %v692
        %821 = vmatprep.subr.mxu0 %v697
        %822 = vmatpush1.msra.mxu0 %v696
        %823 = vmatprep.subr.mxu0 %v701
        %824 = vmatpush1.msra.mxu0 %v700
        %825 = vmatprep.subr.mxu0 %v705
        %826 = vmatpush1.msra.mxu0 %v704
        %827 = vmatprep.subr.mxu0 %v709
        %828 = vmatpush1.msra.mxu0 %v708
        %829 = vmatprep.subr.mxu0 %v713
        %830 = vmatpush1.msra.mxu0 %v712
        %831 = vmatprep.subr.mxu0 %v717
        %832 = vmatpush1.msra.mxu0 %v716
        %833 = vmatprep.subr.mxu0 %v721
        %834 = vmatpush1.msra.mxu0 %v720
        %835 = vmatprep.subr.mxu0 %v725
        %836 = vmatpush1.msra.mxu0 %v724
        %837 = vmatprep.subr.mxu0 %v729
        %838 = vmatpush1.msra.mxu0 %v728
        %839 = vmatprep.subr.mxu0 %v733
        %840 = vmatpush1.msra.mxu0 %v732
        %841 = vmatprep.subr.mxu0 0.0
        %842 = vmatpush1.msra.mxu0 0.0
        %843 = vmatprep.subr.mxu0 0.0
        %844 = vmatpush1.msra.mxu0 0.0
        %845 = vmatprep.subr.mxu0 0.0
        %846 = vmatpush1.msra.mxu0 0.0
        %847 = vmatprep.subr.mxu0 0.0
        %848 = vmatpush1.msra.mxu0 0.0
        %849 = vmatprep.subr.mxu0 0.0
        %850 = vmatpush1.msra.mxu0 0.0
        %851 = vmatprep.subr.mxu0 0.0
        %852 = vmatpush1.msra.mxu0 0.0
        %853 = vmatprep.subr.mxu0 0.0
        %854 = vmatpush1.msra.mxu0 0.0
        %855 = vmatprep.subr.mxu0 0.0
        %856 = vmatpush1.msra.mxu0 0.0
        %857 = vmatprep.subr.mxu0 0.0
        %858 = vmatpush1.msra.mxu0 0.0
        %859 = vmatprep.subr.mxu0 0.0
        %860 = vmatpush1.msra.mxu0 0.0
        %861 = vmatprep.subr.mxu0 0.0
        %862 = vmatpush1.msra.mxu0 0.0
        %863 = vmatprep.subr.mxu0 0.0
        %864 = vmatpush1.msra.mxu0 0.0
        %865 = vmatprep.subr.mxu0 0.0
        %866 = vmatpush1.msra.mxu0 0.0
        %867 = vmatprep.subr.mxu0 0.0
        %868 = vmatpush1.msra.mxu0 0.0
        %869 = vmatprep.subr.mxu0 0.0
        %870 = vmatpush1.msra.mxu0 0.0
        %871 = vmatprep.subr.mxu0 0.0
        %872 = vmatpush1.msra.mxu0 0.0
        %873 = vmatprep.mubr.f32.mxu0 0.0
        %874 = vmatmul.mubr.f32.gmra.mrb[0].mxu0 %v801
        %v875 = vpop.f32.mrb[0].mxu0
        %v876 = vadd.f32 0.0, %v875
        %v877 = vpop.f32.mrb[0].mxu0
        %v878 = vadd.f32 0.0, %v877
        %879 = vdwg.mxu0
        %880 = vmatprep.subr.mxu0 %v675
        %881 = vmatpush1.msra.mxu0 %v674
        %882 = vmatprep.subr.mxu0 %v679
        %883 = vmatpush1.msra.mxu0 %v678
        %884 = vmatprep.subr.mxu0 %v683
        %885 = vmatpush1.msra.mxu0 %v682
        %886 = vmatprep.subr.mxu0 %v687
        %887 = vmatpush1.msra.mxu0 %v686
        %888 = vmatprep.subr.mxu0 %v691
        %889 = vmatpush1.msra.mxu0 %v690
        %890 = vmatprep.subr.mxu0 %v695
        %891 = vmatpush1.msra.mxu0 %v694
        %892 = vmatprep.subr.mxu0 %v699
        %893 = vmatpush1.msra.mxu0 %v698
        %894 = vmatprep.subr.mxu0 %v703
        %895 = vmatpush1.msra.mxu0 %v702
        %896 = vmatprep.subr.mxu0 %v707
        %897 = vmatpush1.msra.mxu0 %v706
        %898 = vmatprep.subr.mxu0 %v711
        %899 = vmatpush1.msra.mxu0 %v710
        %900 = vmatprep.subr.mxu0 %v715
        %901 = vmatpush1.msra.mxu0 %v714
        %902 = vmatprep.subr.mxu0 %v719
        %903 = vmatpush1.msra.mxu0 %v718
        %904 = vmatprep.subr.mxu0 %v723
        %905 = vmatpush1.msra.mxu0 %v722
        %906 = vmatprep.subr.mxu0 %v727
        %907 = vmatpush1.msra.mxu0 %v726
        %908 = vmatprep.subr.mxu0 %v731
        %909 = vmatpush1.msra.mxu0 %v730
        %910 = vmatprep.subr.mxu0 %v735
        %911 = vmatpush1.msra.mxu0 %v734
        %912 = vmatprep.subr.mxu0 0.0
        %913 = vmatpush1.msra.mxu0 0.0
        %914 = vmatprep.subr.mxu0 0.0
        %915 = vmatpush1.msra.mxu0 0.0
        %916 = vmatprep.subr.mxu0 0.0
        %917 = vmatpush1.msra.mxu0 0.0
        %918 = vmatprep.subr.mxu0 0.0
        %919 = vmatpush1.msra.mxu0 0.0
        %920 = vmatprep.subr.mxu0 0.0
        %921 = vmatpush1.msra.mxu0 0.0
        %922 = vmatprep.subr.mxu0 0.0
        %923 = vmatpush1.msra.mxu0 0.0
        %924 = vmatprep.subr.mxu0 0.0
        %925 = vmatpush1.msra.mxu0 0.0
        %926 = vmatprep.subr.mxu0 0.0
        %927 = vmatpush1.msra.mxu0 0.0
        %928 = vmatprep.subr.mxu0 0.0
        %929 = vmatpush1.msra.mxu0 0.0
        %930 = vmatprep.subr.mxu0 0.0
        %931 = vmatpush1.msra.mxu0 0.0
        %932 = vmatprep.subr.mxu0 0.0
        %933 = vmatpush1.msra.mxu0 0.0
        %934 = vmatprep.subr.mxu0 0.0
        %935 = vmatpush1.msra.mxu0 0.0
        %936 = vmatprep.subr.mxu0 0.0
        %937 = vmatpush1.msra.mxu0 0.0
        %938 = vmatprep.subr.mxu0 0.0
        %939 = vmatpush1.msra.mxu0 0.0
        %940 = vmatprep.subr.mxu0 0.0
        %941 = vmatpush1.msra.mxu0 0.0
        %942 = vmatprep.subr.mxu0 0.0
        %943 = vmatpush1.msra.mxu0 0.0
        %944 = vmatprep.mubr.f32.mxu0 0.0
        %945 = vmatmul.mubr.f32.gmra.mrb[0].mxu0 %v801
        %v946 = vpop.f32.mrb[0].mxu0
        %v947 = vadd.f32 0.0, %v946
        %v948 = vpop.f32.mrb[0].mxu0
        %v949 = vadd.f32 0.0, %v948
        %950 = vdwg.mxu0
        %v951 = vadd.f32 %v805, %v876
        %v952 = vadd.f32 %v806, %v878
        %v953 = vadd.f32 %v807, %v947
        %v954 = vadd.f32 %v808, %v949
        %s955 = scalar_lea.vmem %s298, 96 [#allocation9]
        %v956 = vld [vmem:[%s955] sm:$0xff]
        %v957 = vld [vmem:[%s955 + $0x8] sm:$0xff]
        %v958 = vld [vmem:[%s955 + $0x10] sm:$0xff]
        %v959 = vld [vmem:[%s955 + $0x18] sm:$0xff]
        %960 = vmatprep.subr.mxu0 %v738
        %961 = vmatpush1.msra.mxu0 %v737
        %962 = vmatprep.subr.mxu0 %v742
        %963 = vmatpush1.msra.mxu0 %v741
        %964 = vmatprep.subr.mxu0 %v746
        %965 = vmatpush1.msra.mxu0 %v745
        %966 = vmatprep.subr.mxu0 %v750
        %967 = vmatpush1.msra.mxu0 %v749
        %968 = vmatprep.subr.mxu0 %v754
        %969 = vmatpush1.msra.mxu0 %v753
        %970 = vmatprep.subr.mxu0 %v758
        %971 = vmatpush1.msra.mxu0 %v757
        %972 = vmatprep.subr.mxu0 %v762
        %973 = vmatpush1.msra.mxu0 %v761
        %974 = vmatprep.subr.mxu0 %v766
        %975 = vmatpush1.msra.mxu0 %v765
        %976 = vmatprep.subr.mxu0 %v770
        %977 = vmatpush1.msra.mxu0 %v769
        %978 = vmatprep.subr.mxu0 %v774
        %979 = vmatpush1.msra.mxu0 %v773
        %980 = vmatprep.subr.mxu0 %v778
        %981 = vmatpush1.msra.mxu0 %v777
        %982 = vmatprep.subr.mxu0 %v782
        %983 = vmatpush1.msra.mxu0 %v781
        %984 = vmatprep.subr.mxu0 %v786
        %985 = vmatpush1.msra.mxu0 %v785
        %986 = vmatprep.subr.mxu0 %v790
        %987 = vmatpush1.msra.mxu0 %v789
        %988 = vmatprep.subr.mxu0 %v794
        %989 = vmatpush1.msra.mxu0 %v793
        %990 = vmatprep.subr.mxu0 %v798
        %991 = vmatpush1.msra.mxu0 %v797
        %992 = vmatprep.subr.mxu0 0.0
        %993 = vmatpush1.msra.mxu0 0.0
        %994 = vmatprep.subr.mxu0 0.0
        %995 = vmatpush1.msra.mxu0 0.0
        %996 = vmatprep.subr.mxu0 0.0
        %997 = vmatpush1.msra.mxu0 0.0
        %998 = vmatprep.subr.mxu0 0.0
        %999 = vmatpush1.msra.mxu0 0.0
        %1000 = vmatprep.subr.mxu0 0.0
        %1001 = vmatpush1.msra.mxu0 0.0
        %1002 = vmatprep.subr.mxu0 0.0
        %1003 = vmatpush1.msra.mxu0 0.0
        %1004 = vmatprep.subr.mxu0 0.0
        %1005 = vmatpush1.msra.mxu0 0.0
        %1006 = vmatprep.subr.mxu0 0.0
        %1007 = vmatpush1.msra.mxu0 0.0
        %1008 = vmatprep.subr.mxu0 0.0
        %1009 = vmatpush1.msra.mxu0 0.0
        %1010 = vmatprep.subr.mxu0 0.0
        %1011 = vmatpush1.msra.mxu0 0.0
        %1012 = vmatprep.subr.mxu0 0.0
        %1013 = vmatpush1.msra.mxu0 0.0
        %1014 = vmatprep.subr.mxu0 0.0
        %1015 = vmatpush1.msra.mxu0 0.0
        %1016 = vmatprep.subr.mxu0 0.0
        %1017 = vmatpush1.msra.mxu0 0.0
        %1018 = vmatprep.subr.mxu0 0.0
        %1019 = vmatpush1.msra.mxu0 0.0
        %1020 = vmatprep.subr.mxu0 0.0
        %1021 = vmatpush1.msra.mxu0 0.0
        %1022 = vmatprep.subr.mxu0 0.0
        %1023 = vmatpush1.msra.mxu0 0.0
        %1024 = vmatprep.mubr.f32.mxu0 0.0
        %1025 = vmatmul.mubr.f32.gmra.mrb[0].mxu0 %v803
        %v1026 = vpop.f32.mrb[0].mxu0
        %v1027 = vadd.f32 0.0, %v1026
        %v1028 = vpop.f32.mrb[0].mxu0
        %v1029 = vadd.f32 0.0, %v1028
        %1030 = vdwg.mxu0
        %1031 = vmatprep.subr.mxu0 %v740
        %1032 = vmatpush1.msra.mxu0 %v739
        %1033 = vmatprep.subr.mxu0 %v744
        %1034 = vmatpush1.msra.mxu0 %v743
        %1035 = vmatprep.subr.mxu0 %v748
        %1036 = vmatpush1.msra.mxu0 %v747
        %1037 = vmatprep.subr.mxu0 %v752
        %1038 = vmatpush1.msra.mxu0 %v751
        %1039 = vmatprep.subr.mxu0 %v756
        %1040 = vmatpush1.msra.mxu0 %v755
        %1041 = vmatprep.subr.mxu0 %v760
        %1042 = vmatpush1.msra.mxu0 %v759
        %1043 = vmatprep.subr.mxu0 %v764
        %1044 = vmatpush1.msra.mxu0 %v763
        %1045 = vmatprep.subr.mxu0 %v768
        %1046 = vmatpush1.msra.mxu0 %v767
        %1047 = vmatprep.subr.mxu0 %v772
        %1048 = vmatpush1.msra.mxu0 %v771
        %1049 = vmatprep.subr.mxu0 %v776
        %1050 = vmatpush1.msra.mxu0 %v775
        %1051 = vmatprep.subr.mxu0 %v780
        %1052 = vmatpush1.msra.mxu0 %v779
        %1053 = vmatprep.subr.mxu0 %v784
        %1054 = vmatpush1.msra.mxu0 %v783
        %1055 = vmatprep.subr.mxu0 %v788
        %1056 = vmatpush1.msra.mxu0 %v787
        %1057 = vmatprep.subr.mxu0 %v792
        %1058 = vmatpush1.msra.mxu0 %v791
        %1059 = vmatprep.subr.mxu0 %v796
        %1060 = vmatpush1.msra.mxu0 %v795
        %1061 = vmatprep.subr.mxu0 %v800
        %1062 = vmatpush1.msra.mxu0 %v799
        %1063 = vmatprep.subr.mxu0 0.0
        %1064 = vmatpush1.msra.mxu0 0.0
        %1065 = vmatprep.subr.mxu0 0.0
        %1066 = vmatpush1.msra.mxu0 0.0
        %1067 = vmatprep.subr.mxu0 0.0
        %1068 = vmatpush1.msra.mxu0 0.0
        %1069 = vmatprep.subr.mxu0 0.0
        %1070 = vmatpush1.msra.mxu0 0.0
        %1071 = vmatprep.subr.mxu0 0.0
        %1072 = vmatpush1.msra.mxu0 0.0
        %1073 = vmatprep.subr.mxu0 0.0
        %1074 = vmatpush1.msra.mxu0 0.0
        %1075 = vmatprep.subr.mxu0 0.0
        %1076 = vmatpush1.msra.mxu0 0.0
        %1077 = vmatprep.subr.mxu0 0.0
        %1078 = vmatpush1.msra.mxu0 0.0
        %1079 = vmatprep.subr.mxu0 0.0
        %1080 = vmatpush1.msra.mxu0 0.0
        %1081 = vmatprep.subr.mxu0 0.0
        %1082 = vmatpush1.msra.mxu0 0.0
        %1083 = vmatprep.subr.mxu0 0.0
        %1084 = vmatpush1.msra.mxu0 0.0
        %1085 = vmatprep.subr.mxu0 0.0
        %1086 = vmatpush1.msra.mxu0 0.0
        %1087 = vmatprep.subr.mxu0 0.0
        %1088 = vmatpush1.msra.mxu0 0.0
        %1089 = vmatprep.subr.mxu0 0.0
        %1090 = vmatpush1.msra.mxu0 0.0
        %1091 = vmatprep.subr.mxu0 0.0
        %1092 = vmatpush1.msra.mxu0 0.0
        %1093 = vmatprep.subr.mxu0 0.0
        %1094 = vmatpush1.msra.mxu0 0.0
        %1095 = vmatprep.mubr.f32.mxu0 0.0
        %1096 = vmatmul.mubr.f32.gmra.mrb[0].mxu0 %v803
        %v1097 = vpop.f32.mrb[0].mxu0
        %v1098 = vadd.f32 0.0, %v1097
        %v1099 = vpop.f32.mrb[0].mxu0
        %v1100 = vadd.f32 0.0, %v1099
        %1101 = vdwg.mxu0
        %v1102 = vadd.f32 %v956, %v1027
        %v1103 = vadd.f32 %v957, %v1029
        %v1104 = vadd.f32 %v958, %v1098
        %v1105 = vadd.f32 %v959, %v1100
        %v1106 = vxor.u32 %v951, 2147483648
        %v1107 = vmul.f32 %v1106, 1.442695
        %v1108 = vpow.pop %v1107
        %v1109 = vadd.f32 %v1108, 1.0
        %v1110 = vrcp.pop %v1109
        %v1111 = vmul.f32 1.0, %v1110
        %v1112 = vxor.u32 %v952, 2147483648
        %v1113 = vmul.f32 %v1112, 1.442695
        %v1114 = vpow.pop %v1113
        %v1115 = vadd.f32 %v1114, 1.0
        %v1116 = vrcp.pop %v1115
        %v1117 = vmul.f32 1.0, %v1116
        %v1118 = vtanh.pop %v953
        %v1119 = vxor.u32 %v954, 2147483648
        %v1120 = vmul.f32 %v1119, 1.442695
        %v1121 = vpow.pop %v1120
        %v1122 = vadd.f32 %v1121, 1.0
        %v1123 = vrcp.pop %v1122
        %v1124 = vmul.f32 1.0, %v1123
        %v1125 = vxor.u32 %v1102, 2147483648
        %v1126 = vmul.f32 %v1125, 1.442695
        %v1127 = vpow.pop %v1126
        %v1128 = vadd.f32 %v1127, 1.0
        %v1129 = vrcp.pop %v1128
        %v1130 = vmul.f32 1.0, %v1129
        %v1131 = vxor.u32 %v1103, 2147483648
        %v1132 = vmul.f32 %v1131, 1.442695
        %v1133 = vpow.pop %v1132
        %v1134 = vadd.f32 %v1133, 1.0
        %v1135 = vrcp.pop %v1134
        %v1136 = vmul.f32 1.0, %v1135
        %v1137 = vtanh.pop %v1104
        %v1138 = vxor.u32 %v1105, 2147483648
        %v1139 = vmul.f32 %v1138, 1.442695
        %v1140 = vpow.pop %v1139
        %v1141 = vadd.f32 %v1140, 1.0
        %v1142 = vrcp.pop %v1141
        %v1143 = vmul.f32 1.0, %v1142
        %v1144 = vmul.f32 %v1117, %v802
        %v1145 = vmul.f32 %v1111, %v1118
        %v1146 = vadd.f32 %v1144, %v1145
        %v1147 = vtanh.pop %v1146
        %v1148 = vmul.f32 %v1124, %v1147
        %v1149 = vmul.f32 %v1136, %v804
        %v1150 = vmul.f32 %v1130, %v1137
        %v1151 = vadd.f32 %v1149, %v1150
        %v1152 = vtanh.pop %v1151
        %v1153 = vmul.f32 %v1143, %v1152
        %v1154 = vsel %vm668, 1, 0
        %1155 = vset.pattern.permute.xlu0 0
        %1156 = vperm.xlu0 %1155, %v1154
        %v1157 = vpop.permute.xlu0 %1156
        %vm1158 = vcmp.eq.s32.totalorder %v1157, 1
        %v1159 = vsel %vm1158, %v1148, %v801
        %v1160 = vsel %vm1158, %v1146, %v802
        %v1161 = vsel %vm671, 1, 0
        %1162 = vset.pattern.permute.xlu0 3
        %1163 = vperm.xlu0 %1162, %v1161
        %v1164 = vpop.permute.xlu0 %1163
        %vm1165 = vcmp.eq.s32.totalorder %v1164, 1
        %v1166 = vsel %vm1165, %v1153, %v803
        %v1167 = vsel %vm1165, %v1151, %v804
        %v1168 = vsel %vm1158, %v1148, 0.0
        %1169 = vst [vmem:[%s338] sm:$0xff] %v1168
        %v1170 = vsel %vm1165, %v1153, 0.0
        %s1171 = scalar_lea.vmem %s345, 24
        %1172 = vst [vmem:[%s1171] sm:$0xff] %v1170
        %s1173 = scalar_lea.vmem %s291, 32 [#allocation8]
        %v1174 = vld [vmem:[%s1173] sm:$0xff]
        %v1175 = vld [vmem:[%s1173 + $0x8] sm:$0xff]
        %v1176 = vld [vmem:[%s1173 + $0x10] sm:$0xff]
        %v1177 = vld [vmem:[%s1173 + $0x18] sm:$0xff]
        %1178 = vmatprep.subr.mxu0 %v673
        %1179 = vmatpush1.msra.mxu0 %v672
        %1180 = vmatprep.subr.mxu0 %v677
        %1181 = vmatpush1.msra.mxu0 %v676
        %1182 = vmatprep.subr.mxu0 %v681
        %1183 = vmatpush1.msra.mxu0 %v680
        %1184 = vmatprep.subr.mxu0 %v685
        %1185 = vmatpush1.msra.mxu0 %v684
        %1186 = vmatprep.subr.mxu0 %v689
        %1187 = vmatpush1.msra.mxu0 %v688
        %1188 = vmatprep.subr.mxu0 %v693
        %1189 = vmatpush1.msra.mxu0 %v692
        %1190 = vmatprep.subr.mxu0 %v697
        %1191 = vmatpush1.msra.mxu0 %v696
        %1192 = vmatprep.subr.mxu0 %v701
        %1193 = vmatpush1.msra.mxu0 %v700
        %1194 = vmatprep.subr.mxu0 %v705
        %1195 = vmatpush1.msra.mxu0 %v704
        %1196 = vmatprep.subr.mxu0 %v709
        %1197 = vmatpush1.msra.mxu0 %v708
        %1198 = vmatprep.subr.mxu0 %v713
        %1199 = vmatpush1.msra.mxu0 %v712
        %1200 = vmatprep.subr.mxu0 %v717
        %1201 = vmatpush1.msra.mxu0 %v716
        %1202 = vmatprep.subr.mxu0 %v721
        %1203 = vmatpush1.msra.mxu0 %v720
        %1204 = vmatprep.subr.mxu0 %v725
        %1205 = vmatpush1.msra.mxu0 %v724
        %1206 = vmatprep.subr.mxu0 %v729
        %1207 = vmatpush1.msra.mxu0 %v728
        %1208 = vmatprep.subr.mxu0 %v733
        %1209 = vmatpush1.msra.mxu0 %v732
        %1210 = vmatprep.subr.mxu0 0.0
        %1211 = vmatpush1.msra.mxu0 0.0
        %1212 = vmatprep.subr.mxu0 0.0
        %1213 = vmatpush1.msra.mxu0 0.0
        %1214 = vmatprep.subr.mxu0 0.0
        %1215 = vmatpush1.msra.mxu0 0.0
        %1216 = vmatprep.subr.mxu0 0.0
        %1217 = vmatpush1.msra.mxu0 0.0
        %1218 = vmatprep.subr.mxu0 0.0
        %1219 = vmatpush1.msra.mxu0 0.0
        %1220 = vmatprep.subr.mxu0 0.0
        %1221 = vmatpush1.msra.mxu0 0.0
        %1222 = vmatprep.subr.mxu0 0.0
        %1223 = vmatpush1.msra.mxu0 0.0
        %1224 = vmatprep.subr.mxu0 0.0
        %1225 = vmatpush1.msra.mxu0 0.0
        %1226 = vmatprep.subr.mxu0 0.0
        %1227 = vmatpush1.msra.mxu0 0.0
        %1228 = vmatprep.subr.mxu0 0.0
        %1229 = vmatpush1.msra.mxu0 0.0
        %1230 = vmatprep.subr.mxu0 0.0
        %1231 = vmatpush1.msra.mxu0 0.0
        %1232 = vmatprep.subr.mxu0 0.0
        %1233 = vmatpush1.msra.mxu0 0.0
        %1234 = vmatprep.subr.mxu0 0.0
        %1235 = vmatpush1.msra.mxu0 0.0
        %1236 = vmatprep.subr.mxu0 0.0
        %1237 = vmatpush1.msra.mxu0 0.0
        %1238 = vmatprep.subr.mxu0 0.0
        %1239 = vmatpush1.msra.mxu0 0.0
        %1240 = vmatprep.subr.mxu0 0.0
        %1241 = vmatpush1.msra.mxu0 0.0
        %1242 = vmatprep.mubr.f32.mxu0 0.0
        %1243 = vmatmul.mubr.f32.gmra.mrb[0].mxu0 %v1159
        %v1244 = vpop.f32.mrb[0].mxu0
        %v1245 = vadd.f32 0.0, %v1244
        %v1246 = vpop.f32.mrb[0].mxu0
        %v1247 = vadd.f32 0.0, %v1246
        %1248 = vdwg.mxu0
        %1249 = vmatprep.subr.mxu0 %v675
        %1250 = vmatpush1.msra.mxu0 %v674
        %1251 = vmatprep.subr.mxu0 %v679
        %1252 = vmatpush1.msra.mxu0 %v678
        %1253 = vmatprep.subr.mxu0 %v683
        %1254 = vmatpush1.msra.mxu0 %v682
        %1255 = vmatprep.subr.mxu0 %v687
        %1256 = vmatpush1.msra.mxu0 %v686
        %1257 = vmatprep.subr.mxu0 %v691
        %1258 = vmatpush1.msra.mxu0 %v690
        %1259 = vmatprep.subr.mxu0 %v695
        %1260 = vmatpush1.msra.mxu0 %v694
        %1261 = vmatprep.subr.mxu0 %v699
        %1262 = vmatpush1.msra.mxu0 %v698
        %1263 = vmatprep.subr.mxu0 %v703
        %1264 = vmatpush1.msra.mxu0 %v702
        %1265 = vmatprep.subr.mxu0 %v707
        %1266 = vmatpush1.msra.mxu0 %v706
        %1267 = vmatprep.subr.mxu0 %v711
        %1268 = vmatpush1.msra.mxu0 %v710
        %1269 = vmatprep.subr.mxu0 %v715
        %1270 = vmatpush1.msra.mxu0 %v714
        %1271 = vmatprep.subr.mxu0 %v719
        %1272 = vmatpush1.msra.mxu0 %v718
        %1273 = vmatprep.subr.mxu0 %v723
        %1274 = vmatpush1.msra.mxu0 %v722
        %1275 = vmatprep.subr.mxu0 %v727
        %1276 = vmatpush1.msra.mxu0 %v726
        %1277 = vmatprep.subr.mxu0 %v731
        %1278 = vmatpush1.msra.mxu0 %v730
        %1279 = vmatprep.subr.mxu0 %v735
        %1280 = vmatpush1.msra.mxu0 %v734
        %1281 = vmatprep.subr.mxu0 0.0
        %1282 = vmatpush1.msra.mxu0 0.0
        %1283 = vmatprep.subr.mxu0 0.0
        %1284 = vmatpush1.msra.mxu0 0.0
        %1285 = vmatprep.subr.mxu0 0.0
        %1286 = vmatpush1.msra.mxu0 0.0
        %1287 = vmatprep.subr.mxu0 0.0
        %1288 = vmatpush1.msra.mxu0 0.0
        %1289 = vmatprep.subr.mxu0 0.0
        %1290 = vmatpush1.msra.mxu0 0.0
        %1291 = vmatprep.subr.mxu0 0.0
        %1292 = vmatpush1.msra.mxu0 0.0
        %1293 = vmatprep.subr.mxu0 0.0
        %1294 = vmatpush1.msra.mxu0 0.0
        %1295 = vmatprep.subr.mxu0 0.0
        %1296 = vmatpush1.msra.mxu0 0.0
        %1297 = vmatprep.subr.mxu0 0.0
        %1298 = vmatpush1.msra.mxu0 0.0
        %1299 = vmatprep.subr.mxu0 0.0
        %1300 = vmatpush1.msra.mxu0 0.0
        %1301 = vmatprep.subr.mxu0 0.0
        %1302 = vmatpush1.msra.mxu0 0.0
        %1303 = vmatprep.subr.mxu0 0.0
        %1304 = vmatpush1.msra.mxu0 0.0
        %1305 = vmatprep.subr.mxu0 0.0
        %1306 = vmatpush1.msra.mxu0 0.0
        %1307 = vmatprep.subr.mxu0 0.0
        %1308 = vmatpush1.msra.mxu0 0.0
        %1309 = vmatprep.subr.mxu0 0.0
        %1310 = vmatpush1.msra.mxu0 0.0
        %1311 = vmatprep.subr.mxu0 0.0
        %1312 = vmatpush1.msra.mxu0 0.0
        %1313 = vmatprep.mubr.f32.mxu0 0.0
        %1314 = vmatmul.mubr.f32.gmra.mrb[0].mxu0 %v1159
        %v1315 = vpop.f32.mrb[0].mxu0
        %v1316 = vadd.f32 0.0, %v1315
        %v1317 = vpop.f32.mrb[0].mxu0
        %v1318 = vadd.f32 0.0, %v1317
        %1319 = vdwg.mxu0
        %v1320 = vadd.f32 %v1174, %v1245
        %v1321 = vadd.f32 %v1175, %v1247
        %v1322 = vadd.f32 %v1176, %v1316
        %v1323 = vadd.f32 %v1177, %v1318
        %s1324 = scalar_lea.vmem %s298, 64 [#allocation9]
        %v1325 = vld [vmem:[%s1324] sm:$0xff]
        %v1326 = vld [vmem:[%s1324 + $0x8] sm:$0xff]
        %v1327 = vld [vmem:[%s1324 + $0x10] sm:$0xff]
        %v1328 = vld [vmem:[%s1324 + $0x18] sm:$0xff]
        %1329 = vmatprep.subr.mxu0 %v738
        %1330 = vmatpush1.msra.mxu0 %v737
        %1331 = vmatprep.subr.mxu0 %v742
        %1332 = vmatpush1.msra.mxu0 %v741
        %1333 = vmatprep.subr.mxu0 %v746
        %1334 = vmatpush1.msra.mxu0 %v745
        %1335 = vmatprep.subr.mxu0 %v750
        %1336 = vmatpush1.msra.mxu0 %v749
        %1337 = vmatprep.subr.mxu0 %v754
        %1338 = vmatpush1.msra.mxu0 %v753
        %1339 = vmatprep.subr.mxu0 %v758
        %1340 = vmatpush1.msra.mxu0 %v757
        %1341 = vmatprep.subr.mxu0 %v762
        %1342 = vmatpush1.msra.mxu0 %v761
        %1343 = vmatprep.subr.mxu0 %v766
        %1344 = vmatpush1.msra.mxu0 %v765
        %1345 = vmatprep.subr.mxu0 %v770
        %1346 = vmatpush1.msra.mxu0 %v769
        %1347 = vmatprep.subr.mxu0 %v774
        %1348 = vmatpush1.msra.mxu0 %v773
        %1349 = vmatprep.subr.mxu0 %v778
        %1350 = vmatpush1.msra.mxu0 %v777
        %1351 = vmatprep.subr.mxu0 %v782
        %1352 = vmatpush1.msra.mxu0 %v781
        %1353 = vmatprep.subr.mxu0 %v786
        %1354 = vmatpush1.msra.mxu0 %v785
        %1355 = vmatprep.subr.mxu0 %v790
        %1356 = vmatpush1.msra.mxu0 %v789
        %1357 = vmatprep.subr.mxu0 %v794
        %1358 = vmatpush1.msra.mxu0 %v793
        %1359 = vmatprep.subr.mxu0 %v798
        %1360 = vmatpush1.msra.mxu0 %v797
        %1361 = vmatprep.subr.mxu0 0.0
        %1362 = vmatpush1.msra.mxu0 0.0
        %1363 = vmatprep.subr.mxu0 0.0
        %1364 = vmatpush1.msra.mxu0 0.0
        %1365 = vmatprep.subr.mxu0 0.0
        %1366 = vmatpush1.msra.mxu0 0.0
        %1367 = vmatprep.subr.mxu0 0.0
        %1368 = vmatpush1.msra.mxu0 0.0
        %1369 = vmatprep.subr.mxu0 0.0
        %1370 = vmatpush1.msra.mxu0 0.0
        %1371 = vmatprep.subr.mxu0 0.0
        %1372 = vmatpush1.msra.mxu0 0.0
        %1373 = vmatprep.subr.mxu0 0.0
        %1374 = vmatpush1.msra.mxu0 0.0
        %1375 = vmatprep.subr.mxu0 0.0
        %1376 = vmatpush1.msra.mxu0 0.0
        %1377 = vmatprep.subr.mxu0 0.0
        %1378 = vmatpush1.msra.mxu0 0.0
        %1379 = vmatprep.subr.mxu0 0.0
        %1380 = vmatpush1.msra.mxu0 0.0
        %1381 = vmatprep.subr.mxu0 0.0
        %1382 = vmatpush1.msra.mxu0 0.0
        %1383 = vmatprep.subr.mxu0 0.0
        %1384 = vmatpush1.msra.mxu0 0.0
        %1385 = vmatprep.subr.mxu0 0.0
        %1386 = vmatpush1.msra.mxu0 0.0
        %1387 = vmatprep.subr.mxu0 0.0
        %1388 = vmatpush1.msra.mxu0 0.0
        %1389 = vmatprep.subr.mxu0 0.0
        %1390 = vmatpush1.msra.mxu0 0.0
        %1391 = vmatprep.subr.mxu0 0.0
        %1392 = vmatpush1.msra.mxu0 0.0
        %1393 = vmatprep.mubr.f32.mxu0 0.0
        %1394 = vmatmul.mubr.f32.gmra.mrb[0].mxu0 %v1166
        %v1395 = vpop.f32.mrb[0].mxu0
        %v1396 = vadd.f32 0.0, %v1395
        %v1397 = vpop.f32.mrb[0].mxu0
        %v1398 = vadd.f32 0.0, %v1397
        %1399 = vdwg.mxu0
        %1400 = vmatprep.subr.mxu0 %v740
        %1401 = vmatpush1.msra.mxu0 %v739
        %1402 = vmatprep.subr.mxu0 %v744
        %1403 = vmatpush1.msra.mxu0 %v743
        %1404 = vmatprep.subr.mxu0 %v748
        %1405 = vmatpush1.msra.mxu0 %v747
        %1406 = vmatprep.subr.mxu0 %v752
        %1407 = vmatpush1.msra.mxu0 %v751
        %1408 = vmatprep.subr.mxu0 %v756
        %1409 = vmatpush1.msra.mxu0 %v755
        %1410 = vmatprep.subr.mxu0 %v760
        %1411 = vmatpush1.msra.mxu0 %v759
        %1412 = vmatprep.subr.mxu0 %v764
        %1413 = vmatpush1.msra.mxu0 %v763
        %1414 = vmatprep.subr.mxu0 %v768
        %1415 = vmatpush1.msra.mxu0 %v767
        %1416 = vmatprep.subr.mxu0 %v772
        %1417 = vmatpush1.msra.mxu0 %v771
        %1418 = vmatprep.subr.mxu0 %v776
        %1419 = vmatpush1.msra.mxu0 %v775
        %1420 = vmatprep.subr.mxu0 %v780
        %1421 = vmatpush1.msra.mxu0 %v779
        %1422 = vmatprep.subr.mxu0 %v784
        %1423 = vmatpush1.msra.mxu0 %v783
        %1424 = vmatprep.subr.mxu0 %v788
        %1425 = vmatpush1.msra.mxu0 %v787
        %1426 = vmatprep.subr.mxu0 %v792
        %1427 = vmatpush1.msra.mxu0 %v791
        %1428 = vmatprep.subr.mxu0 %v796
        %1429 = vmatpush1.msra.mxu0 %v795
        %1430 = vmatprep.subr.mxu0 %v800
        %1431 = vmatpush1.msra.mxu0 %v799
        %1432 = vmatprep.subr.mxu0 0.0
        %1433 = vmatpush1.msra.mxu0 0.0
        %1434 = vmatprep.subr.mxu0 0.0
        %1435 = vmatpush1.msra.mxu0 0.0
        %1436 = vmatprep.subr.mxu0 0.0
        %1437 = vmatpush1.msra.mxu0 0.0
        %1438 = vmatprep.subr.mxu0 0.0
        %1439 = vmatpush1.msra.mxu0 0.0
        %1440 = vmatprep.subr.mxu0 0.0
        %1441 = vmatpush1.msra.mxu0 0.0
        %1442 = vmatprep.subr.mxu0 0.0
        %1443 = vmatpush1.msra.mxu0 0.0
        %1444 = vmatprep.subr.mxu0 0.0
        %1445 = vmatpush1.msra.mxu0 0.0
        %1446 = vmatprep.subr.mxu0 0.0
        %1447 = vmatpush1.msra.mxu0 0.0
        %1448 = vmatprep.subr.mxu0 0.0
        %1449 = vmatpush1.msra.mxu0 0.0
        %1450 = vmatprep.subr.mxu0 0.0
        %1451 = vmatpush1.msra.mxu0 0.0
        %1452 = vmatprep.subr.mxu0 0.0
        %1453 = vmatpush1.msra.mxu0 0.0
        %1454 = vmatprep.subr.mxu0 0.0
        %1455 = vmatpush1.msra.mxu0 0.0
        %1456 = vmatprep.subr.mxu0 0.0
        %1457 = vmatpush1.msra.mxu0 0.0
        %1458 = vmatprep.subr.mxu0 0.0
        %1459 = vmatpush1.msra.mxu0 0.0
        %1460 = vmatprep.subr.mxu0 0.0
        %1461 = vmatpush1.msra.mxu0 0.0
        %1462 = vmatprep.subr.mxu0 0.0
        %1463 = vmatpush1.msra.mxu0 0.0
        %1464 = vmatprep.mubr.f32.mxu0 0.0
        %1465 = vmatmul.mubr.f32.gmra.mrb[0].mxu0 %v1166
        %v1466 = vpop.f32.mrb[0].mxu0
        %v1467 = vadd.f32 0.0, %v1466
        %v1468 = vpop.f32.mrb[0].mxu0
        %v1469 = vadd.f32 0.0, %v1468
        %1470 = vdwg.mxu0
        %v1471 = vadd.f32 %v1325, %v1396
        %v1472 = vadd.f32 %v1326, %v1398
        %v1473 = vadd.f32 %v1327, %v1467
        %v1474 = vadd.f32 %v1328, %v1469
        %v1475 = vxor.u32 %v1320, 2147483648
        %v1476 = vmul.f32 %v1475, 1.442695
        %v1477 = vpow.pop %v1476
        %v1478 = vadd.f32 %v1477, 1.0
        %v1479 = vrcp.pop %v1478
        %v1480 = vmul.f32 1.0, %v1479
        %v1481 = vxor.u32 %v1321, 2147483648
        %v1482 = vmul.f32 %v1481, 1.442695
        %v1483 = vpow.pop %v1482
        %v1484 = vadd.f32 %v1483, 1.0
        %v1485 = vrcp.pop %v1484
        %v1486 = vmul.f32 1.0, %v1485
        %v1487 = vtanh.pop %v1322
        %v1488 = vxor.u32 %v1323, 2147483648
        %v1489 = vmul.f32 %v1488, 1.442695
        %v1490 = vpow.pop %v1489
        %v1491 = vadd.f32 %v1490, 1.0
        %v1492 = vrcp.pop %v1491
        %v1493 = vmul.f32 1.0, %v1492
        %v1494 = vxor.u32 %v1471, 2147483648
        %v1495 = vmul.f32 %v1494, 1.442695
        %v1496 = vpow.pop %v1495
        %v1497 = vadd.f32 %v1496, 1.0
        %v1498 = vrcp.pop %v1497
        %v1499 = vmul.f32 1.0, %v1498
        %v1500 = vxor.u32 %v1472, 2147483648
        %v1501 = vmul.f32 %v1500, 1.442695
        %v1502 = vpow.pop %v1501
        %v1503 = vadd.f32 %v1502, 1.0
        %v1504 = vrcp.pop %v1503
        %v1505 = vmul.f32 1.0, %v1504
        %v1506 = vtanh.pop %v1473
        %v1507 = vxor.u32 %v1474, 2147483648
        %v1508 = vmul.f32 %v1507, 1.442695
        %v1509 = vpow.pop %v1508
        %v1510 = vadd.f32 %v1509, 1.0
        %v1511 = vrcp.pop %v1510
        %v1512 = vmul.f32 1.0, %v1511
        %v1513 = vmul.f32 %v1486, %v1160
        %v1514 = vmul.f32 %v1480, %v1487
        %v1515 = vadd.f32 %v1513, %v1514
        %v1516 = vtanh.pop %v1515
        %v1517 = vmul.f32 %v1493, %v1516
        %v1518 = vmul.f32 %v1505, %v1167
        %v1519 = vmul.f32 %v1499, %v1506
        %v1520 = vadd.f32 %v1518, %v1519
        %v1521 = vtanh.pop %v1520
        %v1522 = vmul.f32 %v1512, %v1521
        %1523 = vset.pattern.permute.xlu0 1
        %1524 = vperm.xlu0 %1523, %v1154
        %v1525 = vpop.permute.xlu0 %1524
        %vm1526 = vcmp.eq.s32.totalorder %v1525, 1
        %v1527 = vsel %vm1526, %v1517, %v1159
        %v1528 = vsel %vm1526, %v1515, %v1160
        %1529 = vset.pattern.permute.xlu0 2
        %1530 = vperm.xlu0 %1529, %v1161
        %v1531 = vpop.permute.xlu0 %1530
        %vm1532 = vcmp.eq.s32.totalorder %v1531, 1
        %v1533 = vsel %vm1532, %v1522, %v1166
        %v1534 = vsel %vm1532, %v1520, %v1167
        %v1535 = vsel %vm1526, %v1517, 0.0
        %s1536 = scalar_lea.vmem %s338, 8
        %1537 = vst [vmem:[%s1536] sm:$0xff] %v1535
        %v1538 = vsel %vm1532, %v1522, 0.0
        %s1539 = scalar_lea.vmem %s345, 16
        %1540 = vst [vmem:[%s1539] sm:$0xff] %v1538
        %s1541 = scalar_lea.vmem %s291, 64 [#allocation8]
        %v1542 = vld [vmem:[%s1541] sm:$0xff]
        %v1543 = vld [vmem:[%s1541 + $0x8] sm:$0xff]
        %v1544 = vld [vmem:[%s1541 + $0x10] sm:$0xff]
        %v1545 = vld [vmem:[%s1541 + $0x18] sm:$0xff]
        %1546 = vmatprep.subr.mxu0 %v673
        %1547 = vmatpush1.msra.mxu0 %v672
        %1548 = vmatprep.subr.mxu0 %v677
        %1549 = vmatpush1.msra.mxu0 %v676
        %1550 = vmatprep.subr.mxu0 %v681
        %1551 = vmatpush1.msra.mxu0 %v680
        %1552 = vmatprep.subr.mxu0 %v685
        %1553 = vmatpush1.msra.mxu0 %v684
        %1554 = vmatprep.subr.mxu0 %v689
        %1555 = vmatpush1.msra.mxu0 %v688
        %1556 = vmatprep.subr.mxu0 %v693
        %1557 = vmatpush1.msra.mxu0 %v692
        %1558 = vmatprep.subr.mxu0 %v697
        %1559 = vmatpush1.msra.mxu0 %v696
        %1560 = vmatprep.subr.mxu0 %v701
        %1561 = vmatpush1.msra.mxu0 %v700
        %1562 = vmatprep.subr.mxu0 %v705
        %1563 = vmatpush1.msra.mxu0 %v704
        %1564 = vmatprep.subr.mxu0 %v709
        %1565 = vmatpush1.msra.mxu0 %v708
        %1566 = vmatprep.subr.mxu0 %v713
        %1567 = vmatpush1.msra.mxu0 %v712
        %1568 = vmatprep.subr.mxu0 %v717
        %1569 = vmatpush1.msra.mxu0 %v716
        %1570 = vmatprep.subr.mxu0 %v721
        %1571 = vmatpush1.msra.mxu0 %v720
        %1572 = vmatprep.subr.mxu0 %v725
        %1573 = vmatpush1.msra.mxu0 %v724
        %1574 = vmatprep.subr.mxu0 %v729
        %1575 = vmatpush1.msra.mxu0 %v728
        %1576 = vmatprep.subr.mxu0 %v733
        %1577 = vmatpush1.msra.mxu0 %v732
        %1578 = vmatprep.subr.mxu0 0.0
        %1579 = vmatpush1.msra.mxu0 0.0
        %1580 = vmatprep.subr.mxu0 0.0
        %1581 = vmatpush1.msra.mxu0 0.0
        %1582 = vmatprep.subr.mxu0 0.0
        %1583 = vmatpush1.msra.mxu0 0.0
        %1584 = vmatprep.subr.mxu0 0.0
        %1585 = vmatpush1.msra.mxu0 0.0
        %1586 = vmatprep.subr.mxu0 0.0
        %1587 = vmatpush1.msra.mxu0 0.0
        %1588 = vmatprep.subr.mxu0 0.0
        %1589 = vmatpush1.msra.mxu0 0.0
        %1590 = vmatprep.subr.mxu0 0.0
        %1591 = vmatpush1.msra.mxu0 0.0
        %1592 = vmatprep.subr.mxu0 0.0
        %1593 = vmatpush1.msra.mxu0 0.0
        %1594 = vmatprep.subr.mxu0 0.0
        %1595 = vmatpush1.msra.mxu0 0.0
        %1596 = vmatprep.subr.mxu0 0.0
        %1597 = vmatpush1.msra.mxu0 0.0
        %1598 = vmatprep.subr.mxu0 0.0
        %1599 = vmatpush1.msra.mxu0 0.0
        %1600 = vmatprep.subr.mxu0 0.0
        %1601 = vmatpush1.msra.mxu0 0.0
        %1602 = vmatprep.subr.mxu0 0.0
        %1603 = vmatpush1.msra.mxu0 0.0
        %1604 = vmatprep.subr.mxu0 0.0
        %1605 = vmatpush1.msra.mxu0 0.0
        %1606 = vmatprep.subr.mxu0 0.0
        %1607 = vmatpush1.msra.mxu0 0.0
        %1608 = vmatprep.subr.mxu0 0.0
        %1609 = vmatpush1.msra.mxu0 0.0
        %1610 = vmatprep.mubr.f32.mxu0 0.0
        %1611 = vmatmul.mubr.f32.gmra.mrb[0].mxu0 %v1527
        %v1612 = vpop.f32.mrb[0].mxu0
        %v1613 = vadd.f32 0.0, %v1612
        %v1614 = vpop.f32.mrb[0].mxu0
        %v1615 = vadd.f32 0.0, %v1614
        %1616 = vdwg.mxu0
        %1617 = vmatprep.subr.mxu0 %v675
        %1618 = vmatpush1.msra.mxu0 %v674
        %1619 = vmatprep.subr.mxu0 %v679
        %1620 = vmatpush1.msra.mxu0 %v678
        %1621 = vmatprep.subr.mxu0 %v683
        %1622 = vmatpush1.msra.mxu0 %v682
        %1623 = vmatprep.subr.mxu0 %v687
        %1624 = vmatpush1.msra.mxu0 %v686
        %1625 = vmatprep.subr.mxu0 %v691
        %1626 = vmatpush1.msra.mxu0 %v690
        %1627 = vmatprep.subr.mxu0 %v695
        %1628 = vmatpush1.msra.mxu0 %v694
        %1629 = vmatprep.subr.mxu0 %v699
        %1630 = vmatpush1.msra.mxu0 %v698
        %1631 = vmatprep.subr.mxu0 %v703
        %1632 = vmatpush1.msra.mxu0 %v702
        %1633 = vmatprep.subr.mxu0 %v707
        %1634 = vmatpush1.msra.mxu0 %v706
        %1635 = vmatprep.subr.mxu0 %v711
        %1636 = vmatpush1.msra.mxu0 %v710
        %1637 = vmatprep.subr.mxu0 %v715
        %1638 = vmatpush1.msra.mxu0 %v714
        %1639 = vmatprep.subr.mxu0 %v719
        %1640 = vmatpush1.msra.mxu0 %v718
        %1641 = vmatprep.subr.mxu0 %v723
        %1642 = vmatpush1.msra.mxu0 %v722
        %1643 = vmatprep.subr.mxu0 %v727
        %1644 = vmatpush1.msra.mxu0 %v726
        %1645 = vmatprep.subr.mxu0 %v731
        %1646 = vmatpush1.msra.mxu0 %v730
        %1647 = vmatprep.subr.mxu0 %v735
        %1648 = vmatpush1.msra.mxu0 %v734
        %1649 = vmatprep.subr.mxu0 0.0
        %1650 = vmatpush1.msra.mxu0 0.0
        %1651 = vmatprep.subr.mxu0 0.0
        %1652 = vmatpush1.msra.mxu0 0.0
        %1653 = vmatprep.subr.mxu0 0.0
        %1654 = vmatpush1.msra.mxu0 0.0
        %1655 = vmatprep.subr.mxu0 0.0
        %1656 = vmatpush1.msra.mxu0 0.0
        %1657 = vmatprep.subr.mxu0 0.0
        %1658 = vmatpush1.msra.mxu0 0.0
        %1659 = vmatprep.subr.mxu0 0.0
        %1660 = vmatpush1.msra.mxu0 0.0
        %1661 = vmatprep.subr.mxu0 0.0
        %1662 = vmatpush1.msra.mxu0 0.0
        %1663 = vmatprep.subr.mxu0 0.0
        %1664 = vmatpush1.msra.mxu0 0.0
        %1665 = vmatprep.subr.mxu0 0.0
        %1666 = vmatpush1.msra.mxu0 0.0
        %1667 = vmatprep.subr.mxu0 0.0
        %1668 = vmatpush1.msra.mxu0 0.0
        %1669 = vmatprep.subr.mxu0 0.0
        %1670 = vmatpush1.msra.mxu0 0.0
        %1671 = vmatprep.subr.mxu0 0.0
        %1672 = vmatpush1.msra.mxu0 0.0
        %1673 = vmatprep.subr.mxu0 0.0
        %1674 = vmatpush1.msra.mxu0 0.0
        %1675 = vmatprep.subr.mxu0 0.0
        %1676 = vmatpush1.msra.mxu0 0.0
        %1677 = vmatprep.subr.mxu0 0.0
        %1678 = vmatpush1.msra.mxu0 0.0
        %1679 = vmatprep.subr.mxu0 0.0
        %1680 = vmatpush1.msra.mxu0 0.0
        %1681 = vmatprep.mubr.f32.mxu0 0.0
        %1682 = vmatmul.mubr.f32.gmra.mrb[0].mxu0 %v1527
        %v1683 = vpop.f32.mrb[0].mxu0
        %v1684 = vadd.f32 0.0, %v1683
        %v1685 = vpop.f32.mrb[0].mxu0
        %v1686 = vadd.f32 0.0, %v1685
        %1687 = vdwg.mxu0
        %v1688 = vadd.f32 %v1542, %v1613
        %v1689 = vadd.f32 %v1543, %v1615
        %v1690 = vadd.f32 %v1544, %v1684
        %v1691 = vadd.f32 %v1545, %v1686
        %s1692 = scalar_lea.vmem %s298, 32 [#allocation9]
        %v1693 = vld [vmem:[%s1692] sm:$0xff]
        %v1694 = vld [vmem:[%s1692 + $0x8] sm:$0xff]
        %v1695 = vld [vmem:[%s1692 + $0x10] sm:$0xff]
        %v1696 = vld [vmem:[%s1692 + $0x18] sm:$0xff]
        %1697 = vmatprep.subr.mxu0 %v738
        %1698 = vmatpush1.msra.mxu0 %v737
        %1699 = vmatprep.subr.mxu0 %v742
        %1700 = vmatpush1.msra.mxu0 %v741
        %1701 = vmatprep.subr.mxu0 %v746
        %1702 = vmatpush1.msra.mxu0 %v745
        %1703 = vmatprep.subr.mxu0 %v750
        %1704 = vmatpush1.msra.mxu0 %v749
        %1705 = vmatprep.subr.mxu0 %v754
        %1706 = vmatpush1.msra.mxu0 %v753
        %1707 = vmatprep.subr.mxu0 %v758
        %1708 = vmatpush1.msra.mxu0 %v757
        %1709 = vmatprep.subr.mxu0 %v762
        %1710 = vmatpush1.msra.mxu0 %v761
        %1711 = vmatprep.subr.mxu0 %v766
        %1712 = vmatpush1.msra.mxu0 %v765
        %1713 = vmatprep.subr.mxu0 %v770
        %1714 = vmatpush1.msra.mxu0 %v769
        %1715 = vmatprep.subr.mxu0 %v774
        %1716 = vmatpush1.msra.mxu0 %v773
        %1717 = vmatprep.subr.mxu0 %v778
        %1718 = vmatpush1.msra.mxu0 %v777
        %1719 = vmatprep.subr.mxu0 %v782
        %1720 = vmatpush1.msra.mxu0 %v781
        %1721 = vmatprep.subr.mxu0 %v786
        %1722 = vmatpush1.msra.mxu0 %v785
        %1723 = vmatprep.subr.mxu0 %v790
        %1724 = vmatpush1.msra.mxu0 %v789
        %1725 = vmatprep.subr.mxu0 %v794
        %1726 = vmatpush1.msra.mxu0 %v793
        %1727 = vmatprep.subr.mxu0 %v798
        %1728 = vmatpush1.msra.mxu0 %v797
        %1729 = vmatprep.subr.mxu0 0.0
        %1730 = vmatpush1.msra.mxu0 0.0
        %1731 = vmatprep.subr.mxu0 0.0
        %1732 = vmatpush1.msra.mxu0 0.0
        %1733 = vmatprep.subr.mxu0 0.0
        %1734 = vmatpush1.msra.mxu0 0.0
        %1735 = vmatprep.subr.mxu0 0.0
        %1736 = vmatpush1.msra.mxu0 0.0
        %1737 = vmatprep.subr.mxu0 0.0
        %1738 = vmatpush1.msra.mxu0 0.0
        %1739 = vmatprep.subr.mxu0 0.0
        %1740 = vmatpush1.msra.mxu0 0.0
        %1741 = vmatprep.subr.mxu0 0.0
        %1742 = vmatpush1.msra.mxu0 0.0
        %1743 = vmatprep.subr.mxu0 0.0
        %1744 = vmatpush1.msra.mxu0 0.0
        %1745 = vmatprep.subr.mxu0 0.0
        %1746 = vmatpush1.msra.mxu0 0.0
        %1747 = vmatprep.subr.mxu0 0.0
        %1748 = vmatpush1.msra.mxu0 0.0
        %1749 = vmatprep.subr.mxu0 0.0
        %1750 = vmatpush1.msra.mxu0 0.0
        %1751 = vmatprep.subr.mxu0 0.0
        %1752 = vmatpush1.msra.mxu0 0.0
        %1753 = vmatprep.subr.mxu0 0.0
        %1754 = vmatpush1.msra.mxu0 0.0
        %1755 = vmatprep.subr.mxu0 0.0
        %1756 = vmatpush1.msra.mxu0 0.0
        %1757 = vmatprep.subr.mxu0 0.0
        %1758 = vmatpush1.msra.mxu0 0.0
        %1759 = vmatprep.subr.mxu0 0.0
        %1760 = vmatpush1.msra.mxu0 0.0
        %1761 = vmatprep.mubr.f32.mxu0 0.0
        %1762 = vmatmul.mubr.f32.gmra.mrb[0].mxu0 %v1533
        %v1763 = vpop.f32.mrb[0].mxu0
        %v1764 = vadd.f32 0.0, %v1763
        %v1765 = vpop.f32.mrb[0].mxu0
        %v1766 = vadd.f32 0.0, %v1765
        %1767 = vdwg.mxu0
        %1768 = vmatprep.subr.mxu0 %v740
        %1769 = vmatpush1.msra.mxu0 %v739
        %1770 = vmatprep.subr.mxu0 %v744
        %1771 = vmatpush1.msra.mxu0 %v743
        %1772 = vmatprep.subr.mxu0 %v748
        %1773 = vmatpush1.msra.mxu0 %v747
        %1774 = vmatprep.subr.mxu0 %v752
        %1775 = vmatpush1.msra.mxu0 %v751
        %1776 = vmatprep.subr.mxu0 %v756
        %1777 = vmatpush1.msra.mxu0 %v755
        %1778 = vmatprep.subr.mxu0 %v760
        %1779 = vmatpush1.msra.mxu0 %v759
        %1780 = vmatprep.subr.mxu0 %v764
        %1781 = vmatpush1.msra.mxu0 %v763
        %1782 = vmatprep.subr.mxu0 %v768
        %1783 = vmatpush1.msra.mxu0 %v767
        %1784 = vmatprep.subr.mxu0 %v772
        %1785 = vmatpush1.msra.mxu0 %v771
        %1786 = vmatprep.subr.mxu0 %v776
        %1787 = vmatpush1.msra.mxu0 %v775
        %1788 = vmatprep.subr.mxu0 %v780
        %1789 = vmatpush1.msra.mxu0 %v779
        %1790 = vmatprep.subr.mxu0 %v784
        %1791 = vmatpush1.msra.mxu0 %v783
        %1792 = vmatprep.subr.mxu0 %v788
        %1793 = vmatpush1.msra.mxu0 %v787
        %1794 = vmatprep.subr.mxu0 %v792
        %1795 = vmatpush1.msra.mxu0 %v791
        %1796 = vmatprep.subr.mxu0 %v796
        %1797 = vmatpush1.msra.mxu0 %v795
        %1798 = vmatprep.subr.mxu0 %v800
        %1799 = vmatpush1.msra.mxu0 %v799
        %1800 = vmatprep.subr.mxu0 0.0
        %1801 = vmatpush1.msra.mxu0 0.0
        %1802 = vmatprep.subr.mxu0 0.0
        %1803 = vmatpush1.msra.mxu0 0.0
        %1804 = vmatprep.subr.mxu0 0.0
        %1805 = vmatpush1.msra.mxu0 0.0
        %1806 = vmatprep.subr.mxu0 0.0
        %1807 = vmatpush1.msra.mxu0 0.0
        %1808 = vmatprep.subr.mxu0 0.0
        %1809 = vmatpush1.msra.mxu0 0.0
        %1810 = vmatprep.subr.mxu0 0.0
        %1811 = vmatpush1.msra.mxu0 0.0
        %1812 = vmatprep.subr.mxu0 0.0
        %1813 = vmatpush1.msra.mxu0 0.0
        %1814 = vmatprep.subr.mxu0 0.0
        %1815 = vmatpush1.msra.mxu0 0.0
        %1816 = vmatprep.subr.mxu0 0.0
        %1817 = vmatpush1.msra.mxu0 0.0
        %1818 = vmatprep.subr.mxu0 0.0
        %1819 = vmatpush1.msra.mxu0 0.0
        %1820 = vmatprep.subr.mxu0 0.0
        %1821 = vmatpush1.msra.mxu0 0.0
        %1822 = vmatprep.subr.mxu0 0.0
        %1823 = vmatpush1.msra.mxu0 0.0
        %1824 = vmatprep.subr.mxu0 0.0
        %1825 = vmatpush1.msra.mxu0 0.0
        %1826 = vmatprep.subr.mxu0 0.0
        %1827 = vmatpush1.msra.mxu0 0.0
        %1828 = vmatprep.subr.mxu0 0.0
        %1829 = vmatpush1.msra.mxu0 0.0
        %1830 = vmatprep.subr.mxu0 0.0
        %1831 = vmatpush1.msra.mxu0 0.0
        %1832 = vmatprep.mubr.f32.mxu0 0.0
        %1833 = vmatmul.mubr.f32.gmra.mrb[0].mxu0 %v1533
        %v1834 = vpop.f32.mrb[0].mxu0
        %v1835 = vadd.f32 0.0, %v1834
        %v1836 = vpop.f32.mrb[0].mxu0
        %v1837 = vadd.f32 0.0, %v1836
        %1838 = vdwg.mxu0
        %v1839 = vadd.f32 %v1693, %v1764
        %v1840 = vadd.f32 %v1694, %v1766
        %v1841 = vadd.f32 %v1695, %v1835
        %v1842 = vadd.f32 %v1696, %v1837
        %v1843 = vxor.u32 %v1688, 2147483648
        %v1844 = vmul.f32 %v1843, 1.442695
        %v1845 = vpow.pop %v1844
        %v1846 = vadd.f32 %v1845, 1.0
        %v1847 = vrcp.pop %v1846
        %v1848 = vmul.f32 1.0, %v1847
        %v1849 = vxor.u32 %v1689, 2147483648
        %v1850 = vmul.f32 %v1849, 1.442695
        %v1851 = vpow.pop %v1850
        %v1852 = vadd.f32 %v1851, 1.0
        %v1853 = vrcp.pop %v1852
        %v1854 = vmul.f32 1.0, %v1853
        %v1855 = vtanh.pop %v1690
        %v1856 = vxor.u32 %v1691, 2147483648
        %v1857 = vmul.f32 %v1856, 1.442695
        %v1858 = vpow.pop %v1857
        %v1859 = vadd.f32 %v1858, 1.0
        %v1860 = vrcp.pop %v1859
        %v1861 = vmul.f32 1.0, %v1860
        %v1862 = vxor.u32 %v1839, 2147483648
        %v1863 = vmul.f32 %v1862, 1.442695
        %v1864 = vpow.pop %v1863
        %v1865 = vadd.f32 %v1864, 1.0
        %v1866 = vrcp.pop %v1865
        %v1867 = vmul.f32 1.0, %v1866
        %v1868 = vxor.u32 %v1840, 2147483648
        %v1869 = vmul.f32 %v1868, 1.442695
        %v1870 = vpow.pop %v1869
        %v1871 = vadd.f32 %v1870, 1.0
        %v1872 = vrcp.pop %v1871
        %v1873 = vmul.f32 1.0, %v1872
        %v1874 = vtanh.pop %v1841
        %v1875 = vxor.u32 %v1842, 2147483648
        %v1876 = vmul.f32 %v1875, 1.442695
        %v1877 = vpow.pop %v1876
        %v1878 = vadd.f32 %v1877, 1.0
        %v1879 = vrcp.pop %v1878
        %v1880 = vmul.f32 1.0, %v1879
        %v1881 = vmul.f32 %v1854, %v1528
        %v1882 = vmul.f32 %v1848, %v1855
        %v1883 = vadd.f32 %v1881, %v1882
        %v1884 = vtanh.pop %v1883
        %v1885 = vmul.f32 %v1861, %v1884
        %v1886 = vmul.f32 %v1873, %v1534
        %v1887 = vmul.f32 %v1867, %v1874
        %v1888 = vadd.f32 %v1886, %v1887
        %v1889 = vtanh.pop %v1888
        %v1890 = vmul.f32 %v1880, %v1889
        %1891 = vset.pattern.permute.xlu0 2
        %1892 = vperm.xlu0 %1891, %v1154
        %v1893 = vpop.permute.xlu0 %1892
        %vm1894 = vcmp.eq.s32.totalorder %v1893, 1
        %v1895 = vsel %vm1894, %v1885, %v1527
        %v1896 = vsel %vm1894, %v1883, %v1528
        %1897 = vset.pattern.permute.xlu0 1
        %1898 = vperm.xlu0 %1897, %v1161
        %v1899 = vpop.permute.xlu0 %1898
        %vm1900 = vcmp.eq.s32.totalorder %v1899, 1
        %v1901 = vsel %vm1900, %v1890, %v1533
        %v1902 = vsel %vm1900, %v1888, %v1534
        %v1903 = vsel %vm1894, %v1885, 0.0
        %s1904 = scalar_lea.vmem %s338, 16
        %1905 = vst [vmem:[%s1904] sm:$0xff] %v1903
        %v1906 = vsel %vm1900, %v1890, 0.0
        %s1907 = scalar_lea.vmem %s345, 8
        %1908 = vst [vmem:[%s1907] sm:$0xff] %v1906
        %s1909 = scalar_lea.vmem %s291, 96 [#allocation8]
        %v1910 = vld [vmem:[%s1909] sm:$0xff]
        %v1911 = vld [vmem:[%s1909 + $0x8] sm:$0xff]
        %v1912 = vld [vmem:[%s1909 + $0x10] sm:$0xff]
        %v1913 = vld [vmem:[%s1909 + $0x18] sm:$0xff]
        %1914 = vmatprep.subr.mxu0 %v673
        %1915 = vmatpush1.msra.mxu0 %v672
        %1916 = vmatprep.subr.mxu0 %v677
        %1917 = vmatpush1.msra.mxu0 %v676
        %1918 = vmatprep.subr.mxu0 %v681
        %1919 = vmatpush1.msra.mxu0 %v680
        %1920 = vmatprep.subr.mxu0 %v685
        %1921 = vmatpush1.msra.mxu0 %v684
        %1922 = vmatprep.subr.mxu0 %v689
        %1923 = vmatpush1.msra.mxu0 %v688
        %1924 = vmatprep.subr.mxu0 %v693
        %1925 = vmatpush1.msra.mxu0 %v692
        %1926 = vmatprep.subr.mxu0 %v697
        %1927 = vmatpush1.msra.mxu0 %v696
        %1928 = vmatprep.subr.mxu0 %v701
        %1929 = vmatpush1.msra.mxu0 %v700
        %1930 = vmatprep.subr.mxu0 %v705
        %1931 = vmatpush1.msra.mxu0 %v704
        %1932 = vmatprep.subr.mxu0 %v709
        %1933 = vmatpush1.msra.mxu0 %v708
        %1934 = vmatprep.subr.mxu0 %v713
        %1935 = vmatpush1.msra.mxu0 %v712
        %1936 = vmatprep.subr.mxu0 %v717
        %1937 = vmatpush1.msra.mxu0 %v716
        %1938 = vmatprep.subr.mxu0 %v721
        %1939 = vmatpush1.msra.mxu0 %v720
        %1940 = vmatprep.subr.mxu0 %v725
        %1941 = vmatpush1.msra.mxu0 %v724
        %1942 = vmatprep.subr.mxu0 %v729
        %1943 = vmatpush1.msra.mxu0 %v728
        %1944 = vmatprep.subr.mxu0 %v733
        %1945 = vmatpush1.msra.mxu0 %v732
        %1946 = vmatprep.subr.mxu0 0.0
        %1947 = vmatpush1.msra.mxu0 0.0
        %1948 = vmatprep.subr.mxu0 0.0
        %1949 = vmatpush1.msra.mxu0 0.0
        %1950 = vmatprep.subr.mxu0 0.0
        %1951 = vmatpush1.msra.mxu0 0.0
        %1952 = vmatprep.subr.mxu0 0.0
        %1953 = vmatpush1.msra.mxu0 0.0
        %1954 = vmatprep.subr.mxu0 0.0
        %1955 = vmatpush1.msra.mxu0 0.0
        %1956 = vmatprep.subr.mxu0 0.0
        %1957 = vmatpush1.msra.mxu0 0.0
        %1958 = vmatprep.subr.mxu0 0.0
        %1959 = vmatpush1.msra.mxu0 0.0
        %1960 = vmatprep.subr.mxu0 0.0
        %1961 = vmatpush1.msra.mxu0 0.0
        %1962 = vmatprep.subr.mxu0 0.0
        %1963 = vmatpush1.msra.mxu0 0.0
        %1964 = vmatprep.subr.mxu0 0.0
        %1965 = vmatpush1.msra.mxu0 0.0
        %1966 = vmatprep.subr.mxu0 0.0
        %1967 = vmatpush1.msra.mxu0 0.0
        %1968 = vmatprep.subr.mxu0 0.0
        %1969 = vmatpush1.msra.mxu0 0.0
        %1970 = vmatprep.subr.mxu0 0.0
        %1971 = vmatpush1.msra.mxu0 0.0
        %1972 = vmatprep.subr.mxu0 0.0
        %1973 = vmatpush1.msra.mxu0 0.0
        %1974 = vmatprep.subr.mxu0 0.0
        %1975 = vmatpush1.msra.mxu0 0.0
        %1976 = vmatprep.subr.mxu0 0.0
        %1977 = vmatpush1.msra.mxu0 0.0
        %1978 = vmatprep.mubr.f32.mxu0 0.0
        %1979 = vmatmul.mubr.f32.gmra.mrb[0].mxu0 %v1895
        %v1980 = vpop.f32.mrb[0].mxu0
        %v1981 = vadd.f32 0.0, %v1980
        %v1982 = vpop.f32.mrb[0].mxu0
        %v1983 = vadd.f32 0.0, %v1982
        %1984 = vdwg.mxu0
        %1985 = vmatprep.subr.mxu0 %v675
        %1986 = vmatpush1.msra.mxu0 %v674
        %1987 = vmatprep.subr.mxu0 %v679
        %1988 = vmatpush1.msra.mxu0 %v678
        %1989 = vmatprep.subr.mxu0 %v683
        %1990 = vmatpush1.msra.mxu0 %v682
        %1991 = vmatprep.subr.mxu0 %v687
        %1992 = vmatpush1.msra.mxu0 %v686
        %1993 = vmatprep.subr.mxu0 %v691
        %1994 = vmatpush1.msra.mxu0 %v690
        %1995 = vmatprep.subr.mxu0 %v695
        %1996 = vmatpush1.msra.mxu0 %v694
        %1997 = vmatprep.subr.mxu0 %v699
        %1998 = vmatpush1.msra.mxu0 %v698
        %1999 = vmatprep.subr.mxu0 %v703
        %2000 = vmatpush1.msra.mxu0 %v702
        %2001 = vmatprep.subr.mxu0 %v707
        %2002 = vmatpush1.msra.mxu0 %v706
        %2003 = vmatprep.subr.mxu0 %v711
        %2004 = vmatpush1.msra.mxu0 %v710
        %2005 = vmatprep.subr.mxu0 %v715
        %2006 = vmatpush1.msra.mxu0 %v714
        %2007 = vmatprep.subr.mxu0 %v719
        %2008 = vmatpush1.msra.mxu0 %v718
        %2009 = vmatprep.subr.mxu0 %v723
        %2010 = vmatpush1.msra.mxu0 %v722
        %2011 = vmatprep.subr.mxu0 %v727
        %2012 = vmatpush1.msra.mxu0 %v726
        %2013 = vmatprep.subr.mxu0 %v731
        %2014 = vmatpush1.msra.mxu0 %v730
        %2015 = vmatprep.subr.mxu0 %v735
        %2016 = vmatpush1.msra.mxu0 %v734
        %2017 = vmatprep.subr.mxu0 0.0
        %2018 = vmatpush1.msra.mxu0 0.0
        %2019 = vmatprep.subr.mxu0 0.0
        %2020 = vmatpush1.msra.mxu0 0.0
        %2021 = vmatprep.subr.mxu0 0.0
        %2022 = vmatpush1.msra.mxu0 0.0
        %2023 = vmatprep.subr.mxu0 0.0
        %2024 = vmatpush1.msra.mxu0 0.0
        %2025 = vmatprep.subr.mxu0 0.0
        %2026 = vmatpush1.msra.mxu0 0.0
        %2027 = vmatprep.subr.mxu0 0.0
        %2028 = vmatpush1.msra.mxu0 0.0
        %2029 = vmatprep.subr.mxu0 0.0
        %2030 = vmatpush1.msra.mxu0 0.0
        %2031 = vmatprep.subr.mxu0 0.0
        %2032 = vmatpush1.msra.mxu0 0.0
        %2033 = vmatprep.subr.mxu0 0.0
        %2034 = vmatpush1.msra.mxu0 0.0
        %2035 = vmatprep.subr.mxu0 0.0
        %2036 = vmatpush1.msra.mxu0 0.0
        %2037 = vmatprep.subr.mxu0 0.0
        %2038 = vmatpush1.msra.mxu0 0.0
        %2039 = vmatprep.subr.mxu0 0.0
        %2040 = vmatpush1.msra.mxu0 0.0
        %2041 = vmatprep.subr.mxu0 0.0
        %2042 = vmatpush1.msra.mxu0 0.0
        %2043 = vmatprep.subr.mxu0 0.0
        %2044 = vmatpush1.msra.mxu0 0.0
        %2045 = vmatprep.subr.mxu0 0.0
        %2046 = vmatpush1.msra.mxu0 0.0
        %2047 = vmatprep.subr.mxu0 0.0
        %2048 = vmatpush1.msra.mxu0 0.0
        %2049 = vmatprep.mubr.f32.mxu0 0.0
        %2050 = vmatmul.mubr.f32.gmra.mrb[0].mxu0 %v1895
        %v2051 = vpop.f32.mrb[0].mxu0
        %v2052 = vadd.f32 0.0, %v2051
        %v2053 = vpop.f32.mrb[0].mxu0
        %v2054 = vadd.f32 0.0, %v2053
        %2055 = vdwg.mxu0
        %v2056 = vadd.f32 %v1910, %v1981
        %v2057 = vadd.f32 %v1911, %v1983
        %v2058 = vadd.f32 %v1912, %v2052
        %v2059 = vadd.f32 %v1913, %v2054
        %v2060 = vld [vmem:[%s298] sm:$0xff]
        %v2061 = vld [vmem:[%s298 + $0x8] sm:$0xff]
        %v2062 = vld [vmem:[%s298 + $0x10] sm:$0xff]
        %v2063 = vld [vmem:[%s298 + $0x18] sm:$0xff]
        %2064 = vmatprep.subr.mxu0 %v738
        %2065 = vmatpush1.msra.mxu0 %v737
        %2066 = vmatprep.subr.mxu0 %v742
        %2067 = vmatpush1.msra.mxu0 %v741
        %2068 = vmatprep.subr.mxu0 %v746
        %2069 = vmatpush1.msra.mxu0 %v745
        %2070 = vmatprep.subr.mxu0 %v750
        %2071 = vmatpush1.msra.mxu0 %v749
        %2072 = vmatprep.subr.mxu0 %v754
        %2073 = vmatpush1.msra.mxu0 %v753
        %2074 = vmatprep.subr.mxu0 %v758
        %2075 = vmatpush1.msra.mxu0 %v757
        %2076 = vmatprep.subr.mxu0 %v762
        %2077 = vmatpush1.msra.mxu0 %v761
        %2078 = vmatprep.subr.mxu0 %v766
        %2079 = vmatpush1.msra.mxu0 %v765
        %2080 = vmatprep.subr.mxu0 %v770
        %2081 = vmatpush1.msra.mxu0 %v769
        %2082 = vmatprep.subr.mxu0 %v774
        %2083 = vmatpush1.msra.mxu0 %v773
        %2084 = vmatprep.subr.mxu0 %v778
        %2085 = vmatpush1.msra.mxu0 %v777
        %2086 = vmatprep.subr.mxu0 %v782
        %2087 = vmatpush1.msra.mxu0 %v781
        %2088 = vmatprep.subr.mxu0 %v786
        %2089 = vmatpush1.msra.mxu0 %v785
        %2090 = vmatprep.subr.mxu0 %v790
        %2091 = vmatpush1.msra.mxu0 %v789
        %2092 = vmatprep.subr.mxu0 %v794
        %2093 = vmatpush1.msra.mxu0 %v793
        %2094 = vmatprep.subr.mxu0 %v798
        %2095 = vmatpush1.msra.mxu0 %v797
        %2096 = vmatprep.subr.mxu0 0.0
        %2097 = vmatpush1.msra.mxu0 0.0
        %2098 = vmatprep.subr.mxu0 0.0
        %2099 = vmatpush1.msra.mxu0 0.0
        %2100 = vmatprep.subr.mxu0 0.0
        %2101 = vmatpush1.msra.mxu0 0.0
        %2102 = vmatprep.subr.mxu0 0.0
        %2103 = vmatpush1.msra.mxu0 0.0
        %2104 = vmatprep.subr.mxu0 0.0
        %2105 = vmatpush1.msra.mxu0 0.0
        %2106 = vmatprep.subr.mxu0 0.0
        %2107 = vmatpush1.msra.mxu0 0.0
        %2108 = vmatprep.subr.mxu0 0.0
        %2109 = vmatpush1.msra.mxu0 0.0
        %2110 = vmatprep.subr.mxu0 0.0
        %2111 = vmatpush1.msra.mxu0 0.0
        %2112 = vmatprep.subr.mxu0 0.0
        %2113 = vmatpush1.msra.mxu0 0.0
        %2114 = vmatprep.subr.mxu0 0.0
        %2115 = vmatpush1.msra.mxu0 0.0
        %2116 = vmatprep.subr.mxu0 0.0
        %2117 = vmatpush1.msra.mxu0 0.0
        %2118 = vmatprep.subr.mxu0 0.0
        %2119 = vmatpush1.msra.mxu0 0.0
        %2120 = vmatprep.subr.mxu0 0.0
        %2121 = vmatpush1.msra.mxu0 0.0
        %2122 = vmatprep.subr.mxu0 0.0
        %2123 = vmatpush1.msra.mxu0 0.0
        %2124 = vmatprep.subr.mxu0 0.0
        %2125 = vmatpush1.msra.mxu0 0.0
        %2126 = vmatprep.subr.mxu0 0.0
        %2127 = vmatpush1.msra.mxu0 0.0
        %2128 = vmatprep.mubr.f32.mxu0 0.0
        %2129 = vmatmul.mubr.f32.gmra.mrb[0].mxu0 %v1901
        %v2130 = vpop.f32.mrb[0].mxu0
        %v2131 = vadd.f32 0.0, %v2130
        %v2132 = vpop.f32.mrb[0].mxu0
        %v2133 = vadd.f32 0.0, %v2132
        %2134 = vdwg.mxu0
        %2135 = vmatprep.subr.mxu0 %v740
        %2136 = vmatpush1.msra.mxu0 %v739
        %2137 = vmatprep.subr.mxu0 %v744
        %2138 = vmatpush1.msra.mxu0 %v743
        %2139 = vmatprep.subr.mxu0 %v748
        %2140 = vmatpush1.msra.mxu0 %v747
        %2141 = vmatprep.subr.mxu0 %v752
        %2142 = vmatpush1.msra.mxu0 %v751
        %2143 = vmatprep.subr.mxu0 %v756
        %2144 = vmatpush1.msra.mxu0 %v755
        %2145 = vmatprep.subr.mxu0 %v760
        %2146 = vmatpush1.msra.mxu0 %v759
        %2147 = vmatprep.subr.mxu0 %v764
        %2148 = vmatpush1.msra.mxu0 %v763
        %2149 = vmatprep.subr.mxu0 %v768
        %2150 = vmatpush1.msra.mxu0 %v767
        %2151 = vmatprep.subr.mxu0 %v772
        %2152 = vmatpush1.msra.mxu0 %v771
        %2153 = vmatprep.subr.mxu0 %v776
        %2154 = vmatpush1.msra.mxu0 %v775
        %2155 = vmatprep.subr.mxu0 %v780
        %2156 = vmatpush1.msra.mxu0 %v779
        %2157 = vmatprep.subr.mxu0 %v784
        %2158 = vmatpush1.msra.mxu0 %v783
        %2159 = vmatprep.subr.mxu0 %v788
        %2160 = vmatpush1.msra.mxu0 %v787
        %2161 = vmatprep.subr.mxu0 %v792
        %2162 = vmatpush1.msra.mxu0 %v791
        %2163 = vmatprep.subr.mxu0 %v796
        %2164 = vmatpush1.msra.mxu0 %v795
        %2165 = vmatprep.subr.mxu0 %v800
        %2166 = vmatpush1.msra.mxu0 %v799
        %2167 = vmatprep.subr.mxu0 0.0
        %2168 = vmatpush1.msra.mxu0 0.0
        %2169 = vmatprep.subr.mxu0 0.0
        %2170 = vmatpush1.msra.mxu0 0.0
        %2171 = vmatprep.subr.mxu0 0.0
        %2172 = vmatpush1.msra.mxu0 0.0
        %2173 = vmatprep.subr.mxu0 0.0
        %2174 = vmatpush1.msra.mxu0 0.0
        %2175 = vmatprep.subr.mxu0 0.0
        %2176 = vmatpush1.msra.mxu0 0.0
        %2177 = vmatprep.subr.mxu0 0.0
        %2178 = vmatpush1.msra.mxu0 0.0
        %2179 = vmatprep.subr.mxu0 0.0
        %2180 = vmatpush1.msra.mxu0 0.0
        %2181 = vmatprep.subr.mxu0 0.0
        %2182 = vmatpush1.msra.mxu0 0.0
        %2183 = vmatprep.subr.mxu0 0.0
        %2184 = vmatpush1.msra.mxu0 0.0
        %2185 = vmatprep.subr.mxu0 0.0
        %2186 = vmatpush1.msra.mxu0 0.0
        %2187 = vmatprep.subr.mxu0 0.0
        %2188 = vmatpush1.msra.mxu0 0.0
        %2189 = vmatprep.subr.mxu0 0.0
        %2190 = vmatpush1.msra.mxu0 0.0
        %2191 = vmatprep.subr.mxu0 0.0
        %2192 = vmatpush1.msra.mxu0 0.0
        %2193 = vmatprep.subr.mxu0 0.0
        %2194 = vmatpush1.msra.mxu0 0.0
        %2195 = vmatprep.subr.mxu0 0.0
        %2196 = vmatpush1.msra.mxu0 0.0
        %2197 = vmatprep.subr.mxu0 0.0
        %2198 = vmatpush1.msra.mxu0 0.0
        %2199 = vmatprep.mubr.f32.mxu0 0.0
        %2200 = vmatmul.mubr.f32.gmra.mrb[0].mxu0 %v1901
        %v2201 = vpop.f32.mrb[0].mxu0
        %v2202 = vadd.f32 0.0, %v2201
        %v2203 = vpop.f32.mrb[0].mxu0
        %v2204 = vadd.f32 0.0, %v2203
        %2205 = vdwg.mxu0
        %v2206 = vadd.f32 %v2060, %v2131
        %v2207 = vadd.f32 %v2061, %v2133
        %v2208 = vadd.f32 %v2062, %v2202
        %v2209 = vadd.f32 %v2063, %v2204
        %v2210 = vxor.u32 %v2056, 2147483648
        %v2211 = vmul.f32 %v2210, 1.442695
        %v2212 = vpow.pop %v2211
        %v2213 = vadd.f32 %v2212, 1.0
        %v2214 = vrcp.pop %v2213
        %v2215 = vmul.f32 1.0, %v2214
        %v2216 = vxor.u32 %v2057, 2147483648
        %v2217 = vmul.f32 %v2216, 1.442695
        %v2218 = vpow.pop %v2217
        %v2219 = vadd.f32 %v2218, 1.0
        %v2220 = vrcp.pop %v2219
        %v2221 = vmul.f32 1.0, %v2220
        %v2222 = vtanh.pop %v2058
        %v2223 = vxor.u32 %v2059, 2147483648
        %v2224 = vmul.f32 %v2223, 1.442695
        %v2225 = vpow.pop %v2224
        %v2226 = vadd.f32 %v2225, 1.0
        %v2227 = vrcp.pop %v2226
        %v2228 = vmul.f32 1.0, %v2227
        %v2229 = vxor.u32 %v2206, 2147483648
        %v2230 = vmul.f32 %v2229, 1.442695
        %v2231 = vpow.pop %v2230
        %v2232 = vadd.f32 %v2231, 1.0
        %v2233 = vrcp.pop %v2232
        %v2234 = vmul.f32 1.0, %v2233
        %v2235 = vxor.u32 %v2207, 2147483648
        %v2236 = vmul.f32 %v2235, 1.442695
        %v2237 = vpow.pop %v2236
        %v2238 = vadd.f32 %v2237, 1.0
        %v2239 = vrcp.pop %v2238
        %v2240 = vmul.f32 1.0, %v2239
        %v2241 = vtanh.pop %v2208
        %v2242 = vxor.u32 %v2209, 2147483648
        %v2243 = vmul.f32 %v2242, 1.442695
        %v2244 = vpow.pop %v2243
        %v2245 = vadd.f32 %v2244, 1.0
        %v2246 = vrcp.pop %v2245
        %v2247 = vmul.f32 1.0, %v2246
        %v2248 = vmul.f32 %v2221, %v1896
        %v2249 = vmul.f32 %v2215, %v2222
        %v2250 = vadd.f32 %v2248, %v2249
        %v2251 = vtanh.pop %v2250
        %v2252 = vmul.f32 %v2228, %v2251
        %v2253 = vmul.f32 %v2240, %v1902
        %v2254 = vmul.f32 %v2234, %v2241
        %v2255 = vadd.f32 %v2253, %v2254
        %v2256 = vtanh.pop %v2255
        %v2257 = vmul.f32 %v2247, %v2256
        %2258 = vset.pattern.permute.xlu0 3
        %2259 = vperm.xlu0 %2258, %v1154
        %v2260 = vpop.permute.xlu0 %2259
        %vm2261 = vcmp.eq.s32.totalorder %v2260, 1
        %v2262 = vsel %vm2261, %v2252, %v1895
        %v2263 = vsel %vm2261, %v2250, %v1896
        %2264 = vset.pattern.permute.xlu0 0
        %2265 = vperm.xlu0 %2264, %v1161
        %v2266 = vpop.permute.xlu0 %2265
        %vm2267 = vcmp.eq.s32.totalorder %v2266, 1
        %v2268 = vsel %vm2267, %v2257, %v1901
        %v2269 = vsel %vm2267, %v2255, %v1902
        %v2270 = vsel %vm2261, %v2252, 0.0
        %s2271 = scalar_lea.vmem %s338, 24
        %2272 = vst [vmem:[%s2271] sm:$0xff] %v2270
        %v2273 = vsel %vm2267, %v2257, 0.0
        %2274 = vst [vmem:[%s345] sm:$0xff] %v2273
        %2275 = vst [vmem:[#allocation3] sm:$0xff] %v2262
        %2276 = vst [vmem:[#allocation4] sm:$0xff] %v2263
        %2277 = vst [vmem:[#allocation5] sm:$0xff] %v2268
        %2278 = vst [vmem:[#allocation6] sm:$0xff] %v2269
        %s2279 = smul.u32 4, %s17
        %p2280 = scmp.lt.s32.totalorder %s2279, 7
        %s2281 = scalar_select %p2280, %s2279, 7
        %s2282 = smul.addr %s2281, 8
        %s2283 = scalar_lea.vmem %s4, %s2282
        %s2284 = ssub.s32 1, %s17
        %s2285 = smul.u32 4, %s2284
        %p2286 = scmp.lt.s32.totalorder %s2285, 7
        %s2287 = scalar_select %p2286, %s2285, 7
        %s2288 = smul.addr %s2287, 8
        %s2289 = scalar_lea.vmem %s5, %s2288
        // Predicated region
        $region117: #{lstm_forward.2} parent=69 // pred_check
          %p2290 = pneg %p110
        $region118: #{lstm_forward.2} parent=69 // pred_check_branch
          %2292 = sbr.rel (%p2290) target = $region120
        $region119: #{lstm_forward.2} parent=69 // pred_region
          %s2293 = smul.u32 4, %s17
        $region120: #{lstm_forward.2} parent=69 // pred_fallthru
          _
        // Predicated region
        $region121: #{lstm_forward.2} parent=69 // pred_check
          %p2294 = pneg %p138
        $region122: #{lstm_forward.2} parent=69 // pred_check_branch
          %2296 = sbr.rel (%p2294) target = $region124
        $region123: #{lstm_forward.2} parent=69 // pred_region
          %s2297 = ssub.s32 1, %s17
          %s2298 = smul.u32 4, %s2297
        $region124: #{lstm_forward.2} parent=69 // pred_fallthru
          _
      $region70: #{lstm_forward.2} parent=5 // pred_fallthru
        _
      %p2299 = scmp.le.s32.totalorder 2, %s12
      // Predicated region
      $region125: #{lstm_forward.2} parent=5 // pred_check
        %p2300 = pneg %p2299
      $region126: #{lstm_forward.2} parent=5 // pred_check_branch
        %2302 = sbr.rel (%p2300) target = $region128
      $region127: #{lstm_forward.2} parent=5 // pred_region
        %s2303 = ssub.s32 %s12, 2
        // Predicated region
        $region129: #{lstm_forward.2} parent=127 // pred_check
          %p2304 = pneg %p116
        $region130: #{lstm_forward.2} parent=127 // pred_check_branch
          %2306 = sbr.rel (%p2304) target = $region132
        $region131: #{lstm_forward.2} parent=127 // pred_region
          %s2307 = smul.u32 4, %s18
          %p2308 = scmp.lt.s32.totalorder %s2307, 7
          %s2309 = scalar_select %p2308, %s2307, 7
          %s2310 = smul.addr %s2309, 8
          %s2311 = scalar_lea.vmem %s4, %s2310
        $region132: #{lstm_forward.2} parent=127 // pred_fallthru
          _
        // Predicated region
        $region133: #{lstm_forward.2} parent=127 // pred_check
          %p2312 = pneg %p144
        $region134: #{lstm_forward.2} parent=127 // pred_check_branch
          %2314 = sbr.rel (%p2312) target = $region136
        $region135: #{lstm_forward.2} parent=127 // pred_region
          %s2315 = ssub.s32 1, %s18
          %s2316 = smul.u32 4, %s2315
          %p2317 = scmp.lt.s32.totalorder %s2316, 7
          %s2318 = scalar_select %p2317, %s2316, 7
          %s2319 = smul.addr %s2318, 8
          %s2320 = scalar_lea.vmem %s5, %s2319
        $region136: #{lstm_forward.2} parent=127 // pred_fallthru
          _
      $region128: #{lstm_forward.2} parent=5 // pred_fallthru
        _
    $region6: #{lstm_forward.2} parent=1 // loop_footer
      %s16 = sadd.s32 1, %s12
    $region7: #{lstm_forward.2} parent=1 // loop_footer_branch
      %11 = sbr.rel target = $region3
    $region8: #{lstm_forward.2} parent=1 // loop_exit
      _
  %2321 = vsyncmov [#allocation7]
  %s2322 = vpop.sfrf %2321
  %p2323 = scmp.eq.s32.totalorder %s2322, 0
  %p2324 = pneg %p2323
  %2326 = shalt.err (%p2324)

</llo_original>
